<compile_context>
chip_gen: v7x
topology: tpu7x:2x2x1
jax: 0.10.0
libtpu: 0.0.40
codegen_flags: <defaults>
</compile_context>

<pallas_src>
import jax
import jax.numpy as jnp
import numpy as np
from jax.experimental import pallas as pl
from jax.experimental.pallas import tpu as pltpu


# ------------------------------ small helpers ---------------------------------

def _mdot(a, b):
    """MXU matmul with f32 accumulation; operands drop to bf16 iff either is bf16."""
    if a.dtype == jnp.bfloat16 or b.dtype == jnp.bfloat16:
        a = a.astype(jnp.bfloat16)
        b = b.astype(jnp.bfloat16)
    return jnp.dot(a, b, preferred_element_type=jnp.float32)


def _sigmoid(x):
    # divide -> EUP approximate reciprocal (frees the VALU; exp already on EUP)
    return pl.reciprocal(1.0 + jnp.exp(-x), approx=True)


def _silu(x):
    return x * _sigmoid(x)


def _softplus(x):
    return jnp.maximum(x, 0.0) + jnp.log(1.0 + jnp.exp(-jnp.abs(x)))


# --------------------------------- kernel --------------------------------------

def kws_mamba_kernel(
    x_ref,        # (input_dim*Bt, Dm)       folded input rows: row = i*Bt + b
    w2_ref,       # (R, input_dim*Bt)        block-diagonal proj weight
    biasu_ref,    # (R, Dm)                  proj bias (+ cls token in last column)
    winx_ref,     # (Dm, d_inner)            in_proj x half
    winz_ref,     # (Dm, d_inner)            in_proj z half
    convw_ref,    # (d_conv, d_inner)        depthwise conv weights
    convb_ref,    # (1, d_inner)
    wxp_ref,      # (d_inner, 2*SN+d_inner)  merged [B_exp | C_exp | dt_fused]
    bdt_ref,      # (1, d_inner)
    arow_ref,     # (1, SN)                  A = -exp(A_log), lane = s*d_inner + c
    tile_ref,     # (d_inner, SN)            0/1 lane-tiling matrix
    dskip_ref,    # (1, d_inner)             D skip parameter
    wout_ref,     # (d_inner, Dm)            out_proj
    glast_ref,    # (1, 1)                   LayerNorm gamma at the cls column
    blast_ref,    # (1, 1)                   LayerNorm beta  at the cls column
    red_ref,      # (SN, d_inner)            0/1 d_state reduction matrix
    wfc_ref,      # (R, num_labels)          fc rows repeated Bt x (row = l*Bt + b)
    hsel_ref,     # (Bt, R)                  0/1 head-gather matrix over l
    bfc_ref,      # (1, num_labels)
    out_ref,      # (Bt, num_labels)
    xpad_scr,     # VMEM ((L + d_conv - 1)*Bt, d_inner)
    da_scr,       # VMEM (R, SN)
    dbx_scr,      # VMEM (R, SN)
    h_scr,        # VMEM (R, SN)
    c_scr,        # VMEM (R, SN)
):
    f32 = jnp.float32
    Bt = hsel_ref.shape[0]
    R, Dm = biasu_ref.shape                    # R = L*Bt, Dm = T + 1 = d_model
    L = R // Bt
    d_conv, d_inner = convw_ref.shape
    SN = arow_ref.shape[1]                     # d_state * d_inner

    # --- 1. input projection + cls/bias: ONE matmul straight into the row fold ----
    u_f = _mdot(w2_ref[...], x_ref[...]) + biasu_ref[...]              # (R, Dm)

    # --- 2. Mamba in_proj, M = R folded rows --------------------------------------
    xm_f = _mdot(u_f, winx_ref[...])                                   # (R, d_inner)
    z_f = _mdot(u_f, winz_ref[...])                                    # (R, d_inner)

    # --- 3. causal depthwise conv along l: tile-aligned reads of a padded scratch -
    pad_rows = (d_conv - 1) * Bt
    # zero every step: scratch is per-core under megacore 'parallel' sharding, so a
    # program_id(0)==0 guard is unsafe; the store is tiny.
    xpad_scr[pl.ds(0, pad_rows), :] = jnp.zeros((pad_rows, d_inner), f32)
    xpad_scr[pl.ds(pad_rows, R), :] = xm_f
    cw = convw_ref[...]
    conv = jnp.zeros((R, d_inner), f32) + convb_ref[...]
    for k in range(d_conv):
        conv = conv + xpad_scr[pl.ds(k * Bt, R), :] * cw[k:k + 1, :]
    xc_f = _silu(conv)                                                 # (R, d_inner)

    # --- 4. merged x_proj: [B | C | dt] in one wide MXU pass ----------------------
    xproj = _mdot(xc_f, wxp_ref[...])                                  # (R, 2*SN+d_inner)
    bexp_f = xproj[:, 0:SN]                                            # B lane-expanded
    c_scr[...] = xproj[:, SN:2 * SN]                                   # C lane-expanded
    dt_f = _softplus(xproj[:, 2 * SN:2 * SN + d_inner] + bdt_ref[...])  # (R, d_inner)

    # --- 5. scan coefficients in bulk (exp hoisted off the serial path) ----------
    # lane tiling d_inner -> SN via exact 0/1 matmuls (MXU slack; no lane concats)
    dt_tiled = _mdot(dt_f, tile_ref[...])                              # (R, SN)
    dtx_tiled = _mdot(dt_f * xc_f, tile_ref[...])                      # (R, SN)
    da_scr[...] = jnp.exp(dt_tiled * arow_ref[...])                    # dA, all steps
    dbx_scr[...] = dtx_tiled * bexp_f                                  # dt*x*B, all steps

    # --- 6. selective scan: one (Bt, SN) FMA per step; Bt/8 vregs of ILP ----------
    # TODO(synk): for production L (128-256) switch to lax.fori_loop(..., unroll=4-8).
    h = jnp.zeros((Bt, SN), f32)
    for l in range(L):
        r0 = l * Bt                                   # static, tile-aligned
        h = da_scr[pl.ds(r0, Bt), :] * h + dbx_scr[pl.ds(r0, Bt), :]
        h_scr[pl.ds(r0, Bt), :] = h                   # store off the critical path

    # --- 7. y = sum_s C*h (exact 0/1 reduction matmul), D-skip, SiLU gate ---------
    ys = c_scr[...] * h_scr[...]                                       # (R, SN)
    y_f = _mdot(ys, red_ref[...]) + xc_f * dskip_ref[...]              # (R, d_inner)
    y_f = y_f * _silu(z_f)

    # --- 8. out_proj + LayerNorm (only the cls/last feature column is needed) -----
    o_f = _mdot(y_f, wout_ref[...])                                    # (R, Dm)
    mu = jnp.mean(o_f, axis=-1, keepdims=True)
    var = jnp.mean((o_f - mu) ** 2, axis=-1, keepdims=True)
    ln_last = (o_f[:, Dm - 1:Dm] - mu) * jax.lax.rsqrt(var + 1e-5)
    ln_last = ln_last * glast_ref[...] + blast_ref[...]                # (R, 1)

    # --- 9. classifier head: 0/1 gather matmul over l (dropout = identity) --------
    contrib = ln_last * wfc_ref[...]                                   # (R, num_labels)
    out_ref[...] = _mdot(hsel_ref[...], contrib) + bfc_ref[...]        # (Bt, num_labels)


# ------------------------------ glue / wrapper ---------------------------------

def build_params(key, input_dim, d_model, d_state, d_conv, expand, num_labels):
    d_inner = expand * d_model
    dt_rank = max(1, -(-d_model // 16))  # ceil(d_model / 16), mamba default
    ks = jax.random.split(key, 11)

    def unif(k, shape, fan_in):
        bound = 1.0 / np.sqrt(fan_in)
        return jax.random.uniform(k, shape, jnp.float32, -bound, bound)

    p = {
        "wproj": unif(ks[0], (d_model, input_dim), input_dim),
        "bproj": unif(ks[1], (d_model,), input_dim),
        "cls": jnp.zeros((d_model,), jnp.float32),             # nn.Parameter(torch.zeros)
        "win": unif(ks[2], (2 * d_inner, d_model), d_model),   # in_proj (bias=False)
        "convw": unif(ks[3], (d_inner, d_conv), d_conv),       # depthwise conv weight
        "convb": unif(ks[4], (d_inner,), d_conv),
        "wxp": unif(ks[5], (dt_rank + 2 * d_state, d_inner), d_inner),
        "wdt": unif(ks[6], (d_inner, dt_rank), dt_rank),
        "bdt": unif(ks[7], (d_inner,), dt_rank),
        "alog": jnp.log(jnp.broadcast_to(
            jnp.arange(1, d_state + 1, dtype=jnp.float32), (d_inner, d_state))),
        "dskip": jnp.ones((d_inner,), jnp.float32),
        "wout": unif(ks[8], (d_model, d_inner), d_inner),      # out_proj (bias=False)
        "gamma": jnp.ones((d_model,), jnp.float32),
        "beta": jnp.zeros((d_model,), jnp.float32),
        "wfc": unif(ks[9], (num_labels, d_model), d_model),
        "bfc": unif(ks[10], (num_labels,), d_model),
        "dims": (input_dim, d_model, d_state, d_conv, d_inner, dt_rank, num_labels),
    }
    return p


def kws_forward_pallas(x, p, batch_tile=32, matmul_dtype=jnp.bfloat16):
    input_dim, d_model, d_state, d_conv, d_inner, dt_rank, num_labels = p["dims"]
    B, C, T = x.shape
    Dm = T + 1
    L = d_model
    assert C == input_dim and Dm == d_model, "model requires T + 1 == d_model"
    Bt = int(batch_tile)
    assert Bt >= 8 and Bt % 8 == 0, "batch_tile must be a multiple of 8"
    SN = d_state * d_inner
    R = L * Bt
    f32 = jnp.float32

    G = -(-B // Bt)                       # grid steps; keep >= 2 for v7x's two cores
    B_pad = G * Bt

    # zero cls column appended; pad batch to a tile multiple (sliced off at the end)
    x_aug = jnp.concatenate([x.astype(f32), jnp.zeros((B, input_dim, 1), f32)], axis=2)
    if B_pad != B:
        x_aug = jnp.concatenate(
            [x_aug, jnp.zeros((B_pad - B, input_dim, Dm), f32)], axis=0)
    # fold to rows (g, i*Bt + b, d) so the kernel's proj matmul lands directly in the
    # (l, b)-major row fold -> no per-batch loop, no in-kernel relayout
    x_rows = (x_aug.reshape(G, Bt, input_dim, Dm)
              .transpose(0, 2, 1, 3)
              .reshape(G * input_dim * Bt, Dm))

    def wcast(w):                          # MXU operand dtype (bf16 on all generations)
        return w.astype(matmul_dtype)

    eye_bt = jnp.eye(Bt, dtype=f32)
    # block-diagonal proj weight: [l*Bt+b, i*Bt+b'] = wproj[l, i] * (b == b')
    w2 = (p["wproj"][:, None, :, None] * eye_bt[None, :, None, :]
          ).reshape(R, input_dim * Bt)

    # proj bias in the first T feature columns, cls token in the last column
    biasu = jnp.concatenate(
        [jnp.broadcast_to(p["bproj"][:, None], (d_model, T)), p["cls"][:, None]], axis=1)
    biasu_f = jnp.repeat(biasu, Bt, axis=0)                            # (R, Dm)

    # x_proj weights: B/C lane-expanded to lane (s*d_inner + c); dt low-rank pair fused
    # (exact); all three merged into one matmul operand, split on 128-lane boundaries.
    wxp_b = p["wxp"][dt_rank:dt_rank + d_state]                        # (d_state, d_inner)
    wxp_c = p["wxp"][dt_rank + d_state:]                               # (d_state, d_inner)
    wxpb_exp = jnp.broadcast_to(
        wxp_b.T[:, :, None], (d_inner, d_state, d_inner)).reshape(d_inner, SN)
    wxpc_exp = jnp.broadcast_to(
        wxp_c.T[:, :, None], (d_inner, d_state, d_inner)).reshape(d_inner, SN)
    wdt_fused = jnp.transpose(p["wxp"][:dt_rank]) @ jnp.transpose(p["wdt"])
    wxp_all = jnp.concatenate([wxpb_exp, wxpc_exp, wdt_fused], axis=1)

    # A = -exp(A_log) packed so lane (s*d_inner + c) holds A[c, s]
    a_row = (-jnp.exp(p["alog"])).T.reshape(1, SN)
    # exact 0/1 helper matrices (kept f32 so these matmuls are exact selections)
    tile_mat = jnp.tile(jnp.eye(d_inner, dtype=f32), (1, d_state))     # (d_inner, SN)
    red_mat = jnp.tile(jnp.eye(d_inner, dtype=f32), (d_state, 1))      # (SN, d_inner)
    head_sel = jnp.tile(eye_bt, (1, L))                                # (Bt, R)
    # fc weight rows repeated so that row (l*Bt + b) holds fc[:, l]
    wfc_exp = jnp.repeat(p["wfc"].T, Bt, axis=0)                       # (R, num_labels)

    ordered = [
        x_rows,                                            # (G*input_dim*Bt, Dm)
        wcast(w2),                                         # (R, input_dim*Bt)
        biasu_f,                                           # (R, Dm)
        wcast(jnp.transpose(p["win"][:d_inner])),          # (Dm, d_inner)
        wcast(jnp.transpose(p["win"][d_inner:])),          # (Dm, d_inner)
        jnp.transpose(p["convw"]),                         # (d_conv, d_inner)
        p["convb"].reshape(1, d_inner),
        wcast(wxp_all),                                    # (d_inner, 2*SN+d_inner)
        p["bdt"].reshape(1, d_inner),
        a_row,                                             # (1, SN)
        tile_mat,                                          # (d_inner, SN)
        p["dskip"].reshape(1, d_inner),
        wcast(jnp.transpose(p["wout"])),                   # (d_inner, Dm)
        p["gamma"][d_model - 1].reshape(1, 1),
        p["beta"][d_model - 1].reshape(1, 1),
        red_mat,                                           # (SN, d_inner)
        wfc_exp,                                           # (R, num_labels)
        head_sel,                                          # (Bt, R)
        p["bfc"].reshape(1, num_labels),
    ]

    # Grid-invariant weights: full-array blocks, constant index map.  At production
    # sizes mark these pipeline_mode=pl.Buffered(1) and set vmem_limit_bytes
    # (v7x: 64 MiB physical; v5e: 16 MiB default scoped limit).
    def const_spec(a):
        return pl.BlockSpec(a.shape, lambda g: (0,) * a.ndim)

    in_specs = [pl.BlockSpec((input_dim * Bt, Dm), lambda g: (g, 0))]
    in_specs += [const_spec(a) for a in ordered[1:]]

    out = pl.pallas_call(
        kws_mamba_kernel,
        out_shape=jax.ShapeDtypeStruct((B_pad, num_labels), jnp.float32),
        grid_spec=pltpu.PrefetchScalarGridSpec(
            num_scalar_prefetch=0,
            grid=(G,),
            in_specs=in_specs,
            out_specs=pl.BlockSpec((Bt, num_labels), lambda g: (g, 0)),
            scratch_shapes=[
                pltpu.VMEM(((L + d_conv - 1) * Bt, d_inner), jnp.float32),  # xpad_scr
                pltpu.VMEM((R, SN), jnp.float32),                           # da_scr
                pltpu.VMEM((R, SN), jnp.float32),                           # dbx_scr
                pltpu.VMEM((R, SN), jnp.float32),                           # h_scr
                pltpu.VMEM((R, SN), jnp.float32),                           # c_scr
            ],
        ),
        # independent batch tiles -> shard across both TensorCores on v7x
        compiler_params=pltpu.CompilerParams(dimension_semantics=("parallel",)),
    )(*ordered)
    return out[:B]


# --------------------------- pure-JAX reference ---------------------------------

def kws_forward_ref(x, p):
    input_dim, d_model, d_state, d_conv, d_inner, dt_rank, num_labels = p["dims"]
    L = d_model

    def one(xb):                                        # xb: (input_dim, T)
        hT = p["wproj"] @ xb + p["bproj"][:, None]      # (d_model, T)
        u = jnp.concatenate([hT, p["cls"][:, None]], axis=1)          # (L, Dm)
        xz = u @ jnp.transpose(p["win"])                               # (L, 2*d_inner)
        xm, z = xz[:, :d_inner], xz[:, d_inner:]
        xpad = jnp.pad(xm, ((d_conv - 1, 0), (0, 0)))
        conv = p["convb"][None, :]
        for k in range(d_conv):
            conv = conv + xpad[k:k + L, :] * p["convw"][:, k][None, :]
        xc = jax.nn.silu(conv)
        x_dbl = xc @ jnp.transpose(p["wxp"])
        dt = jax.nn.softplus(x_dbl[:, :dt_rank] @ jnp.transpose(p["wdt"])
                             + p["bdt"][None, :])
        Bm = x_dbl[:, dt_rank:dt_rank + d_state]
        Cm = x_dbl[:, dt_rank + d_state:]
        A = -jnp.exp(p["alog"])                                        # (d_inner, d_state)

        def step(h, inp):
            dt_t, x_t, B_t, C_t = inp
            dA = jnp.exp(dt_t[:, None] * A)
            h = dA * h + dt_t[:, None] * B_t[None, :] * x_t[:, None]
            return h, (h * C_t[None, :]).sum(-1)

        _, ys = jax.lax.scan(step, jnp.zeros((d_inner, d_state), jnp.float32),
                             (dt, xc, Bm, Cm))
        y = ys + xc * p["dskip"][None, :]
        y = y * jax.nn.silu(z)
        o = y @ jnp.transpose(p["wout"])                               # (L, Dm)
        mu = o.mean(-1, keepdims=True)
        var = ((o - mu) ** 2).mean(-1, keepdims=True)
        ln = (o - mu) / jnp.sqrt(var + 1e-5) * p["gamma"][None, :] + p["beta"][None, :]
        cls_out = ln[:, -1]                                            # (d_model,)
        return p["wfc"] @ cls_out + p["bfc"]

    return jax.vmap(one)(x)


# ----------------------------------- main ----------------------------------------

if __name__ == "__main__":
    input_dim, d_model, d_state, d_conv, expand = 12, 16, 4, 4, 2
    num_labels = 5
    B, Bt = 32, 16            # 2 grid steps (both v7x cores busy); R = L*Bt = 256
    T = d_model - 1           # required by the module's permute/cat/permute structure

    key = jax.random.PRNGKey(0)
    kparam, kx = jax.random.split(key)
    params = build_params(kparam, input_dim, d_model, d_state, d_conv, expand, num_labels)
    x = jax.random.normal(kx, (B, input_dim, T), jnp.float32)

    ref = jax.block_until_ready(kws_forward_ref(x, params))

    # production setting per review: bf16 MXU operands (f32 accumulation / scan / LN);
    # loose band accounts for bf16 operand rounding vs. the f32 reference
    out_bf16 = jax.block_until_ready(
        kws_forward_pallas(x, params, batch_tile=Bt, matmul_dtype=jnp.bfloat16))
    np.testing.assert_allclose(np.asarray(out_bf16), np.asarray(ref),
                               rtol=1e-1, atol=1e-1)

    # f32-operand run for a tight structural/semantic check of the kernel
    out_f32 = jax.block_until_ready(
        kws_forward_pallas(x, params, batch_tile=Bt, matmul_dtype=jnp.float32))
    np.testing.assert_allclose(np.asarray(out_f32), np.asarray(ref),
                               rtol=3e-2, atol=3e-2)

    print("KERNEL_OK")
</pallas_src>

<mosaic_0001>
module attributes {stable_mosaic.version = 11 : i64} {
  func.func @kws_mamba_kernel(%arg0: i32, %arg1: memref<192x16xf32, #tpu.memory_space<vmem>>, %arg2: memref<256x192xbf16, #tpu.memory_space<vmem>>, %arg3: memref<256x16xf32, #tpu.memory_space<vmem>>, %arg4: memref<16x32xbf16, #tpu.memory_space<vmem>>, %arg5: memref<16x32xbf16, #tpu.memory_space<vmem>>, %arg6: memref<4x32xf32, #tpu.memory_space<vmem>>, %arg7: memref<1x32xf32, #tpu.memory_space<vmem>>, %arg8: memref<32x288xbf16, #tpu.memory_space<vmem>>, %arg9: memref<1x32xf32, #tpu.memory_space<vmem>>, %arg10: memref<1x128xf32, #tpu.memory_space<vmem>>, %arg11: memref<32x128xf32, #tpu.memory_space<vmem>>, %arg12: memref<1x32xf32, #tpu.memory_space<vmem>>, %arg13: memref<32x16xbf16, #tpu.memory_space<vmem>>, %arg14: memref<1x1xf32, #tpu.memory_space<vmem>>, %arg15: memref<1x1xf32, #tpu.memory_space<vmem>>, %arg16: memref<128x32xf32, #tpu.memory_space<vmem>>, %arg17: memref<256x5xf32, #tpu.memory_space<vmem>>, %arg18: memref<16x256xf32, #tpu.memory_space<vmem>>, %arg19: memref<1x5xf32, #tpu.memory_space<vmem>>, %arg20: memref<16x5xf32, #tpu.memory_space<vmem>>, %arg21: memref<304x32xf32, #tpu.memory_space<vmem>>, %arg22: memref<256x128xf32, #tpu.memory_space<vmem>>, %arg23: memref<256x128xf32, #tpu.memory_space<vmem>>, %arg24: memref<256x128xf32, #tpu.memory_space<vmem>>, %arg25: memref<256x128xf32, #tpu.memory_space<vmem>>) attributes {dimension_semantics = [#tpu.dimension_semantics<parallel>], iteration_bounds = array<i64: 2>, scalar_prefetch = 0 : i64, scratch_operands = 5 : i64, tpu.core_type = #tpu.core_type<tc>, window_params = [{transform_indices = @transform_0, window_bounds = array<i64: 192, 16>}, {pipeline_mode = #tpu.pipeline_mode<synchronous>, transform_indices = @transform_1, window_bounds = array<i64: 256, 192>}, {pipeline_mode = #tpu.pipeline_mode<synchronous>, transform_indices = @transform_2, window_bounds = array<i64: 256, 16>}, {pipeline_mode = #tpu.pipeline_mode<synchronous>, transform_indices = @transform_3, window_bounds = array<i64: 16, 32>}, {pipeline_mode = #tpu.pipeline_mode<synchronous>, transform_indices = @transform_4, window_bounds = array<i64: 16, 32>}, {pipeline_mode = #tpu.pipeline_mode<synchronous>, transform_indices = @transform_5, window_bounds = array<i64: 4, 32>}, {pipeline_mode = #tpu.pipeline_mode<synchronous>, transform_indices = @transform_6, window_bounds = array<i64: 1, 32>}, {pipeline_mode = #tpu.pipeline_mode<synchronous>, transform_indices = @transform_7, window_bounds = array<i64: 32, 288>}, {pipeline_mode = #tpu.pipeline_mode<synchronous>, transform_indices = @transform_8, window_bounds = array<i64: 1, 32>}, {pipeline_mode = #tpu.pipeline_mode<synchronous>, transform_indices = @transform_9, window_bounds = array<i64: 1, 128>}, {pipeline_mode = #tpu.pipeline_mode<synchronous>, transform_indices = @transform_10, window_bounds = array<i64: 32, 128>}, {pipeline_mode = #tpu.pipeline_mode<synchronous>, transform_indices = @transform_11, window_bounds = array<i64: 1, 32>}, {pipeline_mode = #tpu.pipeline_mode<synchronous>, transform_indices = @transform_12, window_bounds = array<i64: 32, 16>}, {pipeline_mode = #tpu.pipeline_mode<synchronous>, transform_indices = @transform_13, window_bounds = array<i64: 1, 1>}, {pipeline_mode = #tpu.pipeline_mode<synchronous>, transform_indices = @transform_14, window_bounds = array<i64: 1, 1>}, {pipeline_mode = #tpu.pipeline_mode<synchronous>, transform_indices = @transform_15, window_bounds = array<i64: 128, 32>}, {pipeline_mode = #tpu.pipeline_mode<synchronous>, transform_indices = @transform_16, window_bounds = array<i64: 256, 5>}, {pipeline_mode = #tpu.pipeline_mode<synchronous>, transform_indices = @transform_17, window_bounds = array<i64: 16, 256>}, {pipeline_mode = #tpu.pipeline_mode<synchronous>, transform_indices = @transform_18, window_bounds = array<i64: 1, 5>}, {transform_indices = @transform_19, window_bounds = array<i64: 16, 5>}]} {
    %c0 = arith.constant 0 : index
    %c0_0 = arith.constant 0 : index
    %0 = vector.load %arg2[%c0, %c0_0] : memref<256x192xbf16, #tpu.memory_space<vmem>>, vector<256x192xbf16>
    %c0_1 = arith.constant 0 : index
    %c0_2 = arith.constant 0 : index
    %1 = vector.load %arg1[%c0_1, %c0_2] : memref<192x16xf32, #tpu.memory_space<vmem>>, vector<192x16xf32>
    %2 = arith.truncf %1 : vector<192x16xf32> to vector<192x16xbf16>
    %cst = arith.constant dense<0.000000e+00> : vector<256x16xf32>
    %3 = tpu.matmul %0, %2, %cst {dimension_numbers = #tpu.dot_dimension_numbers<[1], [0], [0], [1], [0, 0, 1, 1], [], []>} : vector<256x192xbf16>, vector<192x16xbf16>, vector<256x16xf32> -> vector<256x16xf32>
    %c0_3 = arith.constant 0 : index
    %c0_4 = arith.constant 0 : index
    %4 = vector.load %arg3[%c0_3, %c0_4] : memref<256x16xf32, #tpu.memory_space<vmem>>, vector<256x16xf32>
    %5 = arith.addf %3, %4 : vector<256x16xf32>
    %c0_5 = arith.constant 0 : index
    %c0_6 = arith.constant 0 : index
    %6 = vector.load %arg4[%c0_5, %c0_6] : memref<16x32xbf16, #tpu.memory_space<vmem>>, vector<16x32xbf16>
    %7 = arith.truncf %5 : vector<256x16xf32> to vector<256x16xbf16>
    %cst_7 = arith.constant dense<0.000000e+00> : vector<256x32xf32>
    %8 = tpu.matmul %7, %6, %cst_7 {dimension_numbers = #tpu.dot_dimension_numbers<[1], [0], [0], [1], [0, 0, 1, 1], [], []>} : vector<256x16xbf16>, vector<16x32xbf16>, vector<256x32xf32> -> vector<256x32xf32>
    %c0_8 = arith.constant 0 : index
    %c0_9 = arith.constant 0 : index
    %9 = vector.load %arg5[%c0_8, %c0_9] : memref<16x32xbf16, #tpu.memory_space<vmem>>, vector<16x32xbf16>
    %10 = arith.truncf %5 : vector<256x16xf32> to vector<256x16xbf16>
    %cst_10 = arith.constant dense<0.000000e+00> : vector<256x32xf32>
    %11 = tpu.matmul %10, %9, %cst_10 {dimension_numbers = #tpu.dot_dimension_numbers<[1], [0], [0], [1], [0, 0, 1, 1], [], []>} : vector<256x16xbf16>, vector<16x32xbf16>, vector<256x32xf32> -> vector<256x32xf32>
    %cst_11 = arith.constant 0.000000e+00 : f32
    %12 = vector.broadcast %cst_11 : f32 to vector<48x32xf32>
    %c0_12 = arith.constant 0 : index
    %c0_13 = arith.constant 0 : index
    %13 = vector.load %arg21[%c0_12, %c0_13] : memref<304x32xf32, #tpu.memory_space<vmem>>, vector<48x32xf32>
    tpu.vector_store %arg21[%c0_12, %c0_13], %12 {strides = array<i32>} : memref<304x32xf32, #tpu.memory_space<vmem>>, vector<48x32xf32>,
    %c48 = arith.constant 48 : index
    %c0_14 = arith.constant 0 : index
    %14 = vector.load %arg21[%c48, %c0_14] : memref<304x32xf32, #tpu.memory_space<vmem>>, vector<256x32xf32>
    tpu.vector_store %arg21[%c48, %c0_14], %8 {strides = array<i32>} : memref<304x32xf32, #tpu.memory_space<vmem>>, vector<256x32xf32>,
    %c0_15 = arith.constant 0 : index
    %c0_16 = arith.constant 0 : index
    %15 = vector.load %arg6[%c0_15, %c0_16] : memref<4x32xf32, #tpu.memory_space<vmem>>, vector<4x32xf32>
    %cst_17 = arith.constant 0.000000e+00 : f32
    %16 = vector.broadcast %cst_17 : f32 to vector<256x32xf32>
    %c0_18 = arith.constant 0 : index
    %c0_19 = arith.constant 0 : index
    %17 = vector.load %arg7[%c0_18, %c0_19] : memref<1x32xf32, #tpu.memory_space<vmem>>, vector<1x32xf32>
    %18 = vector.broadcast %17 : vector<1x32xf32> to vector<256x32xf32>
    %19 = arith.addf %16, %18 : vector<256x32xf32>
    %c0_20 = arith.constant 0 : index
    %c0_21 = arith.constant 0 : index
    %20 = vector.load %arg21[%c0_20, %c0_21] : memref<304x32xf32, #tpu.memory_space<vmem>>, vector<256x32xf32>
    %21 = vector.extract_strided_slice %15 {offsets = [0, 0], sizes = [1, 32], strides = [1, 1]} : vector<4x32xf32> to vector<1x32xf32>
    %22 = vector.broadcast %21 : vector<1x32xf32> to vector<256x32xf32>
    %23 = arith.mulf %20, %22 : vector<256x32xf32>
    %24 = arith.addf %19, %23 : vector<256x32xf32>
    %c16 = arith.constant 16 : index
    %c0_22 = arith.constant 0 : index
    %25 = vector.load %arg21[%c16, %c0_22] : memref<304x32xf32, #tpu.memory_space<vmem>>, vector<256x32xf32>
    %26 = vector.extract_strided_slice %15 {offsets = [1, 0], sizes = [1, 32], strides = [1, 1]} : vector<4x32xf32> to vector<1x32xf32>
    %27 = vector.broadcast %26 : vector<1x32xf32> to vector<256x32xf32>
    %28 = arith.mulf %25, %27 : vector<256x32xf32>
    %29 = arith.addf %24, %28 : vector<256x32xf32>
    %c32 = arith.constant 32 : index
    %c0_23 = arith.constant 0 : index
    %30 = vector.load %arg21[%c32, %c0_23] : memref<304x32xf32, #tpu.memory_space<vmem>>, vector<256x32xf32>
    %31 = vector.extract_strided_slice %15 {offsets = [2, 0], sizes = [1, 32], strides = [1, 1]} : vector<4x32xf32> to vector<1x32xf32>
    %32 = vector.broadcast %31 : vector<1x32xf32> to vector<256x32xf32>
    %33 = arith.mulf %30, %32 : vector<256x32xf32>
    %34 = arith.addf %29, %33 : vector<256x32xf32>
    %c48_24 = arith.constant 48 : index
    %c0_25 = arith.constant 0 : index
    %35 = vector.load %arg21[%c48_24, %c0_25] : memref<304x32xf32, #tpu.memory_space<vmem>>, vector<256x32xf32>
    %36 = vector.extract_strided_slice %15 {offsets = [3, 0], sizes = [1, 32], strides = [1, 1]} : vector<4x32xf32> to vector<1x32xf32>
    %37 = vector.broadcast %36 : vector<1x32xf32> to vector<256x32xf32>
    %38 = arith.mulf %35, %37 : vector<256x32xf32>
    %39 = arith.addf %34, %38 : vector<256x32xf32>
    %cst_26 = arith.constant 0.000000e+00 : f32
    %40 = vector.broadcast %cst_26 : f32 to vector<256x32xf32>
    %41 = arith.subf %40, %39 : vector<256x32xf32>
    %42 = math.exp %41 : vector<256x32xf32>
    %cst_27 = arith.constant 1.000000e+00 : f32
    %43 = vector.broadcast %cst_27 : f32 to vector<256x32xf32>
    %44 = arith.addf %43, %42 : vector<256x32xf32>
    %45 = tpu.reciprocal %44 {approx = true} : vector<256x32xf32> -> vector<256x32xf32>
    %46 = arith.mulf %39, %45 : vector<256x32xf32>
    %c0_28 = arith.constant 0 : index
    %c0_29 = arith.constant 0 : index
    %47 = vector.load %arg8[%c0_28, %c0_29] : memref<32x288xbf16, #tpu.memory_space<vmem>>, vector<32x288xbf16>
    %48 = arith.truncf %46 : vector<256x32xf32> to vector<256x32xbf16>
    %cst_30 = arith.constant dense<0.000000e+00> : vector<256x288xf32>
    %49 = tpu.matmul %48, %47, %cst_30 {dimension_numbers = #tpu.dot_dimension_numbers<[1], [0], [0], [1], [0, 0, 1, 1], [], []>} : vector<256x32xbf16>, vector<32x288xbf16>, vector<256x288xf32> -> vector<256x288xf32>
    %50 = vector.extract_strided_slice %49 {offsets = [0, 0], sizes = [256, 128], strides = [1, 1]} : vector<256x288xf32> to vector<256x128xf32>
    %51 = vector.extract_strided_slice %49 {offsets = [0, 128], sizes = [256, 128], strides = [1, 1]} : vector<256x288xf32> to vector<256x128xf32>
    %c0_31 = arith.constant 0 : index
    %c0_32 = arith.constant 0 : index
    %52 = vector.load %arg25[%c0_31, %c0_32] : memref<256x128xf32, #tpu.memory_space<vmem>>, vector<256x128xf32>
    tpu.vector_store %arg25[%c0_31, %c0_32], %51 {strides = array<i32>} : memref<256x128xf32, #tpu.memory_space<vmem>>, vector<256x128xf32>,
    %53 = vector.extract_strided_slice %49 {offsets = [0, 256], sizes = [256, 32], strides = [1, 1]} : vector<256x288xf32> to vector<256x32xf32>
    %c0_33 = arith.constant 0 : index
    %c0_34 = arith.constant 0 : index
    %54 = vector.load %arg9[%c0_33, %c0_34] : memref<1x32xf32, #tpu.memory_space<vmem>>, vector<1x32xf32>
    %55 = vector.broadcast %54 : vector<1x32xf32> to vector<256x32xf32>
    %56 = arith.addf %53, %55 : vector<256x32xf32>
    %cst_35 = arith.constant 0.000000e+00 : f32
    %57 = vector.broadcast %cst_35 : f32 to vector<256x32xf32>
    %58 = arith.maximumf %56, %57 : vector<256x32xf32>
    %59 = math.absf %56 : vector<256x32xf32>
    %cst_36 = arith.constant 0.000000e+00 : f32
    %60 = vector.broadcast %cst_36 : f32 to vector<256x32xf32>
    %61 = arith.subf %60, %59 : vector<256x32xf32>
    %62 = math.exp %61 : vector<256x32xf32>
    %cst_37 = arith.constant 1.000000e+00 : f32
    %63 = vector.broadcast %cst_37 : f32 to vector<256x32xf32>
    %64 = arith.addf %63, %62 : vector<256x32xf32>
    %65 = math.log %64 : vector<256x32xf32>
    %66 = arith.addf %58, %65 : vector<256x32xf32>
    %c0_38 = arith.constant 0 : index
    %c0_39 = arith.constant 0 : index
    %67 = vector.load %arg11[%c0_38, %c0_39] : memref<32x128xf32, #tpu.memory_space<vmem>>, vector<32x128xf32>
    %cst_40 = arith.constant dense<0.000000e+00> : vector<256x128xf32>
    %68 = tpu.matmul %66, %67, %cst_40 {dimension_numbers = #tpu.dot_dimension_numbers<[1], [0], [0], [1], [0, 0, 1, 1], [], []>} : vector<256x32xf32>, vector<32x128xf32>, vector<256x128xf32> -> vector<256x128xf32>
    %69 = arith.mulf %66, %46 : vector<256x32xf32>
    %c0_41 = arith.constant 0 : index
    %c0_42 = arith.constant 0 : index
    %70 = vector.load %arg11[%c0_41, %c0_42] : memref<32x128xf32, #tpu.memory_space<vmem>>, vector<32x128xf32>
    %cst_43 = arith.constant dense<0.000000e+00> : vector<256x128xf32>
    %71 = tpu.matmul %69, %70, %cst_43 {dimension_numbers = #tpu.dot_dimension_numbers<[1], [0], [0], [1], [0, 0, 1, 1], [], []>} : vector<256x32xf32>, vector<32x128xf32>, vector<256x128xf32> -> vector<256x128xf32>
    %c0_44 = arith.constant 0 : index
    %c0_45 = arith.constant 0 : index
    %72 = vector.load %arg10[%c0_44, %c0_45] : memref<1x128xf32, #tpu.memory_space<vmem>>, vector<1x128xf32>
    %73 = vector.broadcast %72 : vector<1x128xf32> to vector<256x128xf32>
    %74 = arith.mulf %68, %73 : vector<256x128xf32>
    %75 = math.exp %74 : vector<256x128xf32>
    %c0_46 = arith.constant 0 : index
    %c0_47 = arith.constant 0 : index
    %76 = vector.load %arg22[%c0_46, %c0_47] : memref<256x128xf32, #tpu.memory_space<vmem>>, vector<256x128xf32>
    tpu.vector_store %arg22[%c0_46, %c0_47], %75 {strides = array<i32>} : memref<256x128xf32, #tpu.memory_space<vmem>>, vector<256x128xf32>,
    %77 = arith.mulf %71, %50 : vector<256x128xf32>
    %c0_48 = arith.constant 0 : index
    %c0_49 = arith.constant 0 : index
    %78 = vector.load %arg23[%c0_48, %c0_49] : memref<256x128xf32, #tpu.memory_space<vmem>>, vector<256x128xf32>
    tpu.vector_store %arg23[%c0_48, %c0_49], %77 {strides = array<i32>} : memref<256x128xf32, #tpu.memory_space<vmem>>, vector<256x128xf32>,
    %cst_50 = arith.constant 0.000000e+00 : f32
    %79 = vector.broadcast %cst_50 : f32 to vector<16x128xf32>
    %c0_51 = arith.constant 0 : index
    %c0_52 = arith.constant 0 : index
    %80 = vector.load %arg22[%c0_51, %c0_52] : memref<256x128xf32, #tpu.memory_space<vmem>>, vector<16x128xf32>
    %81 = arith.mulf %80, %79 : vector<16x128xf32>
    %c0_53 = arith.constant 0 : index
    %c0_54 = arith.constant 0 : index
    %82 = vector.load %arg23[%c0_53, %c0_54] : memref<256x128xf32, #tpu.memory_space<vmem>>, vector<16x128xf32>
    %83 = arith.addf %81, %82 : vector<16x128xf32>
    %c0_55 = arith.constant 0 : index
    %c0_56 = arith.constant 0 : index
    %84 = vector.load %arg24[%c0_55, %c0_56] : memref<256x128xf32, #tpu.memory_space<vmem>>, vector<16x128xf32>
    tpu.vector_store %arg24[%c0_55, %c0_56], %83 {strides = array<i32>} : memref<256x128xf32, #tpu.memory_space<vmem>>, vector<16x128xf32>,
    %c16_57 = arith.constant 16 : index
    %c0_58 = arith.constant 0 : index
    %85 = vector.load %arg22[%c16_57, %c0_58] : memref<256x128xf32, #tpu.memory_space<vmem>>, vector<16x128xf32>
    %86 = arith.mulf %85, %83 : vector<16x128xf32>
    %c16_59 = arith.constant 16 : index
    %c0_60 = arith.constant 0 : index
    %87 = vector.load %arg23[%c16_59, %c0_60] : memref<256x128xf32, #tpu.memory_space<vmem>>, vector<16x128xf32>
    %88 = arith.addf %86, %87 : vector<16x128xf32>
    %c16_61 = arith.constant 16 : index
    %c0_62 = arith.constant 0 : index
    %89 = vector.load %arg24[%c16_61, %c0_62] : memref<256x128xf32, #tpu.memory_space<vmem>>, vector<16x128xf32>
    tpu.vector_store %arg24[%c16_61, %c0_62], %88 {strides = array<i32>} : memref<256x128xf32, #tpu.memory_space<vmem>>, vector<16x128xf32>,
    %c32_63 = arith.constant 32 : index
    %c0_64 = arith.constant 0 : index
    %90 = vector.load %arg22[%c32_63, %c0_64] : memref<256x128xf32, #tpu.memory_space<vmem>>, vector<16x128xf32>
    %91 = arith.mulf %90, %88 : vector<16x128xf32>
    %c32_65 = arith.constant 32 : index
    %c0_66 = arith.constant 0 : index
    %92 = vector.load %arg23[%c32_65, %c0_66] : memref<256x128xf32, #tpu.memory_space<vmem>>, vector<16x128xf32>
    %93 = arith.addf %91, %92 : vector<16x128xf32>
    %c32_67 = arith.constant 32 : index
    %c0_68 = arith.constant 0 : index
    %94 = vector.load %arg24[%c32_67, %c0_68] : memref<256x128xf32, #tpu.memory_space<vmem>>, vector<16x128xf32>
    tpu.vector_store %arg24[%c32_67, %c0_68], %93 {strides = array<i32>} : memref<256x128xf32, #tpu.memory_space<vmem>>, vector<16x128xf32>,
    %c48_69 = arith.constant 48 : index
    %c0_70 = arith.constant 0 : index
    %95 = vector.load %arg22[%c48_69, %c0_70] : memref<256x128xf32, #tpu.memory_space<vmem>>, vector<16x128xf32>
    %96 = arith.mulf %95, %93 : vector<16x128xf32>
    %c48_71 = arith.constant 48 : index
    %c0_72 = arith.constant 0 : index
    %97 = vector.load %arg23[%c48_71, %c0_72] : memref<256x128xf32, #tpu.memory_space<vmem>>, vector<16x128xf32>
    %98 = arith.addf %96, %97 : vector<16x128xf32>
    %c48_73 = arith.constant 48 : index
    %c0_74 = arith.constant 0 : index
    %99 = vector.load %arg24[%c48_73, %c0_74] : memref<256x128xf32, #tpu.memory_space<vmem>>, vector<16x128xf32>
    tpu.vector_store %arg24[%c48_73, %c0_74], %98 {strides = array<i32>} : memref<256x128xf32, #tpu.memory_space<vmem>>, vector<16x128xf32>,
    %c64 = arith.constant 64 : index
    %c0_75 = arith.constant 0 : index
    %100 = vector.load %arg22[%c64, %c0_75] : memref<256x128xf32, #tpu.memory_space<vmem>>, vector<16x128xf32>
    %101 = arith.mulf %100, %98 : vector<16x128xf32>
    %c64_76 = arith.constant 64 : index
    %c0_77 = arith.constant 0 : index
    %102 = vector.load %arg23[%c64_76, %c0_77] : memref<256x128xf32, #tpu.memory_space<vmem>>, vector<16x128xf32>
    %103 = arith.addf %101, %102 : vector<16x128xf32>
    %c64_78 = arith.constant 64 : index
    %c0_79 = arith.constant 0 : index
    %104 = vector.load %arg24[%c64_78, %c0_79] : memref<256x128xf32, #tpu.memory_space<vmem>>, vector<16x128xf32>
    tpu.vector_store %arg24[%c64_78, %c0_79], %103 {strides = array<i32>} : memref<256x128xf32, #tpu.memory_space<vmem>>, vector<16x128xf32>,
    %c80 = arith.constant 80 : index
    %c0_80 = arith.constant 0 : index
    %105 = vector.load %arg22[%c80, %c0_80] : memref<256x128xf32, #tpu.memory_space<vmem>>, vector<16x128xf32>
    %106 = arith.mulf %105, %103 : vector<16x128xf32>
    %c80_81 = arith.constant 80 : index
    %c0_82 = arith.constant 0 : index
    %107 = vector.load %arg23[%c80_81, %c0_82] : memref<256x128xf32, #tpu.memory_space<vmem>>, vector<16x128xf32>
    %108 = arith.addf %106, %107 : vector<16x128xf32>
    %c80_83 = arith.constant 80 : index
    %c0_84 = arith.constant 0 : index
    %109 = vector.load %arg24[%c80_83, %c0_84] : memref<256x128xf32, #tpu.memory_space<vmem>>, vector<16x128xf32>
    tpu.vector_store %arg24[%c80_83, %c0_84], %108 {strides = array<i32>} : memref<256x128xf32, #tpu.memory_space<vmem>>, vector<16x128xf32>,
    %c96 = arith.constant 96 : index
    %c0_85 = arith.constant 0 : index
    %110 = vector.load %arg22[%c96, %c0_85] : memref<256x128xf32, #tpu.memory_space<vmem>>, vector<16x128xf32>
    %111 = arith.mulf %110, %108 : vector<16x128xf32>
    %c96_86 = arith.constant 96 : index
    %c0_87 = arith.constant 0 : index
    %112 = vector.load %arg23[%c96_86, %c0_87] : memref<256x128xf32, #tpu.memory_space<vmem>>, vector<16x128xf32>
    %113 = arith.addf %111, %112 : vector<16x128xf32>
    %c96_88 = arith.constant 96 : index
    %c0_89 = arith.constant 0 : index
    %114 = vector.load %arg24[%c96_88, %c0_89] : memref<256x128xf32, #tpu.memory_space<vmem>>, vector<16x128xf32>
    tpu.vector_store %arg24[%c96_88, %c0_89], %113 {strides = array<i32>} : memref<256x128xf32, #tpu.memory_space<vmem>>, vector<16x128xf32>,
    %c112 = arith.constant 112 : index
    %c0_90 = arith.constant 0 : index
    %115 = vector.load %arg22[%c112, %c0_90] : memref<256x128xf32, #tpu.memory_space<vmem>>, vector<16x128xf32>
    %116 = arith.mulf %115, %113 : vector<16x128xf32>
    %c112_91 = arith.constant 112 : index
    %c0_92 = arith.constant 0 : index
    %117 = vector.load %arg23[%c112_91, %c0_92] : memref<256x128xf32, #tpu.memory_space<vmem>>, vector<16x128xf32>
    %118 = arith.addf %116, %117 : vector<16x128xf32>
    %c112_93 = arith.constant 112 : index
    %c0_94 = arith.constant 0 : index
    %119 = vector.load %arg24[%c112_93, %c0_94] : memref<256x128xf32, #tpu.memory_space<vmem>>, vector<16x128xf32>
    tpu.vector_store %arg24[%c112_93, %c0_94], %118 {strides = array<i32>} : memref<256x128xf32, #tpu.memory_space<vmem>>, vector<16x128xf32>,
    %c128 = arith.constant 128 : index
    %c0_95 = arith.constant 0 : index
    %120 = vector.load %arg22[%c128, %c0_95] : memref<256x128xf32, #tpu.memory_space<vmem>>, vector<16x128xf32>
    %121 = arith.mulf %120, %118 : vector<16x128xf32>
    %c128_96 = arith.constant 128 : index
    %c0_97 = arith.constant 0 : index
    %122 = vector.load %arg23[%c128_96, %c0_97] : memref<256x128xf32, #tpu.memory_space<vmem>>, vector<16x128xf32>
    %123 = arith.addf %121, %122 : vector<16x128xf32>
    %c128_98 = arith.constant 128 : index
    %c0_99 = arith.constant 0 : index
    %124 = vector.load %arg24[%c128_98, %c0_99] : memref<256x128xf32, #tpu.memory_space<vmem>>, vector<16x128xf32>
    tpu.vector_store %arg24[%c128_98, %c0_99], %123 {strides = array<i32>} : memref<256x128xf32, #tpu.memory_space<vmem>>, vector<16x128xf32>,
    %c144 = arith.constant 144 : index
    %c0_100 = arith.constant 0 : index
    %125 = vector.load %arg22[%c144, %c0_100] : memref<256x128xf32, #tpu.memory_space<vmem>>, vector<16x128xf32>
    %126 = arith.mulf %125, %123 : vector<16x128xf32>
    %c144_101 = arith.constant 144 : index
    %c0_102 = arith.constant 0 : index
    %127 = vector.load %arg23[%c144_101, %c0_102] : memref<256x128xf32, #tpu.memory_space<vmem>>, vector<16x128xf32>
    %128 = arith.addf %126, %127 : vector<16x128xf32>
    %c144_103 = arith.constant 144 : index
    %c0_104 = arith.constant 0 : index
    %129 = vector.load %arg24[%c144_103, %c0_104] : memref<256x128xf32, #tpu.memory_space<vmem>>, vector<16x128xf32>
    tpu.vector_store %arg24[%c144_103, %c0_104], %128 {strides = array<i32>} : memref<256x128xf32, #tpu.memory_space<vmem>>, vector<16x128xf32>,
    %c160 = arith.constant 160 : index
    %c0_105 = arith.constant 0 : index
    %130 = vector.load %arg22[%c160, %c0_105] : memref<256x128xf32, #tpu.memory_space<vmem>>, vector<16x128xf32>
    %131 = arith.mulf %130, %128 : vector<16x128xf32>
    %c160_106 = arith.constant 160 : index
    %c0_107 = arith.constant 0 : index
    %132 = vector.load %arg23[%c160_106, %c0_107] : memref<256x128xf32, #tpu.memory_space<vmem>>, vector<16x128xf32>
    %133 = arith.addf %131, %132 : vector<16x128xf32>
    %c160_108 = arith.constant 160 : index
    %c0_109 = arith.constant 0 : index
    %134 = vector.load %arg24[%c160_108, %c0_109] : memref<256x128xf32, #tpu.memory_space<vmem>>, vector<16x128xf32>
    tpu.vector_store %arg24[%c160_108, %c0_109], %133 {strides = array<i32>} : memref<256x128xf32, #tpu.memory_space<vmem>>, vector<16x128xf32>,
    %c176 = arith.constant 176 : index
    %c0_110 = arith.constant 0 : index
    %135 = vector.load %arg22[%c176, %c0_110] : memref<256x128xf32, #tpu.memory_space<vmem>>, vector<16x128xf32>
    %136 = arith.mulf %135, %133 : vector<16x128xf32>
    %c176_111 = arith.constant 176 : index
    %c0_112 = arith.constant 0 : index
    %137 = vector.load %arg23[%c176_111, %c0_112] : memref<256x128xf32, #tpu.memory_space<vmem>>, vector<16x128xf32>
    %138 = arith.addf %136, %137 : vector<16x128xf32>
    %c176_113 = arith.constant 176 : index
    %c0_114 = arith.constant 0 : index
    %139 = vector.load %arg24[%c176_113, %c0_114] : memref<256x128xf32, #tpu.memory_space<vmem>>, vector<16x128xf32>
    tpu.vector_store %arg24[%c176_113, %c0_114], %138 {strides = array<i32>} : memref<256x128xf32, #tpu.memory_space<vmem>>, vector<16x128xf32>,
    %c192 = arith.constant 192 : index
    %c0_115 = arith.constant 0 : index
    %140 = vector.load %arg22[%c192, %c0_115] : memref<256x128xf32, #tpu.memory_space<vmem>>, vector<16x128xf32>
    %141 = arith.mulf %140, %138 : vector<16x128xf32>
    %c192_116 = arith.constant 192 : index
    %c0_117 = arith.constant 0 : index
    %142 = vector.load %arg23[%c192_116, %c0_117] : memref<256x128xf32, #tpu.memory_space<vmem>>, vector<16x128xf32>
    %143 = arith.addf %141, %142 : vector<16x128xf32>
    %c192_118 = arith.constant 192 : index
    %c0_119 = arith.constant 0 : index
    %144 = vector.load %arg24[%c192_118, %c0_119] : memref<256x128xf32, #tpu.memory_space<vmem>>, vector<16x128xf32>
    tpu.vector_store %arg24[%c192_118, %c0_119], %143 {strides = array<i32>} : memref<256x128xf32, #tpu.memory_space<vmem>>, vector<16x128xf32>,
    %c208 = arith.constant 208 : index
    %c0_120 = arith.constant 0 : index
    %145 = vector.load %arg22[%c208, %c0_120] : memref<256x128xf32, #tpu.memory_space<vmem>>, vector<16x128xf32>
    %146 = arith.mulf %145, %143 : vector<16x128xf32>
    %c208_121 = arith.constant 208 : index
    %c0_122 = arith.constant 0 : index
    %147 = vector.load %arg23[%c208_121, %c0_122] : memref<256x128xf32, #tpu.memory_space<vmem>>, vector<16x128xf32>
    %148 = arith.addf %146, %147 : vector<16x128xf32>
    %c208_123 = arith.constant 208 : index
    %c0_124 = arith.constant 0 : index
    %149 = vector.load %arg24[%c208_123, %c0_124] : memref<256x128xf32, #tpu.memory_space<vmem>>, vector<16x128xf32>
    tpu.vector_store %arg24[%c208_123, %c0_124], %148 {strides = array<i32>} : memref<256x128xf32, #tpu.memory_space<vmem>>, vector<16x128xf32>,
    %c224 = arith.constant 224 : index
    %c0_125 = arith.constant 0 : index
    %150 = vector.load %arg22[%c224, %c0_125] : memref<256x128xf32, #tpu.memory_space<vmem>>, vector<16x128xf32>
    %151 = arith.mulf %150, %148 : vector<16x128xf32>
    %c224_126 = arith.constant 224 : index
    %c0_127 = arith.constant 0 : index
    %152 = vector.load %arg23[%c224_126, %c0_127] : memref<256x128xf32, #tpu.memory_space<vmem>>, vector<16x128xf32>
    %153 = arith.addf %151, %152 : vector<16x128xf32>
    %c224_128 = arith.constant 224 : index
    %c0_129 = arith.constant 0 : index
    %154 = vector.load %arg24[%c224_128, %c0_129] : memref<256x128xf32, #tpu.memory_space<vmem>>, vector<16x128xf32>
    tpu.vector_store %arg24[%c224_128, %c0_129], %153 {strides = array<i32>} : memref<256x128xf32, #tpu.memory_space<vmem>>, vector<16x128xf32>,
    %c240 = arith.constant 240 : index
    %c0_130 = arith.constant 0 : index
    %155 = vector.load %arg22[%c240, %c0_130] : memref<256x128xf32, #tpu.memory_space<vmem>>, vector<16x128xf32>
    %156 = arith.mulf %155, %153 : vector<16x128xf32>
    %c240_131 = arith.constant 240 : index
    %c0_132 = arith.constant 0 : index
    %157 = vector.load %arg23[%c240_131, %c0_132] : memref<256x128xf32, #tpu.memory_space<vmem>>, vector<16x128xf32>
    %158 = arith.addf %156, %157 : vector<16x128xf32>
    %c240_133 = arith.constant 240 : index
    %c0_134 = arith.constant 0 : index
    %159 = vector.load %arg24[%c240_133, %c0_134] : memref<256x128xf32, #tpu.memory_space<vmem>>, vector<16x128xf32>
    tpu.vector_store %arg24[%c240_133, %c0_134], %158 {strides = array<i32>} : memref<256x128xf32, #tpu.memory_space<vmem>>, vector<16x128xf32>,
    %c0_135 = arith.constant 0 : index
    %c0_136 = arith.constant 0 : index
    %160 = vector.load %arg25[%c0_135, %c0_136] : memref<256x128xf32, #tpu.memory_space<vmem>>, vector<256x128xf32>
    %c0_137 = arith.constant 0 : index
    %c0_138 = arith.constant 0 : index
    %161 = vector.load %arg24[%c0_137, %c0_138] : memref<256x128xf32, #tpu.memory_space<vmem>>, vector<256x128xf32>
    %162 = arith.mulf %160, %161 : vector<256x128xf32>
    %c0_139 = arith.constant 0 : index
    %c0_140 = arith.constant 0 : index
    %163 = vector.load %arg16[%c0_139, %c0_140] : memref<128x32xf32, #tpu.memory_space<vmem>>, vector<128x32xf32>
    %cst_141 = arith.constant dense<0.000000e+00> : vector<256x32xf32>
    %164 = tpu.matmul %162, %163, %cst_141 {dimension_numbers = #tpu.dot_dimension_numbers<[1], [0], [0], [1], [0, 0, 1, 1], [], []>} : vector<256x128xf32>, vector<128x32xf32>, vector<256x32xf32> -> vector<256x32xf32>
    %c0_142 = arith.constant 0 : index
    %c0_143 = arith.constant 0 : index
    %165 = vector.load %arg12[%c0_142, %c0_143] : memref<1x32xf32, #tpu.memory_space<vmem>>, vector<1x32xf32>
    %166 = vector.broadcast %165 : vector<1x32xf32> to vector<256x32xf32>
    %167 = arith.mulf %46, %166 : vector<256x32xf32>
    %168 = arith.addf %164, %167 : vector<256x32xf32>
    %cst_144 = arith.constant 0.000000e+00 : f32
    %169 = vector.broadcast %cst_144 : f32 to vector<256x32xf32>
    %170 = arith.subf %169, %11 : vector<256x32xf32>
    %171 = math.exp %170 : vector<256x32xf32>
    %cst_145 = arith.constant 1.000000e+00 : f32
    %172 = vector.broadcast %cst_145 : f32 to vector<256x32xf32>
    %173 = arith.addf %172, %171 : vector<256x32xf32>
    %174 = tpu.reciprocal %173 {approx = true} : vector<256x32xf32> -> vector<256x32xf32>
    %175 = arith.mulf %11, %174 : vector<256x32xf32>
    %176 = arith.mulf %168, %175 : vector<256x32xf32>
    %c0_146 = arith.constant 0 : index
    %c0_147 = arith.constant 0 : index
    %177 = vector.load %arg13[%c0_146, %c0_147] : memref<32x16xbf16, #tpu.memory_space<vmem>>, vector<32x16xbf16>
    %178 = arith.truncf %176 : vector<256x32xf32> to vector<256x32xbf16>
    %cst_148 = arith.constant dense<0.000000e+00> : vector<256x16xf32>
    %179 = tpu.matmul %178, %177, %cst_148 {dimension_numbers = #tpu.dot_dimension_numbers<[1], [0], [0], [1], [0, 0, 1, 1], [], []>} : vector<256x32xbf16>, vector<32x16xbf16>, vector<256x16xf32> -> vector<256x16xf32>
    %cst_149 = arith.constant dense<0.000000e+00> : vector<256xf32>
    %180 = vector.multi_reduction <add>, %179, %cst_149 [1] : vector<256x16xf32> to vector<256xf32>
    %181 = vector.shape_cast %180 : vector<256xf32> to vector<256x1xf32>
    %cst_150 = arith.constant 1.600000e+01 : f32
    %182 = vector.broadcast %cst_150 : f32 to vector<256x1xf32>
    %183 = arith.divf %181, %182 : vector<256x1xf32>
    %184 = vector.broadcast %183 : vector<256x1xf32> to vector<256x16xf32>
    %185 = arith.subf %179, %184 : vector<256x16xf32>
    %186 = arith.mulf %185, %185 : vector<256x16xf32>
    %cst_151 = arith.constant dense<0.000000e+00> : vector<256xf32>
    %187 = vector.multi_reduction <add>, %186, %cst_151 [1] : vector<256x16xf32> to vector<256xf32>
    %188 = vector.shape_cast %187 : vector<256xf32> to vector<256x1xf32>
    %cst_152 = arith.constant 1.600000e+01 : f32
    %189 = vector.broadcast %cst_152 : f32 to vector<256x1xf32>
    %190 = arith.divf %188, %189 : vector<256x1xf32>
    %191 = vector.extract_strided_slice %179 {offsets = [0, 15], sizes = [256, 1], strides = [1, 1]} : vector<256x16xf32> to vector<256x1xf32>
    %192 = arith.subf %191, %183 : vector<256x1xf32>
    %cst_153 = arith.constant 9.99999974E-6 : f32
    %193 = vector.broadcast %cst_153 : f32 to vector<256x1xf32>
    %194 = arith.addf %190, %193 : vector<256x1xf32>
    %195 = math.rsqrt %194 : vector<256x1xf32>
    %196 = arith.mulf %192, %195 : vector<256x1xf32>
    %c0_154 = arith.constant 0 : index
    %c0_155 = arith.constant 0 : index
    %197 = vector.load %arg14[%c0_154, %c0_155] : memref<1x1xf32, #tpu.memory_space<vmem>>, vector<1x1xf32>
    %198 = vector.broadcast %197 : vector<1x1xf32> to vector<256x1xf32>
    %199 = arith.mulf %196, %198 : vector<256x1xf32>
    %c0_156 = arith.constant 0 : index
    %c0_157 = arith.constant 0 : index
    %200 = vector.load %arg15[%c0_156, %c0_157] : memref<1x1xf32, #tpu.memory_space<vmem>>, vector<1x1xf32>
    %201 = vector.broadcast %200 : vector<1x1xf32> to vector<256x1xf32>
    %202 = arith.addf %199, %201 : vector<256x1xf32>
    %c0_158 = arith.constant 0 : index
    %c0_159 = arith.constant 0 : index
    %203 = vector.load %arg17[%c0_158, %c0_159] : memref<256x5xf32, #tpu.memory_space<vmem>>, vector<256x5xf32>
    %204 = vector.broadcast %202 : vector<256x1xf32> to vector<256x5xf32>
    %205 = arith.mulf %204, %203 : vector<256x5xf32>
    %c0_160 = arith.constant 0 : index
    %c0_161 = arith.constant 0 : index
    %206 = vector.load %arg18[%c0_160, %c0_161] : memref<16x256xf32, #tpu.memory_space<vmem>>, vector<16x256xf32>
    %cst_162 = arith.constant dense<0.000000e+00> : vector<16x5xf32>
    %207 = tpu.matmul %206, %205, %cst_162 {dimension_numbers = #tpu.dot_dimension_numbers<[1], [0], [0], [1], [0, 0, 1, 1], [], []>} : vector<16x256xf32>, vector<256x5xf32>, vector<16x5xf32> -> vector<16x5xf32>
    %c0_163 = arith.constant 0 : index
    %c0_164 = arith.constant 0 : index
    %208 = vector.load %arg19[%c0_163, %c0_164] : memref<1x5xf32, #tpu.memory_space<vmem>>, vector<1x5xf32>
    %209 = vector.broadcast %208 : vector<1x5xf32> to vector<16x5xf32>
    %210 = arith.addf %207, %209 : vector<16x5xf32>
    %c0_165 = arith.constant 0 : index
    %c0_166 = arith.constant 0 : index
    %211 = vector.load %arg20[%c0_165, %c0_166] : memref<16x5xf32, #tpu.memory_space<vmem>>, vector<16x5xf32>
    tpu.vector_store %arg20[%c0_165, %c0_166], %210 {strides = array<i32>} : memref<16x5xf32, #tpu.memory_space<vmem>>, vector<16x5xf32>,
    return
  }
  func.func @transform_0(%arg0: i32) -> (i32, i32) {
    %c0_i32 = arith.constant 0 : i32
    %c0_i32_0 = arith.constant 0 : i32
    return %arg0, %c0_i32 : i32, i32
  }
  func.func @transform_1(%arg0: i32) -> (i32, i32) {
    %c0_i32 = arith.constant 0 : i32
    %c0_i32_0 = arith.constant 0 : i32
    %c0_i32_1 = arith.constant 0 : i32
    return %c0_i32, %c0_i32_0 : i32, i32
  }
  func.func @transform_2(%arg0: i32) -> (i32, i32) {
    %c0_i32 = arith.constant 0 : i32
    %c0_i32_0 = arith.constant 0 : i32
    %c0_i32_1 = arith.constant 0 : i32
    return %c0_i32, %c0_i32_0 : i32, i32
  }
  func.func @transform_3(%arg0: i32) -> (i32, i32) {
    %c0_i32 = arith.constant 0 : i32
    %c0_i32_0 = arith.constant 0 : i32
    %c0_i32_1 = arith.constant 0 : i32
    return %c0_i32, %c0_i32_0 : i32, i32
  }
  func.func @transform_4(%arg0: i32) -> (i32, i32) {
    %c0_i32 = arith.constant 0 : i32
    %c0_i32_0 = arith.constant 0 : i32
    %c0_i32_1 = arith.constant 0 : i32
    return %c0_i32, %c0_i32_0 : i32, i32
  }
  func.func @transform_5(%arg0: i32) -> (i32, i32) {
    %c0_i32 = arith.constant 0 : i32
    %c0_i32_0 = arith.constant 0 : i32
    %c0_i32_1 = arith.constant 0 : i32
    return %c0_i32, %c0_i32_0 : i32, i32
  }
  func.func @transform_6(%arg0: i32) -> (i32, i32) {
    %c0_i32 = arith.constant 0 : i32
    %c0_i32_0 = arith.constant 0 : i32
    %c0_i32_1 = arith.constant 0 : i32
    return %c0_i32, %c0_i32_0 : i32, i32
  }
  func.func @transform_7(%arg0: i32) -> (i32, i32) {
    %c0_i32 = arith.constant 0 : i32
    %c0_i32_0 = arith.constant 0 : i32
    %c0_i32_1 = arith.constant 0 : i32
    return %c0_i32, %c0_i32_0 : i32, i32
  }
  func.func @transform_8(%arg0: i32) -> (i32, i32) {
    %c0_i32 = arith.constant 0 : i32
    %c0_i32_0 = arith.constant 0 : i32
    %c0_i32_1 = arith.constant 0 : i32
    return %c0_i32, %c0_i32_0 : i32, i32
  }
  func.func @transform_9(%arg0: i32) -> (i32, i32) {
    %c0_i32 = arith.constant 0 : i32
    %c0_i32_0 = arith.constant 0 : i32
    %c0_i32_1 = arith.constant 0 : i32
    return %c0_i32, %c0_i32_0 : i32, i32
  }
  func.func @transform_10(%arg0: i32) -> (i32, i32) {
    %c0_i32 = arith.constant 0 : i32
    %c0_i32_0 = arith.constant 0 : i32
    %c0_i32_1 = arith.constant 0 : i32
    return %c0_i32, %c0_i32_0 : i32, i32
  }
  func.func @transform_11(%arg0: i32) -> (i32, i32) {
    %c0_i32 = arith.constant 0 : i32
    %c0_i32_0 = arith.constant 0 : i32
    %c0_i32_1 = arith.constant 0 : i32
    return %c0_i32, %c0_i32_0 : i32, i32
  }
  func.func @transform_12(%arg0: i32) -> (i32, i32) {
    %c0_i32 = arith.constant 0 : i32
    %c0_i32_0 = arith.constant 0 : i32
    %c0_i32_1 = arith.constant 0 : i32
    return %c0_i32, %c0_i32_0 : i32, i32
  }
  func.func @transform_13(%arg0: i32) -> (i32, i32) {
    %c0_i32 = arith.constant 0 : i32
    %c0_i32_0 = arith.constant 0 : i32
    %c0_i32_1 = arith.constant 0 : i32
    return %c0_i32, %c0_i32_0 : i32, i32
  }
  func.func @transform_14(%arg0: i32) -> (i32, i32) {
    %c0_i32 = arith.constant 0 : i32
    %c0_i32_0 = arith.constant 0 : i32
    %c0_i32_1 = arith.constant 0 : i32
    return %c0_i32, %c0_i32_0 : i32, i32
  }
  func.func @transform_15(%arg0: i32) -> (i32, i32) {
    %c0_i32 = arith.constant 0 : i32
    %c0_i32_0 = arith.constant 0 : i32
    %c0_i32_1 = arith.constant 0 : i32
    return %c0_i32, %c0_i32_0 : i32, i32
  }
  func.func @transform_16(%arg0: i32) -> (i32, i32) {
    %c0_i32 = arith.constant 0 : i32
    %c0_i32_0 = arith.constant 0 : i32
    %c0_i32_1 = arith.constant 0 : i32
    return %c0_i32, %c0_i32_0 : i32, i32
  }
  func.func @transform_17(%arg0: i32) -> (i32, i32) {
    %c0_i32 = arith.constant 0 : i32
    %c0_i32_0 = arith.constant 0 : i32
    %c0_i32_1 = arith.constant 0 : i32
    return %c0_i32, %c0_i32_0 : i32, i32
  }
  func.func @transform_18(%arg0: i32) -> (i32, i32) {
    %c0_i32 = arith.constant 0 : i32
    %c0_i32_0 = arith.constant 0 : i32
    %c0_i32_1 = arith.constant 0 : i32
    return %c0_i32, %c0_i32_0 : i32, i32
  }
  func.func @transform_19(%arg0: i32) -> (i32, i32) {
    %c0_i32 = arith.constant 0 : i32
    %c0_i32_0 = arith.constant 0 : i32
    return %arg0, %c0_i32 : i32, i32
  }
}

</mosaic_0001>

<llo_original>
// kernel: tpu_custom_call.1
$region0: #{tpu_custom_call.1}
  #allocation0 [shape = 'u32[]', space=smem, size = 0x4, offset = 0x4, fixed_abs, tag = 'smem constant byte address 0x4 - core index']
  #allocation1 [shape = 'u32[144,128]{1,0:T(1,128)}', space=vmem, size = 0x12000, scoped, tag = 'internal scratch']
  #allocation2 [shape = 'f32[304,32]{1,0:T(8,128)}', space=vmem, size = 0x26000, scoped, tag = 'scratch operand']
  #allocation3 [shape = 'f32[256,128]{1,0:T(8,128)}', space=vmem, size = 0x20000, scoped, tag = 'scratch operand']
  #allocation4 [shape = 'f32[256,128]{1,0:T(8,128)}', space=vmem, size = 0x20000, scoped, tag = 'scratch operand']
  #allocation5 [shape = 'f32[256,128]{1,0:T(8,128)}', space=vmem, size = 0x20000, scoped, tag = 'scratch operand']
  #allocation6 [shape = 'f32[256,128]{1,0:T(8,128)}', space=vmem, size = 0x20000, scoped, tag = 'scratch operand']
  #allocation7 [shape = 'f32[1,1]{1,0:T(1,128)S(1)}', space=vmem, size = 0x200, scoped, tag = 'scoped memory for tpu_custom_call.1']
  #allocation8 [shape = 'f32[1,1]{1,0:T(1,128)S(1)}', space=vmem, size = 0x200, scoped, tag = 'scoped memory for tpu_custom_call.1']
  %s0 = inlined_call_operand.vmem [shape: f32[384,16], index: 0, kind: input, shape index: {}]
  %s1 = inlined_call_operand.vmem [shape: bf16[256,192], index: 1, kind: input, shape index: {}]
  %s2 = inlined_call_operand.vmem [shape: f32[256,16], index: 2, kind: input, shape index: {}]
  %s3 = inlined_call_operand.vmem [shape: bf16[16,32], index: 3, kind: input, shape index: {}]
  %s4 = inlined_call_operand.vmem [shape: bf16[16,32], index: 4, kind: input, shape index: {}]
  %s5 = inlined_call_operand.vmem [shape: f32[4,32], index: 5, kind: input, shape index: {}]
  %s6 = inlined_call_operand.vmem [shape: f32[1,32], index: 6, kind: input, shape index: {}]
  %s7 = inlined_call_operand.vmem [shape: bf16[32,288], index: 7, kind: input, shape index: {}]
  %s8 = inlined_call_operand.vmem [shape: f32[1,32], index: 8, kind: input, shape index: {}]
  %s9 = inlined_call_operand.vmem [shape: f32[1,128], index: 9, kind: input, shape index: {}]
  %s10 = inlined_call_operand.vmem [shape: f32[32,128], index: 10, kind: input, shape index: {}]
  %s11 = inlined_call_operand.vmem [shape: f32[1,32], index: 11, kind: input, shape index: {}]
  %s12 = inlined_call_operand.vmem [shape: bf16[32,16], index: 12, kind: input, shape index: {}]
  %s13 = inlined_call_operand.<no memory space> [shape: f32[1,1], index: 13, kind: input, shape index: {}]
  %s14 = inlined_call_operand.<no memory space> [shape: f32[1,1], index: 14, kind: input, shape index: {}]
  %s15 = inlined_call_operand.vmem [shape: f32[128,32], index: 15, kind: input, shape index: {}]
  %s16 = inlined_call_operand.vmem [shape: f32[256,5], index: 16, kind: input, shape index: {}]
  %s17 = inlined_call_operand.vmem [shape: f32[16,256], index: 17, kind: input, shape index: {}]
  %s18 = inlined_call_operand.vmem [shape: f32[1,5], index: 18, kind: input, shape index: {}]
  %s19 = inlined_call_operand.vmem [shape: f32[32,5], index: 19, kind: output, shape index: {}]
  %s20 = sld [smem:[#allocation0]]
  $region109: #{tpu_custom_call.1} parent=0
    _
  %s22 = ssub.s32 1, %s20
  %s23 = scalar_select 0, %s22, %s20
  %v24 = vstv %s13
  %25 = vst [vmem:[#allocation7] sm:$0x1] %v24
  %v26 = vstv %s14
  %27 = vst [vmem:[#allocation8] sm:$0x1] %v26
  loop: start=0, step=1, limit=4
  $region2: #{tpu_custom_call.1} parent=0 // loop_pre_header
    _
  $region3: #{tpu_custom_call.1} parent=0 // loop_header
    %s29 = sphi 0, %s33
    %p30 = scmp.ge.s32.totalorder %s29, 4
    %s39 = sphi 0, %s41
    %s42 = sphi 0, %s39
    %s43 = sphi 0, %s42
    %s59 = sphi 0, %s43
    %s63 = sphi 0, %s63
    %s65 = sphi 0, %s63
    %s66 = sphi 0, %s65
    %s80 = sphi 0, %s66
    %s84 = sphi 0, %s84
    %s86 = sphi 0, %s84
    %s87 = sphi 0, %s86
    %s101 = sphi 0, %s87
    %s105 = sphi 0, %s105
    %s107 = sphi 0, %s105
    %s108 = sphi 0, %s107
    %s122 = sphi 0, %s108
    %s126 = sphi 0, %s126
    %s128 = sphi 0, %s126
    %s129 = sphi 0, %s128
    %s143 = sphi 0, %s129
    %s147 = sphi 0, %s147
    %s149 = sphi 0, %s147
    %s150 = sphi 0, %s149
    %s164 = sphi 0, %s150
    %s168 = sphi 0, %s168
    %s170 = sphi 0, %s168
    %s171 = sphi 0, %s170
    %s185 = sphi 0, %s171
    %s189 = sphi 0, %s189
    %s191 = sphi 0, %s189
    %s192 = sphi 0, %s191
    %s206 = sphi 0, %s192
    %s210 = sphi 0, %s210
    %s212 = sphi 0, %s210
    %s213 = sphi 0, %s212
    %s227 = sphi 0, %s213
    %s231 = sphi 0, %s231
    %s233 = sphi 0, %s231
    %s234 = sphi 0, %s233
    %s248 = sphi 0, %s234
    %s252 = sphi 0, %s252
    %s254 = sphi 0, %s252
    %s255 = sphi 0, %s254
    %s269 = sphi 0, %s255
    %s273 = sphi 0, %s273
    %s275 = sphi 0, %s273
    %s276 = sphi 0, %s275
    %s290 = sphi 0, %s276
    %s294 = sphi 0, %s294
    %s296 = sphi 0, %s294
    %s297 = sphi 0, %s296
    %s311 = sphi 0, %s297
    %s315 = sphi 0, %s315
    %s317 = sphi 0, %s315
    %s318 = sphi 0, %s317
    %s332 = sphi 0, %s318
    %s336 = sphi 0, %s336
    %s338 = sphi 0, %s336
    %s339 = sphi 0, %s338
    %s353 = sphi 0, %s339
    %s357 = sphi 0, %s357
    %s359 = sphi 0, %s357
    %s360 = sphi 0, %s359
    %s374 = sphi 0, %s360
    %s378 = sphi 0, %s378
    %s380 = sphi 0, %s378
    %s381 = sphi 0, %s380
    %s395 = sphi 0, %s381
    %s399 = sphi 0, %s399
    %s401 = sphi 0, %s399
    %s402 = sphi 0, %s401
    %s416 = sphi 0, %s402
    %s420 = sphi 0, %s420
    %s422 = sphi 0, %s420
    %s423 = sphi 0, %s422
    %s437 = sphi 0, %s423
    %s443 = sphi 0, %s445
    %s446 = sphi 0, %s443
    %s447 = sphi 0, %s446
    %s463 = sphi 0, %s447
  $region4: #{tpu_custom_call.1} parent=0 // loop_header_branch
    %32 = sbr.rel (%p30) target = $region8
  $region5: #{tpu_custom_call.1} parent=0 // loop_body
    %s34 = ssub.s32 %s29, 1
    %s35 = ssub.s32 %s29, 2
    %s36 = sadd.s32 %s29, 1
    %s37 = ssub.s32 %s29, %s36
    %p38 = scmp.eq.s32.totalorder %s37, 0
    %s40 = sadd.s32 %s39, 1
    %s41 = scalar_select %p38, %s39, %s40
    %p44 = pneg %p38
    %p45 = scmp.eq.s32.totalorder %s29, 1
    %p46 = por %p44, %p45
    %p47 = scmp.ne.s32.totalorder %s39, %s42
    %p48 = scmp.eq.s32.totalorder %s29, 0
    %p49 = por %p47, %p48
    %p50 = scmp.ne.s32.totalorder %s39, %s42
    %p51 = scmp.eq.s32.totalorder %s34, 1
    %p52 = por %p50, %p51
    %p53 = scmp.ne.s32.totalorder %s42, %s43
    %p54 = scmp.eq.s32.totalorder %s34, 0
    %p55 = por %p53, %p54
    %p56 = scmp.ne.s32.totalorder %s42, %s43
    %p57 = scmp.eq.s32.totalorder %s35, 1
    %p58 = por %p56, %p57
    %p60 = scmp.ne.s32.totalorder %s43, %s59
    %p61 = scmp.eq.s32.totalorder %s35, 0
    %p62 = por %p60, %p61
    %s64 = sadd.s32 %s63, 1
    %p67 = scmp.eq.s32.totalorder %s29, 1
    %p68 = scmp.ne.s32.totalorder %s63, %s65
    %p69 = scmp.eq.s32.totalorder %s29, 0
    %p70 = por %p68, %p69
    %p71 = scmp.ne.s32.totalorder %s63, %s65
    %p72 = scmp.eq.s32.totalorder %s34, 1
    %p73 = por %p71, %p72
    %p74 = scmp.ne.s32.totalorder %s65, %s66
    %p75 = scmp.eq.s32.totalorder %s34, 0
    %p76 = por %p74, %p75
    %p77 = scmp.ne.s32.totalorder %s65, %s66
    %p78 = scmp.eq.s32.totalorder %s35, 1
    %p79 = por %p77, %p78
    %p81 = scmp.ne.s32.totalorder %s66, %s80
    %p82 = scmp.eq.s32.totalorder %s35, 0
    %p83 = por %p81, %p82
    %s85 = sadd.s32 %s84, 1
    %p88 = scmp.eq.s32.totalorder %s29, 1
    %p89 = scmp.ne.s32.totalorder %s84, %s86
    %p90 = scmp.eq.s32.totalorder %s29, 0
    %p91 = por %p89, %p90
    %p92 = scmp.ne.s32.totalorder %s84, %s86
    %p93 = scmp.eq.s32.totalorder %s34, 1
    %p94 = por %p92, %p93
    %p95 = scmp.ne.s32.totalorder %s86, %s87
    %p96 = scmp.eq.s32.totalorder %s34, 0
    %p97 = por %p95, %p96
    %p98 = scmp.ne.s32.totalorder %s86, %s87
    %p99 = scmp.eq.s32.totalorder %s35, 1
    %p100 = por %p98, %p99
    %p102 = scmp.ne.s32.totalorder %s87, %s101
    %p103 = scmp.eq.s32.totalorder %s35, 0
    %p104 = por %p102, %p103
    %s106 = sadd.s32 %s105, 1
    %p109 = scmp.eq.s32.totalorder %s29, 1
    %p110 = scmp.ne.s32.totalorder %s105, %s107
    %p111 = scmp.eq.s32.totalorder %s29, 0
    %p112 = por %p110, %p111
    %p113 = scmp.ne.s32.totalorder %s105, %s107
    %p114 = scmp.eq.s32.totalorder %s34, 1
    %p115 = por %p113, %p114
    %p116 = scmp.ne.s32.totalorder %s107, %s108
    %p117 = scmp.eq.s32.totalorder %s34, 0
    %p118 = por %p116, %p117
    %p119 = scmp.ne.s32.totalorder %s107, %s108
    %p120 = scmp.eq.s32.totalorder %s35, 1
    %p121 = por %p119, %p120
    %p123 = scmp.ne.s32.totalorder %s108, %s122
    %p124 = scmp.eq.s32.totalorder %s35, 0
    %p125 = por %p123, %p124
    %s127 = sadd.s32 %s126, 1
    %p130 = scmp.eq.s32.totalorder %s29, 1
    %p131 = scmp.ne.s32.totalorder %s126, %s128
    %p132 = scmp.eq.s32.totalorder %s29, 0
    %p133 = por %p131, %p132
    %p134 = scmp.ne.s32.totalorder %s126, %s128
    %p135 = scmp.eq.s32.totalorder %s34, 1
    %p136 = por %p134, %p135
    %p137 = scmp.ne.s32.totalorder %s128, %s129
    %p138 = scmp.eq.s32.totalorder %s34, 0
    %p139 = por %p137, %p138
    %p140 = scmp.ne.s32.totalorder %s128, %s129
    %p141 = scmp.eq.s32.totalorder %s35, 1
    %p142 = por %p140, %p141
    %p144 = scmp.ne.s32.totalorder %s129, %s143
    %p145 = scmp.eq.s32.totalorder %s35, 0
    %p146 = por %p144, %p145
    %s148 = sadd.s32 %s147, 1
    %p151 = scmp.eq.s32.totalorder %s29, 1
    %p152 = scmp.ne.s32.totalorder %s147, %s149
    %p153 = scmp.eq.s32.totalorder %s29, 0
    %p154 = por %p152, %p153
    %p155 = scmp.ne.s32.totalorder %s147, %s149
    %p156 = scmp.eq.s32.totalorder %s34, 1
    %p157 = por %p155, %p156
    %p158 = scmp.ne.s32.totalorder %s149, %s150
    %p159 = scmp.eq.s32.totalorder %s34, 0
    %p160 = por %p158, %p159
    %p161 = scmp.ne.s32.totalorder %s149, %s150
    %p162 = scmp.eq.s32.totalorder %s35, 1
    %p163 = por %p161, %p162
    %p165 = scmp.ne.s32.totalorder %s150, %s164
    %p166 = scmp.eq.s32.totalorder %s35, 0
    %p167 = por %p165, %p166
    %s169 = sadd.s32 %s168, 1
    %p172 = scmp.eq.s32.totalorder %s29, 1
    %p173 = scmp.ne.s32.totalorder %s168, %s170
    %p174 = scmp.eq.s32.totalorder %s29, 0
    %p175 = por %p173, %p174
    %p176 = scmp.ne.s32.totalorder %s168, %s170
    %p177 = scmp.eq.s32.totalorder %s34, 1
    %p178 = por %p176, %p177
    %p179 = scmp.ne.s32.totalorder %s170, %s171
    %p180 = scmp.eq.s32.totalorder %s34, 0
    %p181 = por %p179, %p180
    %p182 = scmp.ne.s32.totalorder %s170, %s171
    %p183 = scmp.eq.s32.totalorder %s35, 1
    %p184 = por %p182, %p183
    %p186 = scmp.ne.s32.totalorder %s171, %s185
    %p187 = scmp.eq.s32.totalorder %s35, 0
    %p188 = por %p186, %p187
    %s190 = sadd.s32 %s189, 1
    %p193 = scmp.eq.s32.totalorder %s29, 1
    %p194 = scmp.ne.s32.totalorder %s189, %s191
    %p195 = scmp.eq.s32.totalorder %s29, 0
    %p196 = por %p194, %p195
    %p197 = scmp.ne.s32.totalorder %s189, %s191
    %p198 = scmp.eq.s32.totalorder %s34, 1
    %p199 = por %p197, %p198
    %p200 = scmp.ne.s32.totalorder %s191, %s192
    %p201 = scmp.eq.s32.totalorder %s34, 0
    %p202 = por %p200, %p201
    %p203 = scmp.ne.s32.totalorder %s191, %s192
    %p204 = scmp.eq.s32.totalorder %s35, 1
    %p205 = por %p203, %p204
    %p207 = scmp.ne.s32.totalorder %s192, %s206
    %p208 = scmp.eq.s32.totalorder %s35, 0
    %p209 = por %p207, %p208
    %s211 = sadd.s32 %s210, 1
    %p214 = scmp.eq.s32.totalorder %s29, 1
    %p215 = scmp.ne.s32.totalorder %s210, %s212
    %p216 = scmp.eq.s32.totalorder %s29, 0
    %p217 = por %p215, %p216
    %p218 = scmp.ne.s32.totalorder %s210, %s212
    %p219 = scmp.eq.s32.totalorder %s34, 1
    %p220 = por %p218, %p219
    %p221 = scmp.ne.s32.totalorder %s212, %s213
    %p222 = scmp.eq.s32.totalorder %s34, 0
    %p223 = por %p221, %p222
    %p224 = scmp.ne.s32.totalorder %s212, %s213
    %p225 = scmp.eq.s32.totalorder %s35, 1
    %p226 = por %p224, %p225
    %p228 = scmp.ne.s32.totalorder %s213, %s227
    %p229 = scmp.eq.s32.totalorder %s35, 0
    %p230 = por %p228, %p229
    %s232 = sadd.s32 %s231, 1
    %p235 = scmp.eq.s32.totalorder %s29, 1
    %p236 = scmp.ne.s32.totalorder %s231, %s233
    %p237 = scmp.eq.s32.totalorder %s29, 0
    %p238 = por %p236, %p237
    %p239 = scmp.ne.s32.totalorder %s231, %s233
    %p240 = scmp.eq.s32.totalorder %s34, 1
    %p241 = por %p239, %p240
    %p242 = scmp.ne.s32.totalorder %s233, %s234
    %p243 = scmp.eq.s32.totalorder %s34, 0
    %p244 = por %p242, %p243
    %p245 = scmp.ne.s32.totalorder %s233, %s234
    %p246 = scmp.eq.s32.totalorder %s35, 1
    %p247 = por %p245, %p246
    %p249 = scmp.ne.s32.totalorder %s234, %s248
    %p250 = scmp.eq.s32.totalorder %s35, 0
    %p251 = por %p249, %p250
    %s253 = sadd.s32 %s252, 1
    %p256 = scmp.eq.s32.totalorder %s29, 1
    %p257 = scmp.ne.s32.totalorder %s252, %s254
    %p258 = scmp.eq.s32.totalorder %s29, 0
    %p259 = por %p257, %p258
    %p260 = scmp.ne.s32.totalorder %s252, %s254
    %p261 = scmp.eq.s32.totalorder %s34, 1
    %p262 = por %p260, %p261
    %p263 = scmp.ne.s32.totalorder %s254, %s255
    %p264 = scmp.eq.s32.totalorder %s34, 0
    %p265 = por %p263, %p264
    %p266 = scmp.ne.s32.totalorder %s254, %s255
    %p267 = scmp.eq.s32.totalorder %s35, 1
    %p268 = por %p266, %p267
    %p270 = scmp.ne.s32.totalorder %s255, %s269
    %p271 = scmp.eq.s32.totalorder %s35, 0
    %p272 = por %p270, %p271
    %s274 = sadd.s32 %s273, 1
    %p277 = scmp.eq.s32.totalorder %s29, 1
    %p278 = scmp.ne.s32.totalorder %s273, %s275
    %p279 = scmp.eq.s32.totalorder %s29, 0
    %p280 = por %p278, %p279
    %p281 = scmp.ne.s32.totalorder %s273, %s275
    %p282 = scmp.eq.s32.totalorder %s34, 1
    %p283 = por %p281, %p282
    %p284 = scmp.ne.s32.totalorder %s275, %s276
    %p285 = scmp.eq.s32.totalorder %s34, 0
    %p286 = por %p284, %p285
    %p287 = scmp.ne.s32.totalorder %s275, %s276
    %p288 = scmp.eq.s32.totalorder %s35, 1
    %p289 = por %p287, %p288
    %p291 = scmp.ne.s32.totalorder %s276, %s290
    %p292 = scmp.eq.s32.totalorder %s35, 0
    %p293 = por %p291, %p292
    %s295 = sadd.s32 %s294, 1
    %p298 = scmp.eq.s32.totalorder %s29, 1
    %p299 = scmp.ne.s32.totalorder %s294, %s296
    %p300 = scmp.eq.s32.totalorder %s29, 0
    %p301 = por %p299, %p300
    %p302 = scmp.ne.s32.totalorder %s294, %s296
    %p303 = scmp.eq.s32.totalorder %s34, 1
    %p304 = por %p302, %p303
    %p305 = scmp.ne.s32.totalorder %s296, %s297
    %p306 = scmp.eq.s32.totalorder %s34, 0
    %p307 = por %p305, %p306
    %p308 = scmp.ne.s32.totalorder %s296, %s297
    %p309 = scmp.eq.s32.totalorder %s35, 1
    %p310 = por %p308, %p309
    %p312 = scmp.ne.s32.totalorder %s297, %s311
    %p313 = scmp.eq.s32.totalorder %s35, 0
    %p314 = por %p312, %p313
    %s316 = sadd.s32 %s315, 1
    %p319 = scmp.eq.s32.totalorder %s29, 1
    %p320 = scmp.ne.s32.totalorder %s315, %s317
    %p321 = scmp.eq.s32.totalorder %s29, 0
    %p322 = por %p320, %p321
    %p323 = scmp.ne.s32.totalorder %s315, %s317
    %p324 = scmp.eq.s32.totalorder %s34, 1
    %p325 = por %p323, %p324
    %p326 = scmp.ne.s32.totalorder %s317, %s318
    %p327 = scmp.eq.s32.totalorder %s34, 0
    %p328 = por %p326, %p327
    %p329 = scmp.ne.s32.totalorder %s317, %s318
    %p330 = scmp.eq.s32.totalorder %s35, 1
    %p331 = por %p329, %p330
    %p333 = scmp.ne.s32.totalorder %s318, %s332
    %p334 = scmp.eq.s32.totalorder %s35, 0
    %p335 = por %p333, %p334
    %s337 = sadd.s32 %s336, 1
    %p340 = scmp.eq.s32.totalorder %s29, 1
    %p341 = scmp.ne.s32.totalorder %s336, %s338
    %p342 = scmp.eq.s32.totalorder %s29, 0
    %p343 = por %p341, %p342
    %p344 = scmp.ne.s32.totalorder %s336, %s338
    %p345 = scmp.eq.s32.totalorder %s34, 1
    %p346 = por %p344, %p345
    %p347 = scmp.ne.s32.totalorder %s338, %s339
    %p348 = scmp.eq.s32.totalorder %s34, 0
    %p349 = por %p347, %p348
    %p350 = scmp.ne.s32.totalorder %s338, %s339
    %p351 = scmp.eq.s32.totalorder %s35, 1
    %p352 = por %p350, %p351
    %p354 = scmp.ne.s32.totalorder %s339, %s353
    %p355 = scmp.eq.s32.totalorder %s35, 0
    %p356 = por %p354, %p355
    %s358 = sadd.s32 %s357, 1
    %p361 = scmp.eq.s32.totalorder %s29, 1
    %p362 = scmp.ne.s32.totalorder %s357, %s359
    %p363 = scmp.eq.s32.totalorder %s29, 0
    %p364 = por %p362, %p363
    %p365 = scmp.ne.s32.totalorder %s357, %s359
    %p366 = scmp.eq.s32.totalorder %s34, 1
    %p367 = por %p365, %p366
    %p368 = scmp.ne.s32.totalorder %s359, %s360
    %p369 = scmp.eq.s32.totalorder %s34, 0
    %p370 = por %p368, %p369
    %p371 = scmp.ne.s32.totalorder %s359, %s360
    %p372 = scmp.eq.s32.totalorder %s35, 1
    %p373 = por %p371, %p372
    %p375 = scmp.ne.s32.totalorder %s360, %s374
    %p376 = scmp.eq.s32.totalorder %s35, 0
    %p377 = por %p375, %p376
    %s379 = sadd.s32 %s378, 1
    %p382 = scmp.eq.s32.totalorder %s29, 1
    %p383 = scmp.ne.s32.totalorder %s378, %s380
    %p384 = scmp.eq.s32.totalorder %s29, 0
    %p385 = por %p383, %p384
    %p386 = scmp.ne.s32.totalorder %s378, %s380
    %p387 = scmp.eq.s32.totalorder %s34, 1
    %p388 = por %p386, %p387
    %p389 = scmp.ne.s32.totalorder %s380, %s381
    %p390 = scmp.eq.s32.totalorder %s34, 0
    %p391 = por %p389, %p390
    %p392 = scmp.ne.s32.totalorder %s380, %s381
    %p393 = scmp.eq.s32.totalorder %s35, 1
    %p394 = por %p392, %p393
    %p396 = scmp.ne.s32.totalorder %s381, %s395
    %p397 = scmp.eq.s32.totalorder %s35, 0
    %p398 = por %p396, %p397
    %s400 = sadd.s32 %s399, 1
    %p403 = scmp.eq.s32.totalorder %s29, 1
    %p404 = scmp.ne.s32.totalorder %s399, %s401
    %p405 = scmp.eq.s32.totalorder %s29, 0
    %p406 = por %p404, %p405
    %p407 = scmp.ne.s32.totalorder %s399, %s401
    %p408 = scmp.eq.s32.totalorder %s34, 1
    %p409 = por %p407, %p408
    %p410 = scmp.ne.s32.totalorder %s401, %s402
    %p411 = scmp.eq.s32.totalorder %s34, 0
    %p412 = por %p410, %p411
    %p413 = scmp.ne.s32.totalorder %s401, %s402
    %p414 = scmp.eq.s32.totalorder %s35, 1
    %p415 = por %p413, %p414
    %p417 = scmp.ne.s32.totalorder %s402, %s416
    %p418 = scmp.eq.s32.totalorder %s35, 0
    %p419 = por %p417, %p418
    %s421 = sadd.s32 %s420, 1
    %p424 = scmp.eq.s32.totalorder %s29, 1
    %p425 = scmp.ne.s32.totalorder %s420, %s422
    %p426 = scmp.eq.s32.totalorder %s29, 0
    %p427 = por %p425, %p426
    %p428 = scmp.ne.s32.totalorder %s420, %s422
    %p429 = scmp.eq.s32.totalorder %s34, 1
    %p430 = por %p428, %p429
    %p431 = scmp.ne.s32.totalorder %s422, %s423
    %p432 = scmp.eq.s32.totalorder %s34, 0
    %p433 = por %p431, %p432
    %p434 = scmp.ne.s32.totalorder %s422, %s423
    %p435 = scmp.eq.s32.totalorder %s35, 1
    %p436 = por %p434, %p435
    %p438 = scmp.ne.s32.totalorder %s423, %s437
    %p439 = scmp.eq.s32.totalorder %s35, 0
    %p440 = por %p438, %p439
    %s441 = ssub.s32 %s29, %s36
    %p442 = scmp.eq.s32.totalorder %s441, 0
    %s444 = sadd.s32 %s443, 1
    %s445 = scalar_select %p442, %s443, %s444
    %p448 = pneg %p442
    %p449 = scmp.eq.s32.totalorder %s29, 1
    %p450 = por %p448, %p449
    %p451 = scmp.ne.s32.totalorder %s443, %s446
    %p452 = scmp.eq.s32.totalorder %s29, 0
    %p453 = por %p451, %p452
    %p454 = scmp.ne.s32.totalorder %s443, %s446
    %p455 = scmp.eq.s32.totalorder %s34, 1
    %p456 = por %p454, %p455
    %p457 = scmp.ne.s32.totalorder %s446, %s447
    %p458 = scmp.eq.s32.totalorder %s34, 0
    %p459 = por %p457, %p458
    %p460 = scmp.ne.s32.totalorder %s446, %s447
    %p461 = scmp.eq.s32.totalorder %s35, 1
    %p462 = por %p460, %p461
    %p464 = scmp.ne.s32.totalorder %s447, %s463
    %p465 = scmp.eq.s32.totalorder %s35, 0
    %p466 = por %p464, %p465
    %p467 = scmp.le.s32.totalorder 1, %s29
    %p468 = scmp.lt.s32.totalorder %s29, 3
    %p469 = pnand %p467, %p468
    %p470 = pneg %p469
    // Predicated region
    $region9: #{tpu_custom_call.1} parent=5 // pred_check
      _
    $region10: #{tpu_custom_call.1} parent=5 // pred_check_branch
      %472 = sbr.rel (%p469) target = $region12
    $region11: #{tpu_custom_call.1} parent=5 // pred_region
      %s473 = ssub.s32 %s29, 1
      // Predicated region
      $region13: #{tpu_custom_call.1} parent=11 // pred_check
        %p474 = pneg %p76
      $region14: #{tpu_custom_call.1} parent=11 // pred_check_branch
        %476 = sbr.rel (%p474) target = $region16
      $region15: #{tpu_custom_call.1} parent=11 // pred_region
        _
      $region16: #{tpu_custom_call.1} parent=11 // pred_fallthru
        _
      // Predicated region
      $region17: #{tpu_custom_call.1} parent=11 // pred_check
        %p477 = pneg %p97
      $region18: #{tpu_custom_call.1} parent=11 // pred_check_branch
        %479 = sbr.rel (%p477) target = $region20
      $region19: #{tpu_custom_call.1} parent=11 // pred_region
        _
      $region20: #{tpu_custom_call.1} parent=11 // pred_fallthru
        _
      // Predicated region
      $region21: #{tpu_custom_call.1} parent=11 // pred_check
        %p480 = pneg %p118
      $region22: #{tpu_custom_call.1} parent=11 // pred_check_branch
        %482 = sbr.rel (%p480) target = $region24
      $region23: #{tpu_custom_call.1} parent=11 // pred_region
        _
      $region24: #{tpu_custom_call.1} parent=11 // pred_fallthru
        _
      // Predicated region
      $region25: #{tpu_custom_call.1} parent=11 // pred_check
        %p483 = pneg %p139
      $region26: #{tpu_custom_call.1} parent=11 // pred_check_branch
        %485 = sbr.rel (%p483) target = $region28
      $region27: #{tpu_custom_call.1} parent=11 // pred_region
        _
      $region28: #{tpu_custom_call.1} parent=11 // pred_fallthru
        _
      // Predicated region
      $region29: #{tpu_custom_call.1} parent=11 // pred_check
        %p486 = pneg %p160
      $region30: #{tpu_custom_call.1} parent=11 // pred_check_branch
        %488 = sbr.rel (%p486) target = $region32
      $region31: #{tpu_custom_call.1} parent=11 // pred_region
        _
      $region32: #{tpu_custom_call.1} parent=11 // pred_fallthru
        _
      // Predicated region
      $region33: #{tpu_custom_call.1} parent=11 // pred_check
        %p489 = pneg %p181
      $region34: #{tpu_custom_call.1} parent=11 // pred_check_branch
        %491 = sbr.rel (%p489) target = $region36
      $region35: #{tpu_custom_call.1} parent=11 // pred_region
        _
      $region36: #{tpu_custom_call.1} parent=11 // pred_fallthru
        _
      // Predicated region
      $region37: #{tpu_custom_call.1} parent=11 // pred_check
        %p492 = pneg %p202
      $region38: #{tpu_custom_call.1} parent=11 // pred_check_branch
        %494 = sbr.rel (%p492) target = $region40
      $region39: #{tpu_custom_call.1} parent=11 // pred_region
        _
      $region40: #{tpu_custom_call.1} parent=11 // pred_fallthru
        _
      // Predicated region
      $region41: #{tpu_custom_call.1} parent=11 // pred_check
        %p495 = pneg %p223
      $region42: #{tpu_custom_call.1} parent=11 // pred_check_branch
        %497 = sbr.rel (%p495) target = $region44
      $region43: #{tpu_custom_call.1} parent=11 // pred_region
        _
      $region44: #{tpu_custom_call.1} parent=11 // pred_fallthru
        _
      // Predicated region
      $region45: #{tpu_custom_call.1} parent=11 // pred_check
        %p498 = pneg %p244
      $region46: #{tpu_custom_call.1} parent=11 // pred_check_branch
        %500 = sbr.rel (%p498) target = $region48
      $region47: #{tpu_custom_call.1} parent=11 // pred_region
        _
      $region48: #{tpu_custom_call.1} parent=11 // pred_fallthru
        _
      // Predicated region
      $region49: #{tpu_custom_call.1} parent=11 // pred_check
        %p501 = pneg %p265
      $region50: #{tpu_custom_call.1} parent=11 // pred_check_branch
        %503 = sbr.rel (%p501) target = $region52
      $region51: #{tpu_custom_call.1} parent=11 // pred_region
        _
      $region52: #{tpu_custom_call.1} parent=11 // pred_fallthru
        _
      // Predicated region
      $region53: #{tpu_custom_call.1} parent=11 // pred_check
        %p504 = pneg %p286
      $region54: #{tpu_custom_call.1} parent=11 // pred_check_branch
        %506 = sbr.rel (%p504) target = $region56
      $region55: #{tpu_custom_call.1} parent=11 // pred_region
        _
      $region56: #{tpu_custom_call.1} parent=11 // pred_fallthru
        _
      // Predicated region
      $region57: #{tpu_custom_call.1} parent=11 // pred_check
        %p507 = pneg %p307
      $region58: #{tpu_custom_call.1} parent=11 // pred_check_branch
        %509 = sbr.rel (%p507) target = $region60
      $region59: #{tpu_custom_call.1} parent=11 // pred_region
        _
      $region60: #{tpu_custom_call.1} parent=11 // pred_fallthru
        _
      // Predicated region
      $region61: #{tpu_custom_call.1} parent=11 // pred_check
        %p510 = pneg %p328
      $region62: #{tpu_custom_call.1} parent=11 // pred_check_branch
        %512 = sbr.rel (%p510) target = $region64
      $region63: #{tpu_custom_call.1} parent=11 // pred_region
        _
      $region64: #{tpu_custom_call.1} parent=11 // pred_fallthru
        _
      // Predicated region
      $region65: #{tpu_custom_call.1} parent=11 // pred_check
        %p513 = pneg %p349
      $region66: #{tpu_custom_call.1} parent=11 // pred_check_branch
        %515 = sbr.rel (%p513) target = $region68
      $region67: #{tpu_custom_call.1} parent=11 // pred_region
        _
      $region68: #{tpu_custom_call.1} parent=11 // pred_fallthru
        _
      // Predicated region
      $region69: #{tpu_custom_call.1} parent=11 // pred_check
        %p516 = pneg %p370
      $region70: #{tpu_custom_call.1} parent=11 // pred_check_branch
        %518 = sbr.rel (%p516) target = $region72
      $region71: #{tpu_custom_call.1} parent=11 // pred_region
        _
      $region72: #{tpu_custom_call.1} parent=11 // pred_fallthru
        _
      // Predicated region
      $region73: #{tpu_custom_call.1} parent=11 // pred_check
        %p519 = pneg %p391
      $region74: #{tpu_custom_call.1} parent=11 // pred_check_branch
        %521 = sbr.rel (%p519) target = $region76
      $region75: #{tpu_custom_call.1} parent=11 // pred_region
        _
      $region76: #{tpu_custom_call.1} parent=11 // pred_fallthru
        _
      // Predicated region
      $region77: #{tpu_custom_call.1} parent=11 // pred_check
        %p522 = pneg %p412
      $region78: #{tpu_custom_call.1} parent=11 // pred_check_branch
        %524 = sbr.rel (%p522) target = $region80
      $region79: #{tpu_custom_call.1} parent=11 // pred_region
        _
      $region80: #{tpu_custom_call.1} parent=11 // pred_fallthru
        _
      // Predicated region
      $region81: #{tpu_custom_call.1} parent=11 // pred_check
        %p525 = pneg %p433
      $region82: #{tpu_custom_call.1} parent=11 // pred_check_branch
        %527 = sbr.rel (%p525) target = $region84
      $region83: #{tpu_custom_call.1} parent=11 // pred_region
        _
      $region84: #{tpu_custom_call.1} parent=11 // pred_fallthru
        _
    $region12: #{tpu_custom_call.1} parent=5 // pred_fallthru
      _
    %p528 = scmp.lt.s32.totalorder %s29, 2
    // Predicated region
    $region85: #{tpu_custom_call.1} parent=5 // pred_check
      %p529 = pneg %p528
    $region86: #{tpu_custom_call.1} parent=5 // pred_check_branch
      %531 = sbr.rel (%p529) target = $region88
    $region87: #{tpu_custom_call.1} parent=5 // pred_region
      // Predicated region
      $region89: #{tpu_custom_call.1} parent=87 // pred_check
        %p532 = pneg %p49
      $region90: #{tpu_custom_call.1} parent=87 // pred_check_branch
        %534 = sbr.rel (%p532) target = $region92
      $region91: #{tpu_custom_call.1} parent=87 // pred_region
        %s535 = smul.u32 24, %s29
        %p536 = scmp.lt.s32.totalorder %s535, 47
        %s537 = scalar_select %p536, %s535, 47
        %s538 = smul.addr %s537, 8
        %s539 = scalar_lea.vmem %s0, %s538
        %s540 = smul.u32 24, %s29
      $region92: #{tpu_custom_call.1} parent=87 // pred_fallthru
        _
    $region88: #{tpu_custom_call.1} parent=5 // pred_fallthru
      _
    %p541 = scmp.le.s32.totalorder 1, %s29
    %p542 = scmp.lt.s32.totalorder %s29, 3
    %p543 = pnand %p541, %p542
    %p544 = pneg %p543
    // Predicated region
    $region93: #{tpu_custom_call.1} parent=5 // pred_check
      _
    $region94: #{tpu_custom_call.1} parent=5 // pred_check_branch
      %546 = sbr.rel (%p543) target = $region96
    $region95: #{tpu_custom_call.1} parent=5 // pred_region
      %s547 = ssub.s32 %s29, 1
      %s548 = smul.u32 24, %s34
      %p549 = scmp.lt.s32.totalorder %s548, 47
      %s550 = scalar_select %p549, %s548, 47
      %s551 = smul.addr %s550, 8
      %s552 = scalar_lea.vmem %s0, %s551
      %p553 = pneg %p55
      %p554 = pneg %p52
      %p555 = pneg %p76
      %p556 = pneg %p73
      %p557 = pneg %p97
      %p558 = pneg %p94
      %p559 = pneg %p118
      %p560 = pneg %p115
      %p561 = pneg %p139
      %p562 = pneg %p136
      %p563 = pneg %p160
      %p564 = pneg %p157
      %p565 = pneg %p181
      %p566 = pneg %p178
      %p567 = pneg %p202
      %p568 = pneg %p199
      %p569 = pneg %p223
      %p570 = pneg %p220
      %p571 = pneg %p244
      %p572 = pneg %p241
      %p573 = pneg %p265
      %p574 = pneg %p262
      %p575 = pneg %p286
      %p576 = pneg %p283
      %p577 = pneg %p307
      %p578 = pneg %p304
      %p579 = pneg %p328
      %p580 = pneg %p325
      %p581 = pneg %p349
      %p582 = pneg %p346
      %p583 = pneg %p370
      %p584 = pneg %p367
      %p585 = pneg %p391
      %p586 = pneg %p388
      %p587 = pneg %p412
      %p588 = pneg %p409
      %p589 = pneg %p433
      %p590 = pneg %p430
      %p591 = pneg %p459
      %p592 = pneg %p456
      %s593 = smul.u32 2, %s34
      %p594 = scmp.lt.s32.totalorder %s593, 3
      %s595 = scalar_select %p594, %s593, 3
      %s596 = smul.addr %s595, 8
      %s597 = scalar_lea.vmem %s19, %s596
      %s598 = smul.u32 24, %s34
      %p599 = scmp.lt.s32.totalorder %s598, 47
      %s600 = scalar_select %p599, %s598, 47
      %s601 = smul.addr %s600, 8
      %s602 = scalar_lea.vmem %s0, %s601
      %s603 = smul.u32 24, %s34
      %s604 = smul.u32 2, %s34
      %p605 = scmp.lt.s32.totalorder %s604, 3
      %s606 = scalar_select %p605, %s604, 3
      %s607 = smul.addr %s606, 8
      %s608 = scalar_lea.vmem %s19, %s607
      %s609 = smul.u32 2, %s34
      %v611 = vld [vmem:[%s1] sm:$0xff]
      %v612 = vld [vmem:[%s1 + $0x8] sm:$0xff]
      %v613 = vld [vmem:[%s1 + $0x10] sm:$0xff]
      %v614 = vld [vmem:[%s1 + $0x18] sm:$0xff]
      %v615 = vld [vmem:[%s1 + $0x20] sm:$0xff]
      %v616 = vld [vmem:[%s1 + $0x28] sm:$0xff]
      %v617 = vld [vmem:[%s1 + $0x30] sm:$0xff]
      %v618 = vld [vmem:[%s1 + $0x38] sm:$0xff]
      %v619 = vld [vmem:[%s1 + $0x40] sm:$0xff]
      %v620 = vld [vmem:[%s1 + $0x48] sm:$0xff]
      %v621 = vld [vmem:[%s1 + $0x50] sm:$0xff]
      %v622 = vld [vmem:[%s1 + $0x58] sm:$0xff]
      %v623 = vld [vmem:[%s1 + $0x60] sm:$0xff]
      %v624 = vld [vmem:[%s1 + $0x68] sm:$0xff]
      %v625 = vld [vmem:[%s1 + $0x70] sm:$0xff]
      %v626 = vld [vmem:[%s1 + $0x78] sm:$0xff]
      %v627 = vld [vmem:[%s1 + $0x80] sm:$0xff]
      %v628 = vld [vmem:[%s1 + $0x88] sm:$0xff]
      %v629 = vld [vmem:[%s1 + $0x90] sm:$0xff]
      %v630 = vld [vmem:[%s1 + $0x98] sm:$0xff]
      %v631 = vld [vmem:[%s1 + $0xa0] sm:$0xff]
      %v632 = vld [vmem:[%s1 + $0xa8] sm:$0xff]
      %v633 = vld [vmem:[%s1 + $0xb0] sm:$0xff]
      %v634 = vld [vmem:[%s1 + $0xb8] sm:$0xff]
      %v635 = vld [vmem:[%s1 + $0xc0] sm:$0xff]
      %v636 = vld [vmem:[%s1 + $0xc8] sm:$0xff]
      %v637 = vld [vmem:[%s1 + $0xd0] sm:$0xff]
      %v638 = vld [vmem:[%s1 + $0xd8] sm:$0xff]
      %v639 = vld [vmem:[%s1 + $0xe0] sm:$0xff]
      %v640 = vld [vmem:[%s1 + $0xe8] sm:$0xff]
      %v641 = vld [vmem:[%s1 + $0xf0] sm:$0xff]
      %v642 = vld [vmem:[%s1 + $0xf8] sm:$0xff]
      %v643 = vld [vmem:[%s602] sm:$0xff]
      %v644 = vld [vmem:[%s602 + $0x8] sm:$0xff]
      %v645 = vld [vmem:[%s602 + $0x10] sm:$0xff]
      %v646 = vld [vmem:[%s602 + $0x18] sm:$0xff]
      %v647 = vld [vmem:[%s602 + $0x20] sm:$0xff]
      %v648 = vld [vmem:[%s602 + $0x28] sm:$0xff]
      %v649 = vld [vmem:[%s602 + $0x30] sm:$0xff]
      %v650 = vld [vmem:[%s602 + $0x38] sm:$0xff]
      %v651 = vld [vmem:[%s602 + $0x40] sm:$0xff]
      %v652 = vld [vmem:[%s602 + $0x48] sm:$0xff]
      %v653 = vld [vmem:[%s602 + $0x50] sm:$0xff]
      %v654 = vld [vmem:[%s602 + $0x58] sm:$0xff]
      %v655 = vld [vmem:[%s602 + $0x60] sm:$0xff]
      %v656 = vld [vmem:[%s602 + $0x68] sm:$0xff]
      %v657 = vld [vmem:[%s602 + $0x70] sm:$0xff]
      %v658 = vld [vmem:[%s602 + $0x78] sm:$0xff]
      %v659 = vld [vmem:[%s602 + $0x80] sm:$0xff]
      %v660 = vld [vmem:[%s602 + $0x88] sm:$0xff]
      %v661 = vld [vmem:[%s602 + $0x90] sm:$0xff]
      %v662 = vld [vmem:[%s602 + $0x98] sm:$0xff]
      %v663 = vld [vmem:[%s602 + $0xa0] sm:$0xff]
      %v664 = vld [vmem:[%s602 + $0xa8] sm:$0xff]
      %v665 = vld [vmem:[%s602 + $0xb0] sm:$0xff]
      %v666 = vld [vmem:[%s602 + $0xb8] sm:$0xff]
      %v667 = vpack.c.bf16 %v644, %v643
      %v668 = vpack.c.bf16 %v646, %v645
      %v669 = vpack.c.bf16 %v648, %v647
      %v670 = vpack.c.bf16 %v650, %v649
      %v671 = vpack.c.bf16 %v652, %v651
      %v672 = vpack.c.bf16 %v654, %v653
      %v673 = vpack.c.bf16 %v656, %v655
      %v674 = vpack.c.bf16 %v658, %v657
      %v675 = vpack.c.bf16 %v660, %v659
      %v676 = vpack.c.bf16 %v662, %v661
      %v677 = vpack.c.bf16 %v664, %v663
      %v678 = vpack.c.bf16 %v666, %v665
      %v679 = vld [vmem:[%s2] sm:$0xff]
      %v680 = vld [vmem:[%s2 + $0x8] sm:$0xff]
      %v681 = vld [vmem:[%s2 + $0x10] sm:$0xff]
      %v682 = vld [vmem:[%s2 + $0x18] sm:$0xff]
      %v683 = vld [vmem:[%s2 + $0x20] sm:$0xff]
      %v684 = vld [vmem:[%s2 + $0x28] sm:$0xff]
      %v685 = vld [vmem:[%s2 + $0x30] sm:$0xff]
      %v686 = vld [vmem:[%s2 + $0x38] sm:$0xff]
      %v687 = vld [vmem:[%s2 + $0x40] sm:$0xff]
      %v688 = vld [vmem:[%s2 + $0x48] sm:$0xff]
      %v689 = vld [vmem:[%s2 + $0x50] sm:$0xff]
      %v690 = vld [vmem:[%s2 + $0x58] sm:$0xff]
      %v691 = vld [vmem:[%s2 + $0x60] sm:$0xff]
      %v692 = vld [vmem:[%s2 + $0x68] sm:$0xff]
      %v693 = vld [vmem:[%s2 + $0x70] sm:$0xff]
      %v694 = vld [vmem:[%s2 + $0x78] sm:$0xff]
      %v695 = vld [vmem:[%s2 + $0x80] sm:$0xff]
      %v696 = vld [vmem:[%s2 + $0x88] sm:$0xff]
      %v697 = vld [vmem:[%s2 + $0x90] sm:$0xff]
      %v698 = vld [vmem:[%s2 + $0x98] sm:$0xff]
      %v699 = vld [vmem:[%s2 + $0xa0] sm:$0xff]
      %v700 = vld [vmem:[%s2 + $0xa8] sm:$0xff]
      %v701 = vld [vmem:[%s2 + $0xb0] sm:$0xff]
      %v702 = vld [vmem:[%s2 + $0xb8] sm:$0xff]
      %v703 = vld [vmem:[%s2 + $0xc0] sm:$0xff]
      %v704 = vld [vmem:[%s2 + $0xc8] sm:$0xff]
      %v705 = vld [vmem:[%s2 + $0xd0] sm:$0xff]
      %v706 = vld [vmem:[%s2 + $0xd8] sm:$0xff]
      %v707 = vld [vmem:[%s2 + $0xe0] sm:$0xff]
      %v708 = vld [vmem:[%s2 + $0xe8] sm:$0xff]
      %v709 = vld [vmem:[%s2 + $0xf0] sm:$0xff]
      %v710 = vld [vmem:[%s2 + $0xf8] sm:$0xff]
      %v743 = vunpack.c.l.b16 %v611
      %v744 = vunpack.c.h.b16 %v611
      %v745 = vunpack.c.l.b16 %v612
      %v746 = vunpack.c.h.b16 %v612
      %v747 = vunpack.c.l.b16 %v613
      %v748 = vunpack.c.h.b16 %v613
      %v749 = vunpack.c.l.b16 %v614
      %v750 = vunpack.c.h.b16 %v614
      %v751 = vunpack.c.l.b16 %v615
      %v752 = vunpack.c.h.b16 %v615
      %v753 = vunpack.c.l.b16 %v616
      %v754 = vunpack.c.h.b16 %v616
      %v755 = vunpack.c.l.b16 %v617
      %v756 = vunpack.c.h.b16 %v617
      %v757 = vunpack.c.l.b16 %v618
      %v758 = vunpack.c.h.b16 %v618
      %v759 = vunpack.c.l.b16 %v619
      %v760 = vunpack.c.h.b16 %v619
      %v761 = vunpack.c.l.b16 %v620
      %v762 = vunpack.c.h.b16 %v620
      %v763 = vunpack.c.l.b16 %v621
      %v764 = vunpack.c.h.b16 %v621
      %v765 = vunpack.c.l.b16 %v622
      %v766 = vunpack.c.h.b16 %v622
      %v767 = vunpack.c.l.b16 %v623
      %v768 = vunpack.c.h.b16 %v623
      %v769 = vunpack.c.l.b16 %v624
      %v770 = vunpack.c.h.b16 %v624
      %v771 = vunpack.c.l.b16 %v625
      %v772 = vunpack.c.h.b16 %v625
      %v773 = vunpack.c.l.b16 %v626
      %v774 = vunpack.c.h.b16 %v626
      %v775 = vunpack.c.l.b16 %v627
      %v776 = vunpack.c.h.b16 %v627
      %v777 = vunpack.c.l.b16 %v628
      %v778 = vunpack.c.h.b16 %v628
      %v779 = vunpack.c.l.b16 %v629
      %v780 = vunpack.c.h.b16 %v629
      %v781 = vunpack.c.l.b16 %v630
      %v782 = vunpack.c.h.b16 %v630
      %v783 = vunpack.c.l.b16 %v631
      %v784 = vunpack.c.h.b16 %v631
      %v785 = vunpack.c.l.b16 %v632
      %v786 = vunpack.c.h.b16 %v632
      %v787 = vunpack.c.l.b16 %v633
      %v788 = vunpack.c.h.b16 %v633
      %v789 = vunpack.c.l.b16 %v634
      %v790 = vunpack.c.h.b16 %v634
      %v791 = vunpack.c.l.b16 %v635
      %v792 = vunpack.c.h.b16 %v635
      %v793 = vunpack.c.l.b16 %v636
      %v794 = vunpack.c.h.b16 %v636
      %v795 = vunpack.c.l.b16 %v637
      %v796 = vunpack.c.h.b16 %v637
      %v797 = vunpack.c.l.b16 %v638
      %v798 = vunpack.c.h.b16 %v638
      %v799 = vunpack.c.l.b16 %v639
      %v800 = vunpack.c.h.b16 %v639
      %v801 = vunpack.c.l.b16 %v640
      %v802 = vunpack.c.h.b16 %v640
      %v803 = vunpack.c.l.b16 %v641
      %v804 = vunpack.c.h.b16 %v641
      %v805 = vunpack.c.l.b16 %v642
      %v806 = vunpack.c.h.b16 %v642
      %v807 = vpack.c.b16 %v745, %v743
      %v808 = vpack.c.b16 %v746, %v744
      %v809 = vpack.c.b16 %v749, %v747
      %v810 = vpack.c.b16 %v750, %v748
      %v811 = vpack.c.b16 %v753, %v751
      %v812 = vpack.c.b16 %v754, %v752
      %v813 = vpack.c.b16 %v757, %v755
      %v814 = vpack.c.b16 %v758, %v756
      %v815 = vpack.c.b16 %v761, %v759
      %v816 = vpack.c.b16 %v762, %v760
      %v817 = vpack.c.b16 %v765, %v763
      %v818 = vpack.c.b16 %v766, %v764
      %v819 = vpack.c.b16 %v769, %v767
      %v820 = vpack.c.b16 %v770, %v768
      %v821 = vpack.c.b16 %v773, %v771
      %v822 = vpack.c.b16 %v774, %v772
      %v823 = vpack.c.b16 %v777, %v775
      %v824 = vpack.c.b16 %v778, %v776
      %v825 = vpack.c.b16 %v781, %v779
      %v826 = vpack.c.b16 %v782, %v780
      %v827 = vpack.c.b16 %v785, %v783
      %v828 = vpack.c.b16 %v786, %v784
      %v829 = vpack.c.b16 %v789, %v787
      %v830 = vpack.c.b16 %v790, %v788
      %v831 = vpack.c.b16 %v793, %v791
      %v832 = vpack.c.b16 %v794, %v792
      %v833 = vpack.c.b16 %v797, %v795
      %v834 = vpack.c.b16 %v798, %v796
      %v835 = vpack.c.b16 %v801, %v799
      %v836 = vpack.c.b16 %v802, %v800
      %v837 = vpack.c.b16 %v805, %v803
      %v838 = vpack.c.b16 %v806, %v804
      %vm855 = vcmask 523264
      %v857 = vsel %vm855, %v808, 0
      %v860 = vsel %vm855, %v810, 0
      %v863 = vsel %vm855, %v812, 0
      %v866 = vsel %vm855, %v814, 0
      %v869 = vsel %vm855, %v816, 0
      %v872 = vsel %vm855, %v818, 0
      %v875 = vsel %vm855, %v820, 0
      %v878 = vsel %vm855, %v822, 0
      %v881 = vsel %vm855, %v824, 0
      %v884 = vsel %vm855, %v826, 0
      %v887 = vsel %vm855, %v828, 0
      %v890 = vsel %vm855, %v830, 0
      %v893 = vsel %vm855, %v832, 0
      %v896 = vsel %vm855, %v834, 0
      %v899 = vsel %vm855, %v836, 0
      %v902 = vsel %vm855, %v838, 0
      %904 = vmatprep.subr.bf16.mxu0 0
      %905 = vmatpush1.bf16.msra.mxu0 %v667
      %906 = vmatprep.subr.bf16.mxu0 0
      %907 = vmatpush1.bf16.msra.mxu0 %v668
      %908 = vmatprep.subr.bf16.mxu0 0
      %909 = vmatpush1.bf16.msra.mxu0 %v669
      %910 = vmatprep.subr.bf16.mxu0 0
      %911 = vmatpush1.bf16.msra.mxu0 %v670
      %912 = vmatprep.subr.bf16.mxu0 0
      %913 = vmatpush1.bf16.msra.mxu0 %v671
      %914 = vmatprep.subr.bf16.mxu0 0
      %915 = vmatpush1.bf16.msra.mxu0 %v672
      %916 = vmatprep.subr.bf16.mxu0 0
      %917 = vmatpush1.bf16.msra.mxu0 %v673
      %918 = vmatprep.subr.bf16.mxu0 0
      %919 = vmatpush1.bf16.msra.mxu0 %v674
      %920 = vmatprep.subr.bf16.mxu0 0
      %921 = vmatpush1.bf16.msra.mxu0 %v675
      %922 = vmatprep.subr.bf16.mxu0 0
      %923 = vmatpush1.bf16.msra.mxu0 %v676
      %924 = vmatprep.subr.bf16.mxu0 0
      %925 = vmatpush1.bf16.msra.mxu0 %v677
      %926 = vmatprep.subr.bf16.mxu0 0
      %927 = vmatpush1.bf16.msra.mxu0 %v678
      %928 = vmatprep.subr.bf16.mxu0 0
      %929 = vmatpush1.bf16.msra.mxu0 0
      %930 = vmatprep.subr.bf16.mxu0 0
      %931 = vmatpush1.bf16.msra.mxu0 0
      %932 = vmatprep.subr.bf16.mxu0 0
      %933 = vmatpush1.bf16.msra.mxu0 0
      %934 = vmatprep.subr.bf16.mxu0 0
      %935 = vmatpush1.bf16.msra.mxu0 0
      %936 = vmatprep.mubr.bf16.mxu0 %v857
      %937 = vmatmul.mubr.bf16.gmra.mrb[0].mxu0 %v807
      %v938 = vpop.f32.mrb[0].mxu0
      %v939 = vadd.f32 %v679, %v938
      %v940 = vpop.f32.mrb[0].mxu0
      %v941 = vpop.f32.mrb[0].mxu0
      %v942 = vadd.f32 %v680, %v941
      %v943 = vpop.f32.mrb[0].mxu0
      %944 = vmatprep.mubr.bf16.mxu0 %v860
      %945 = vmatmul.mubr.bf16.gmra.mrb[0].mxu0 %v809
      %v946 = vpop.f32.mrb[0].mxu0
      %v947 = vadd.f32 %v681, %v946
      %v948 = vpop.f32.mrb[0].mxu0
      %v949 = vpop.f32.mrb[0].mxu0
      %v950 = vadd.f32 %v682, %v949
      %v951 = vpop.f32.mrb[0].mxu0
      %952 = vmatprep.mubr.bf16.mxu0 %v863
      %953 = vmatmul.mubr.bf16.gmra.mrb[0].mxu0 %v811
      %v954 = vpop.f32.mrb[0].mxu0
      %v955 = vadd.f32 %v683, %v954
      %v956 = vpop.f32.mrb[0].mxu0
      %v957 = vpop.f32.mrb[0].mxu0
      %v958 = vadd.f32 %v684, %v957
      %v959 = vpop.f32.mrb[0].mxu0
      %960 = vmatprep.mubr.bf16.mxu0 %v866
      %961 = vmatmul.mubr.bf16.gmra.mrb[0].mxu0 %v813
      %v962 = vpop.f32.mrb[0].mxu0
      %v963 = vadd.f32 %v685, %v962
      %v964 = vpop.f32.mrb[0].mxu0
      %v965 = vpop.f32.mrb[0].mxu0
      %v966 = vadd.f32 %v686, %v965
      %v967 = vpop.f32.mrb[0].mxu0
      %968 = vmatprep.mubr.bf16.mxu0 %v869
      %969 = vmatmul.mubr.bf16.gmra.mrb[0].mxu0 %v815
      %v970 = vpop.f32.mrb[0].mxu0
      %v971 = vadd.f32 %v687, %v970
      %v972 = vpop.f32.mrb[0].mxu0
      %v973 = vpop.f32.mrb[0].mxu0
      %v974 = vadd.f32 %v688, %v973
      %v975 = vpop.f32.mrb[0].mxu0
      %976 = vmatprep.mubr.bf16.mxu0 %v872
      %977 = vmatmul.mubr.bf16.gmra.mrb[0].mxu0 %v817
      %v978 = vpop.f32.mrb[0].mxu0
      %v979 = vadd.f32 %v689, %v978
      %v980 = vpop.f32.mrb[0].mxu0
      %v981 = vpop.f32.mrb[0].mxu0
      %v982 = vadd.f32 %v690, %v981
      %v983 = vpop.f32.mrb[0].mxu0
      %984 = vmatprep.mubr.bf16.mxu0 %v875
      %985 = vmatmul.mubr.bf16.gmra.mrb[0].mxu0 %v819
      %v986 = vpop.f32.mrb[0].mxu0
      %v987 = vadd.f32 %v691, %v986
      %v988 = vpop.f32.mrb[0].mxu0
      %v989 = vpop.f32.mrb[0].mxu0
      %v990 = vadd.f32 %v692, %v989
      %v991 = vpop.f32.mrb[0].mxu0
      %992 = vmatprep.mubr.bf16.mxu0 %v878
      %993 = vmatmul.mubr.bf16.gmra.mrb[0].mxu0 %v821
      %v994 = vpop.f32.mrb[0].mxu0
      %v995 = vadd.f32 %v693, %v994
      %v996 = vpop.f32.mrb[0].mxu0
      %v997 = vpop.f32.mrb[0].mxu0
      %v998 = vadd.f32 %v694, %v997
      %v999 = vpop.f32.mrb[0].mxu0
      %1000 = vmatprep.mubr.bf16.mxu0 %v881
      %1001 = vmatmul.mubr.bf16.gmra.mrb[0].mxu0 %v823
      %v1002 = vpop.f32.mrb[0].mxu0
      %v1003 = vadd.f32 %v695, %v1002
      %v1004 = vpop.f32.mrb[0].mxu0
      %v1005 = vpop.f32.mrb[0].mxu0
      %v1006 = vadd.f32 %v696, %v1005
      %v1007 = vpop.f32.mrb[0].mxu0
      %1008 = vmatprep.mubr.bf16.mxu0 %v884
      %1009 = vmatmul.mubr.bf16.gmra.mrb[0].mxu0 %v825
      %v1010 = vpop.f32.mrb[0].mxu0
      %v1011 = vadd.f32 %v697, %v1010
      %v1012 = vpop.f32.mrb[0].mxu0
      %v1013 = vpop.f32.mrb[0].mxu0
      %v1014 = vadd.f32 %v698, %v1013
      %v1015 = vpop.f32.mrb[0].mxu0
      %1016 = vmatprep.mubr.bf16.mxu0 %v887
      %1017 = vmatmul.mubr.bf16.gmra.mrb[0].mxu0 %v827
      %v1018 = vpop.f32.mrb[0].mxu0
      %v1019 = vadd.f32 %v699, %v1018
      %v1020 = vpop.f32.mrb[0].mxu0
      %v1021 = vpop.f32.mrb[0].mxu0
      %v1022 = vadd.f32 %v700, %v1021
      %v1023 = vpop.f32.mrb[0].mxu0
      %1024 = vmatprep.mubr.bf16.mxu0 %v890
      %1025 = vmatmul.mubr.bf16.gmra.mrb[0].mxu0 %v829
      %v1026 = vpop.f32.mrb[0].mxu0
      %v1027 = vadd.f32 %v701, %v1026
      %v1028 = vpop.f32.mrb[0].mxu0
      %v1029 = vpop.f32.mrb[0].mxu0
      %v1030 = vadd.f32 %v702, %v1029
      %v1031 = vpop.f32.mrb[0].mxu0
      %1032 = vmatprep.mubr.bf16.mxu0 %v893
      %1033 = vmatmul.mubr.bf16.gmra.mrb[0].mxu0 %v831
      %v1034 = vpop.f32.mrb[0].mxu0
      %v1035 = vadd.f32 %v703, %v1034
      %v1036 = vpop.f32.mrb[0].mxu0
      %v1037 = vpop.f32.mrb[0].mxu0
      %v1038 = vadd.f32 %v704, %v1037
      %v1039 = vpop.f32.mrb[0].mxu0
      %1040 = vmatprep.mubr.bf16.mxu0 %v896
      %1041 = vmatmul.mubr.bf16.gmra.mrb[0].mxu0 %v833
      %v1042 = vpop.f32.mrb[0].mxu0
      %v1043 = vadd.f32 %v705, %v1042
      %v1044 = vpop.f32.mrb[0].mxu0
      %v1045 = vpop.f32.mrb[0].mxu0
      %v1046 = vadd.f32 %v706, %v1045
      %v1047 = vpop.f32.mrb[0].mxu0
      %1048 = vmatprep.mubr.bf16.mxu0 %v899
      %1049 = vmatmul.mubr.bf16.gmra.mrb[0].mxu0 %v835
      %v1050 = vpop.f32.mrb[0].mxu0
      %v1051 = vadd.f32 %v707, %v1050
      %v1052 = vpop.f32.mrb[0].mxu0
      %v1053 = vpop.f32.mrb[0].mxu0
      %v1054 = vadd.f32 %v708, %v1053
      %v1055 = vpop.f32.mrb[0].mxu0
      %1056 = vmatprep.mubr.bf16.mxu0 %v902
      %1057 = vmatmul.mubr.bf16.gmra.mrb[0].mxu0 %v837
      %v1058 = vpop.f32.mrb[0].mxu0
      %v1059 = vadd.f32 %v709, %v1058
      %v1060 = vpop.f32.mrb[0].mxu0
      %v1061 = vpop.f32.mrb[0].mxu0
      %v1062 = vadd.f32 %v710, %v1061
      %v1063 = vpop.f32.mrb[0].mxu0
      %1064 = vdwg.mxu0
      %v1065 = vld [vmem:[%s3] sm:$0xf]
      %v1066 = vld [vmem:[%s3 + $0x4] sm:$0xf]
      %v1067 = vpack.c.bf16 %v942, %v939
      %v1068 = vpack.c.bf16 %v950, %v947
      %v1069 = vpack.c.bf16 %v958, %v955
      %v1070 = vpack.c.bf16 %v966, %v963
      %v1071 = vpack.c.bf16 %v974, %v971
      %v1072 = vpack.c.bf16 %v982, %v979
      %v1073 = vpack.c.bf16 %v990, %v987
      %v1074 = vpack.c.bf16 %v998, %v995
      %v1075 = vpack.c.bf16 %v1006, %v1003
      %v1076 = vpack.c.bf16 %v1014, %v1011
      %v1077 = vpack.c.bf16 %v1022, %v1019
      %v1078 = vpack.c.bf16 %v1030, %v1027
      %v1079 = vpack.c.bf16 %v1038, %v1035
      %v1080 = vpack.c.bf16 %v1046, %v1043
      %v1081 = vpack.c.bf16 %v1054, %v1051
      %v1082 = vpack.c.bf16 %v1062, %v1059
      %v1085 = vunpack.c.l.b16 %v1065
      %v1086 = vunpack.c.l.b16 %v1066
      %v1087 = vpack.c.b16 %v1086, %v1085
      %vm1089 = vcmask 130048
      %v1091 = vsel %vm1089, %v1067, 0
      %v1094 = vsel %vm1089, %v1068, 0
      %v1097 = vsel %vm1089, %v1069, 0
      %v1100 = vsel %vm1089, %v1070, 0
      %v1103 = vsel %vm1089, %v1071, 0
      %v1106 = vsel %vm1089, %v1072, 0
      %v1109 = vsel %vm1089, %v1073, 0
      %v1112 = vsel %vm1089, %v1074, 0
      %v1115 = vsel %vm1089, %v1075, 0
      %v1118 = vsel %vm1089, %v1076, 0
      %v1121 = vsel %vm1089, %v1077, 0
      %v1124 = vsel %vm1089, %v1078, 0
      %v1127 = vsel %vm1089, %v1079, 0
      %v1130 = vsel %vm1089, %v1080, 0
      %v1133 = vsel %vm1089, %v1081, 0
      %v1136 = vsel %vm1089, %v1082, 0
      %1138 = vmatprep.subr.bf16.mxu0 0
      %1139 = vmatpush1.bf16.msra.mxu0 %v1087
      %1140 = vmatprep.subr.bf16.mxu0 0
      %1141 = vmatpush1.bf16.msra.mxu0 0
      %1142 = vmatprep.subr.bf16.mxu0 0
      %1143 = vmatpush1.bf16.msra.mxu0 0
      %1144 = vmatprep.subr.bf16.mxu0 0
      %1145 = vmatpush1.bf16.msra.mxu0 0
      %1146 = vmatprep.subr.bf16.mxu0 0
      %1147 = vmatpush1.bf16.msra.mxu0 0
      %1148 = vmatprep.subr.bf16.mxu0 0
      %1149 = vmatpush1.bf16.msra.mxu0 0
      %1150 = vmatprep.subr.bf16.mxu0 0
      %1151 = vmatpush1.bf16.msra.mxu0 0
      %1152 = vmatprep.subr.bf16.mxu0 0
      %1153 = vmatpush1.bf16.msra.mxu0 0
      %1154 = vmatprep.subr.bf16.mxu0 0
      %1155 = vmatpush1.bf16.msra.mxu0 0
      %1156 = vmatprep.subr.bf16.mxu0 0
      %1157 = vmatpush1.bf16.msra.mxu0 0
      %1158 = vmatprep.subr.bf16.mxu0 0
      %1159 = vmatpush1.bf16.msra.mxu0 0
      %1160 = vmatprep.subr.bf16.mxu0 0
      %1161 = vmatpush1.bf16.msra.mxu0 0
      %1162 = vmatprep.subr.bf16.mxu0 0
      %1163 = vmatpush1.bf16.msra.mxu0 0
      %1164 = vmatprep.subr.bf16.mxu0 0
      %1165 = vmatpush1.bf16.msra.mxu0 0
      %1166 = vmatprep.subr.bf16.mxu0 0
      %1167 = vmatpush1.bf16.msra.mxu0 0
      %1168 = vmatprep.subr.bf16.mxu0 0
      %1169 = vmatpush1.bf16.msra.mxu0 0
      %1170 = vmatprep.mubr.bf16.mxu0 0
      %1171 = vmatmul.mubr.bf16.gmra.mrb[0].mxu0 %v1091
      %v1172 = vpop.f32.mrb[0].mxu0
      %v1173 = vadd.f32 0.0, %v1172
      %v1174 = vpop.f32.mrb[0].mxu0
      %v1175 = vpop.f32.mrb[0].mxu0
      %v1176 = vadd.f32 0.0, %v1175
      %v1177 = vpop.f32.mrb[0].mxu0
      %1178 = vmatprep.mubr.bf16.mxu0 0
      %1179 = vmatmul.mubr.bf16.gmra.mrb[0].mxu0 %v1094
      %v1180 = vpop.f32.mrb[0].mxu0
      %v1181 = vadd.f32 0.0, %v1180
      %v1182 = vpop.f32.mrb[0].mxu0
      %v1183 = vpop.f32.mrb[0].mxu0
      %v1184 = vadd.f32 0.0, %v1183
      %v1185 = vpop.f32.mrb[0].mxu0
      %1186 = vmatprep.mubr.bf16.mxu0 0
      %1187 = vmatmul.mubr.bf16.gmra.mrb[0].mxu0 %v1097
      %v1188 = vpop.f32.mrb[0].mxu0
      %v1189 = vadd.f32 0.0, %v1188
      %v1190 = vpop.f32.mrb[0].mxu0
      %v1191 = vpop.f32.mrb[0].mxu0
      %v1192 = vadd.f32 0.0, %v1191
      %v1193 = vpop.f32.mrb[0].mxu0
      %1194 = vmatprep.mubr.bf16.mxu0 0
      %1195 = vmatmul.mubr.bf16.gmra.mrb[0].mxu0 %v1100
      %v1196 = vpop.f32.mrb[0].mxu0
      %v1197 = vadd.f32 0.0, %v1196
      %v1198 = vpop.f32.mrb[0].mxu0
      %v1199 = vpop.f32.mrb[0].mxu0
      %v1200 = vadd.f32 0.0, %v1199
      %v1201 = vpop.f32.mrb[0].mxu0
      %1202 = vmatprep.mubr.bf16.mxu0 0
      %1203 = vmatmul.mubr.bf16.gmra.mrb[0].mxu0 %v1103
      %v1204 = vpop.f32.mrb[0].mxu0
      %v1205 = vadd.f32 0.0, %v1204
      %v1206 = vpop.f32.mrb[0].mxu0
      %v1207 = vpop.f32.mrb[0].mxu0
      %v1208 = vadd.f32 0.0, %v1207
      %v1209 = vpop.f32.mrb[0].mxu0
      %1210 = vmatprep.mubr.bf16.mxu0 0
      %1211 = vmatmul.mubr.bf16.gmra.mrb[0].mxu0 %v1106
      %v1212 = vpop.f32.mrb[0].mxu0
      %v1213 = vadd.f32 0.0, %v1212
      %v1214 = vpop.f32.mrb[0].mxu0
      %v1215 = vpop.f32.mrb[0].mxu0
      %v1216 = vadd.f32 0.0, %v1215
      %v1217 = vpop.f32.mrb[0].mxu0
      %1218 = vmatprep.mubr.bf16.mxu0 0
      %1219 = vmatmul.mubr.bf16.gmra.mrb[0].mxu0 %v1109
      %v1220 = vpop.f32.mrb[0].mxu0
      %v1221 = vadd.f32 0.0, %v1220
      %v1222 = vpop.f32.mrb[0].mxu0
      %v1223 = vpop.f32.mrb[0].mxu0
      %v1224 = vadd.f32 0.0, %v1223
      %v1225 = vpop.f32.mrb[0].mxu0
      %1226 = vmatprep.mubr.bf16.mxu0 0
      %1227 = vmatmul.mubr.bf16.gmra.mrb[0].mxu0 %v1112
      %v1228 = vpop.f32.mrb[0].mxu0
      %v1229 = vadd.f32 0.0, %v1228
      %v1230 = vpop.f32.mrb[0].mxu0
      %v1231 = vpop.f32.mrb[0].mxu0
      %v1232 = vadd.f32 0.0, %v1231
      %v1233 = vpop.f32.mrb[0].mxu0
      %1234 = vmatprep.mubr.bf16.mxu0 0
      %1235 = vmatmul.mubr.bf16.gmra.mrb[0].mxu0 %v1115
      %v1236 = vpop.f32.mrb[0].mxu0
      %v1237 = vadd.f32 0.0, %v1236
      %v1238 = vpop.f32.mrb[0].mxu0
      %v1239 = vpop.f32.mrb[0].mxu0
      %v1240 = vadd.f32 0.0, %v1239
      %v1241 = vpop.f32.mrb[0].mxu0
      %1242 = vmatprep.mubr.bf16.mxu0 0
      %1243 = vmatmul.mubr.bf16.gmra.mrb[0].mxu0 %v1118
      %v1244 = vpop.f32.mrb[0].mxu0
      %v1245 = vadd.f32 0.0, %v1244
      %v1246 = vpop.f32.mrb[0].mxu0
      %v1247 = vpop.f32.mrb[0].mxu0
      %v1248 = vadd.f32 0.0, %v1247
      %v1249 = vpop.f32.mrb[0].mxu0
      %1250 = vmatprep.mubr.bf16.mxu0 0
      %1251 = vmatmul.mubr.bf16.gmra.mrb[0].mxu0 %v1121
      %v1252 = vpop.f32.mrb[0].mxu0
      %v1253 = vadd.f32 0.0, %v1252
      %v1254 = vpop.f32.mrb[0].mxu0
      %v1255 = vpop.f32.mrb[0].mxu0
      %v1256 = vadd.f32 0.0, %v1255
      %v1257 = vpop.f32.mrb[0].mxu0
      %1258 = vmatprep.mubr.bf16.mxu0 0
      %1259 = vmatmul.mubr.bf16.gmra.mrb[0].mxu0 %v1124
      %v1260 = vpop.f32.mrb[0].mxu0
      %v1261 = vadd.f32 0.0, %v1260
      %v1262 = vpop.f32.mrb[0].mxu0
      %v1263 = vpop.f32.mrb[0].mxu0
      %v1264 = vadd.f32 0.0, %v1263
      %v1265 = vpop.f32.mrb[0].mxu0
      %1266 = vmatprep.mubr.bf16.mxu0 0
      %1267 = vmatmul.mubr.bf16.gmra.mrb[0].mxu0 %v1127
      %v1268 = vpop.f32.mrb[0].mxu0
      %v1269 = vadd.f32 0.0, %v1268
      %v1270 = vpop.f32.mrb[0].mxu0
      %v1271 = vpop.f32.mrb[0].mxu0
      %v1272 = vadd.f32 0.0, %v1271
      %v1273 = vpop.f32.mrb[0].mxu0
      %1274 = vmatprep.mubr.bf16.mxu0 0
      %1275 = vmatmul.mubr.bf16.gmra.mrb[0].mxu0 %v1130
      %v1276 = vpop.f32.mrb[0].mxu0
      %v1277 = vadd.f32 0.0, %v1276
      %v1278 = vpop.f32.mrb[0].mxu0
      %v1279 = vpop.f32.mrb[0].mxu0
      %v1280 = vadd.f32 0.0, %v1279
      %v1281 = vpop.f32.mrb[0].mxu0
      %1282 = vmatprep.mubr.bf16.mxu0 0
      %1283 = vmatmul.mubr.bf16.gmra.mrb[0].mxu0 %v1133
      %v1284 = vpop.f32.mrb[0].mxu0
      %v1285 = vadd.f32 0.0, %v1284
      %v1286 = vpop.f32.mrb[0].mxu0
      %v1287 = vpop.f32.mrb[0].mxu0
      %v1288 = vadd.f32 0.0, %v1287
      %v1289 = vpop.f32.mrb[0].mxu0
      %1290 = vmatprep.mubr.bf16.mxu0 0
      %1291 = vmatmul.mubr.bf16.gmra.mrb[0].mxu0 %v1136
      %v1292 = vpop.f32.mrb[0].mxu0
      %v1293 = vadd.f32 0.0, %v1292
      %v1294 = vpop.f32.mrb[0].mxu0
      %v1295 = vpop.f32.mrb[0].mxu0
      %v1296 = vadd.f32 0.0, %v1295
      %v1297 = vpop.f32.mrb[0].mxu0
      %1298 = vdwg.mxu0
      %v1299 = vld [vmem:[%s4] sm:$0xf]
      %v1300 = vld [vmem:[%s4 + $0x4] sm:$0xf]
      %v1303 = vunpack.c.l.b16 %v1299
      %v1304 = vunpack.c.l.b16 %v1300
      %v1305 = vpack.c.b16 %v1304, %v1303
      %1307 = vmatprep.subr.bf16.mxu0 0
      %1308 = vmatpush1.bf16.msra.mxu0 %v1305
      %1309 = vmatprep.subr.bf16.mxu0 0
      %1310 = vmatpush1.bf16.msra.mxu0 0
      %1311 = vmatprep.subr.bf16.mxu0 0
      %1312 = vmatpush1.bf16.msra.mxu0 0
      %1313 = vmatprep.subr.bf16.mxu0 0
      %1314 = vmatpush1.bf16.msra.mxu0 0
      %1315 = vmatprep.subr.bf16.mxu0 0
      %1316 = vmatpush1.bf16.msra.mxu0 0
      %1317 = vmatprep.subr.bf16.mxu0 0
      %1318 = vmatpush1.bf16.msra.mxu0 0
      %1319 = vmatprep.subr.bf16.mxu0 0
      %1320 = vmatpush1.bf16.msra.mxu0 0
      %1321 = vmatprep.subr.bf16.mxu0 0
      %1322 = vmatpush1.bf16.msra.mxu0 0
      %1323 = vmatprep.subr.bf16.mxu0 0
      %1324 = vmatpush1.bf16.msra.mxu0 0
      %1325 = vmatprep.subr.bf16.mxu0 0
      %1326 = vmatpush1.bf16.msra.mxu0 0
      %1327 = vmatprep.subr.bf16.mxu0 0
      %1328 = vmatpush1.bf16.msra.mxu0 0
      %1329 = vmatprep.subr.bf16.mxu0 0
      %1330 = vmatpush1.bf16.msra.mxu0 0
      %1331 = vmatprep.subr.bf16.mxu0 0
      %1332 = vmatpush1.bf16.msra.mxu0 0
      %1333 = vmatprep.subr.bf16.mxu0 0
      %1334 = vmatpush1.bf16.msra.mxu0 0
      %1335 = vmatprep.subr.bf16.mxu0 0
      %1336 = vmatpush1.bf16.msra.mxu0 0
      %1337 = vmatprep.subr.bf16.mxu0 0
      %1338 = vmatpush1.bf16.msra.mxu0 0
      %1339 = vmatprep.mubr.bf16.mxu0 0
      %1340 = vmatmul.mubr.bf16.gmra.mrb[0].mxu0 %v1091
      %v1341 = vpop.f32.mrb[0].mxu0
      %v1342 = vadd.f32 0.0, %v1341
      %v1343 = vpop.f32.mrb[0].mxu0
      %v1344 = vpop.f32.mrb[0].mxu0
      %v1345 = vadd.f32 0.0, %v1344
      %v1346 = vpop.f32.mrb[0].mxu0
      %1347 = vmatprep.mubr.bf16.mxu0 0
      %1348 = vmatmul.mubr.bf16.gmra.mrb[0].mxu0 %v1094
      %v1349 = vpop.f32.mrb[0].mxu0
      %v1350 = vadd.f32 0.0, %v1349
      %v1351 = vpop.f32.mrb[0].mxu0
      %v1352 = vpop.f32.mrb[0].mxu0
      %v1353 = vadd.f32 0.0, %v1352
      %v1354 = vpop.f32.mrb[0].mxu0
      %1355 = vmatprep.mubr.bf16.mxu0 0
      %1356 = vmatmul.mubr.bf16.gmra.mrb[0].mxu0 %v1097
      %v1357 = vpop.f32.mrb[0].mxu0
      %v1358 = vadd.f32 0.0, %v1357
      %v1359 = vpop.f32.mrb[0].mxu0
      %v1360 = vpop.f32.mrb[0].mxu0
      %v1361 = vadd.f32 0.0, %v1360
      %v1362 = vpop.f32.mrb[0].mxu0
      %1363 = vmatprep.mubr.bf16.mxu0 0
      %1364 = vmatmul.mubr.bf16.gmra.mrb[0].mxu0 %v1100
      %v1365 = vpop.f32.mrb[0].mxu0
      %v1366 = vadd.f32 0.0, %v1365
      %v1367 = vpop.f32.mrb[0].mxu0
      %v1368 = vpop.f32.mrb[0].mxu0
      %v1369 = vadd.f32 0.0, %v1368
      %v1370 = vpop.f32.mrb[0].mxu0
      %1371 = vmatprep.mubr.bf16.mxu0 0
      %1372 = vmatmul.mubr.bf16.gmra.mrb[0].mxu0 %v1103
      %v1373 = vpop.f32.mrb[0].mxu0
      %v1374 = vadd.f32 0.0, %v1373
      %v1375 = vpop.f32.mrb[0].mxu0
      %v1376 = vpop.f32.mrb[0].mxu0
      %v1377 = vadd.f32 0.0, %v1376
      %v1378 = vpop.f32.mrb[0].mxu0
      %1379 = vmatprep.mubr.bf16.mxu0 0
      %1380 = vmatmul.mubr.bf16.gmra.mrb[0].mxu0 %v1106
      %v1381 = vpop.f32.mrb[0].mxu0
      %v1382 = vadd.f32 0.0, %v1381
      %v1383 = vpop.f32.mrb[0].mxu0
      %v1384 = vpop.f32.mrb[0].mxu0
      %v1385 = vadd.f32 0.0, %v1384
      %v1386 = vpop.f32.mrb[0].mxu0
      %1387 = vmatprep.mubr.bf16.mxu0 0
      %1388 = vmatmul.mubr.bf16.gmra.mrb[0].mxu0 %v1109
      %v1389 = vpop.f32.mrb[0].mxu0
      %v1390 = vadd.f32 0.0, %v1389
      %v1391 = vpop.f32.mrb[0].mxu0
      %v1392 = vpop.f32.mrb[0].mxu0
      %v1393 = vadd.f32 0.0, %v1392
      %v1394 = vpop.f32.mrb[0].mxu0
      %1395 = vmatprep.mubr.bf16.mxu0 0
      %1396 = vmatmul.mubr.bf16.gmra.mrb[0].mxu0 %v1112
      %v1397 = vpop.f32.mrb[0].mxu0
      %v1398 = vadd.f32 0.0, %v1397
      %v1399 = vpop.f32.mrb[0].mxu0
      %v1400 = vpop.f32.mrb[0].mxu0
      %v1401 = vadd.f32 0.0, %v1400
      %v1402 = vpop.f32.mrb[0].mxu0
      %1403 = vmatprep.mubr.bf16.mxu0 0
      %1404 = vmatmul.mubr.bf16.gmra.mrb[0].mxu0 %v1115
      %v1405 = vpop.f32.mrb[0].mxu0
      %v1406 = vadd.f32 0.0, %v1405
      %v1407 = vpop.f32.mrb[0].mxu0
      %v1408 = vpop.f32.mrb[0].mxu0
      %v1409 = vadd.f32 0.0, %v1408
      %v1410 = vpop.f32.mrb[0].mxu0
      %1411 = vmatprep.mubr.bf16.mxu0 0
      %1412 = vmatmul.mubr.bf16.gmra.mrb[0].mxu0 %v1118
      %v1413 = vpop.f32.mrb[0].mxu0
      %v1414 = vadd.f32 0.0, %v1413
      %v1415 = vpop.f32.mrb[0].mxu0
      %v1416 = vpop.f32.mrb[0].mxu0
      %v1417 = vadd.f32 0.0, %v1416
      %v1418 = vpop.f32.mrb[0].mxu0
      %1419 = vmatprep.mubr.bf16.mxu0 0
      %1420 = vmatmul.mubr.bf16.gmra.mrb[0].mxu0 %v1121
      %v1421 = vpop.f32.mrb[0].mxu0
      %v1422 = vadd.f32 0.0, %v1421
      %v1423 = vpop.f32.mrb[0].mxu0
      %v1424 = vpop.f32.mrb[0].mxu0
      %v1425 = vadd.f32 0.0, %v1424
      %v1426 = vpop.f32.mrb[0].mxu0
      %1427 = vmatprep.mubr.bf16.mxu0 0
      %1428 = vmatmul.mubr.bf16.gmra.mrb[0].mxu0 %v1124
      %v1429 = vpop.f32.mrb[0].mxu0
      %v1430 = vadd.f32 0.0, %v1429
      %v1431 = vpop.f32.mrb[0].mxu0
      %v1432 = vpop.f32.mrb[0].mxu0
      %v1433 = vadd.f32 0.0, %v1432
      %v1434 = vpop.f32.mrb[0].mxu0
      %1435 = vmatprep.mubr.bf16.mxu0 0
      %1436 = vmatmul.mubr.bf16.gmra.mrb[0].mxu0 %v1127
      %v1437 = vpop.f32.mrb[0].mxu0
      %v1438 = vadd.f32 0.0, %v1437
      %v1439 = vpop.f32.mrb[0].mxu0
      %v1440 = vpop.f32.mrb[0].mxu0
      %v1441 = vadd.f32 0.0, %v1440
      %v1442 = vpop.f32.mrb[0].mxu0
      %1443 = vmatprep.mubr.bf16.mxu0 0
      %1444 = vmatmul.mubr.bf16.gmra.mrb[0].mxu0 %v1130
      %v1445 = vpop.f32.mrb[0].mxu0
      %v1446 = vadd.f32 0.0, %v1445
      %v1447 = vpop.f32.mrb[0].mxu0
      %v1448 = vpop.f32.mrb[0].mxu0
      %v1449 = vadd.f32 0.0, %v1448
      %v1450 = vpop.f32.mrb[0].mxu0
      %1451 = vmatprep.mubr.bf16.mxu0 0
      %1452 = vmatmul.mubr.bf16.gmra.mrb[0].mxu0 %v1133
      %v1453 = vpop.f32.mrb[0].mxu0
      %v1454 = vadd.f32 0.0, %v1453
      %v1455 = vpop.f32.mrb[0].mxu0
      %v1456 = vpop.f32.mrb[0].mxu0
      %v1457 = vadd.f32 0.0, %v1456
      %v1458 = vpop.f32.mrb[0].mxu0
      %1459 = vmatprep.mubr.bf16.mxu0 0
      %1460 = vmatmul.mubr.bf16.gmra.mrb[0].mxu0 %v1136
      %v1461 = vpop.f32.mrb[0].mxu0
      %v1462 = vadd.f32 0.0, %v1461
      %v1463 = vpop.f32.mrb[0].mxu0
      %v1464 = vpop.f32.mrb[0].mxu0
      %v1465 = vadd.f32 0.0, %v1464
      %v1466 = vpop.f32.mrb[0].mxu0
      %1467 = vdwg.mxu0
      %vm1468 = vcmask 261120
      %1469 = vst.msk [vmem:[#allocation2] sm:$0xff] %vm1468, 0.0
      %1470 = vst.msk [vmem:[#allocation2 + $0x8] sm:$0xff] %vm1468, 0.0
      %1471 = vst.msk [vmem:[#allocation2 + $0x10] sm:$0xff] %vm1468, 0.0
      %1472 = vst.msk [vmem:[#allocation2 + $0x18] sm:$0xff] %vm1468, 0.0
      %1473 = vst.msk [vmem:[#allocation2 + $0x20] sm:$0xff] %vm1468, 0.0
      %1474 = vst.msk [vmem:[#allocation2 + $0x28] sm:$0xff] %vm1468, 0.0
      %1475 = vst.msk [vmem:[#allocation2 + $0x30] sm:$0xff] %vm1468, %v1173
      %1476 = vst.msk [vmem:[#allocation2 + $0x38] sm:$0xff] %vm1468, %v1176
      %1477 = vst.msk [vmem:[#allocation2 + $0x40] sm:$0xff] %vm1468, %v1181
      %1478 = vst.msk [vmem:[#allocation2 + $0x48] sm:$0xff] %vm1468, %v1184
      %1479 = vst.msk [vmem:[#allocation2 + $0x50] sm:$0xff] %vm1468, %v1189
      %1480 = vst.msk [vmem:[#allocation2 + $0x58] sm:$0xff] %vm1468, %v1192
      %1481 = vst.msk [vmem:[#allocation2 + $0x60] sm:$0xff] %vm1468, %v1197
      %1482 = vst.msk [vmem:[#allocation2 + $0x68] sm:$0xff] %vm1468, %v1200
      %1483 = vst.msk [vmem:[#allocation2 + $0x70] sm:$0xff] %vm1468, %v1205
      %1484 = vst.msk [vmem:[#allocation2 + $0x78] sm:$0xff] %vm1468, %v1208
      %1485 = vst.msk [vmem:[#allocation2 + $0x80] sm:$0xff] %vm1468, %v1213
      %1486 = vst.msk [vmem:[#allocation2 + $0x88] sm:$0xff] %vm1468, %v1216
      %1487 = vst.msk [vmem:[#allocation2 + $0x90] sm:$0xff] %vm1468, %v1221
      %1488 = vst.msk [vmem:[#allocation2 + $0x98] sm:$0xff] %vm1468, %v1224
      %1489 = vst.msk [vmem:[#allocation2 + $0xa0] sm:$0xff] %vm1468, %v1229
      %1490 = vst.msk [vmem:[#allocation2 + $0xa8] sm:$0xff] %vm1468, %v1232
      %1491 = vst.msk [vmem:[#allocation2 + $0xb0] sm:$0xff] %vm1468, %v1237
      %1492 = vst.msk [vmem:[#allocation2 + $0xb8] sm:$0xff] %vm1468, %v1240
      %1493 = vst.msk [vmem:[#allocation2 + $0xc0] sm:$0xff] %vm1468, %v1245
      %1494 = vst.msk [vmem:[#allocation2 + $0xc8] sm:$0xff] %vm1468, %v1248
      %1495 = vst.msk [vmem:[#allocation2 + $0xd0] sm:$0xff] %vm1468, %v1253
      %1496 = vst.msk [vmem:[#allocation2 + $0xd8] sm:$0xff] %vm1468, %v1256
      %1497 = vst.msk [vmem:[#allocation2 + $0xe0] sm:$0xff] %vm1468, %v1261
      %1498 = vst.msk [vmem:[#allocation2 + $0xe8] sm:$0xff] %vm1468, %v1264
      %1499 = vst.msk [vmem:[#allocation2 + $0xf0] sm:$0xff] %vm1468, %v1269
      %1500 = vst.msk [vmem:[#allocation2 + $0xf8] sm:$0xff] %vm1468, %v1272
      %1501 = vst.msk [vmem:[#allocation2 + $0x100] sm:$0xff] %vm1468, %v1277
      %1502 = vst.msk [vmem:[#allocation2 + $0x108] sm:$0xff] %vm1468, %v1280
      %1503 = vst.msk [vmem:[#allocation2 + $0x110] sm:$0xff] %vm1468, %v1285
      %1504 = vst.msk [vmem:[#allocation2 + $0x118] sm:$0xff] %vm1468, %v1288
      %1505 = vst.msk [vmem:[#allocation2 + $0x120] sm:$0xff] %vm1468, %v1293
      %1506 = vst.msk [vmem:[#allocation2 + $0x128] sm:$0xff] %vm1468, %v1296
      %v1507 = vld [vmem:[%s5] sm:$0xf]
      %v1508 = vld [vmem:[%s6] sm:$0x1]
      %v1510 = vlaneseq
      %v1511 = vshrl.u32 %v1510, 7
      %v1512 = vsub.s32 0, %v1511
      %v1513 = vrot.slane %v1508, %v1512
      %v1515 = vadd.f32 %v1513, 0.0
      %v1516 = vld [vmem:[#allocation2] sm:$0xff]
      %v1517 = vld [vmem:[#allocation2 + $0x8] sm:$0xff]
      %v1518 = vld [vmem:[#allocation2 + $0x10] sm:$0xff]
      %v1519 = vld [vmem:[#allocation2 + $0x18] sm:$0xff]
      %v1520 = vld [vmem:[#allocation2 + $0x20] sm:$0xff]
      %v1521 = vld [vmem:[#allocation2 + $0x28] sm:$0xff]
      %v1522 = vld [vmem:[#allocation2 + $0x30] sm:$0xff]
      %v1523 = vld [vmem:[#allocation2 + $0x38] sm:$0xff]
      %v1524 = vld [vmem:[#allocation2 + $0x40] sm:$0xff]
      %v1525 = vld [vmem:[#allocation2 + $0x48] sm:$0xff]
      %v1526 = vld [vmem:[#allocation2 + $0x50] sm:$0xff]
      %v1527 = vld [vmem:[#allocation2 + $0x58] sm:$0xff]
      %v1528 = vld [vmem:[#allocation2 + $0x60] sm:$0xff]
      %v1529 = vld [vmem:[#allocation2 + $0x68] sm:$0xff]
      %v1530 = vld [vmem:[#allocation2 + $0x70] sm:$0xff]
      %v1531 = vld [vmem:[#allocation2 + $0x78] sm:$0xff]
      %v1532 = vld [vmem:[#allocation2 + $0x80] sm:$0xff]
      %v1533 = vld [vmem:[#allocation2 + $0x88] sm:$0xff]
      %v1534 = vld [vmem:[#allocation2 + $0x90] sm:$0xff]
      %v1535 = vld [vmem:[#allocation2 + $0x98] sm:$0xff]
      %v1536 = vld [vmem:[#allocation2 + $0xa0] sm:$0xff]
      %v1537 = vld [vmem:[#allocation2 + $0xa8] sm:$0xff]
      %v1538 = vld [vmem:[#allocation2 + $0xb0] sm:$0xff]
      %v1539 = vld [vmem:[#allocation2 + $0xb8] sm:$0xff]
      %v1540 = vld [vmem:[#allocation2 + $0xc0] sm:$0xff]
      %v1541 = vld [vmem:[#allocation2 + $0xc8] sm:$0xff]
      %v1542 = vld [vmem:[#allocation2 + $0xd0] sm:$0xff]
      %v1543 = vld [vmem:[#allocation2 + $0xd8] sm:$0xff]
      %v1544 = vld [vmem:[#allocation2 + $0xe0] sm:$0xff]
      %v1545 = vld [vmem:[#allocation2 + $0xe8] sm:$0xff]
      %v1546 = vld [vmem:[#allocation2 + $0xf0] sm:$0xff]
      %v1547 = vld [vmem:[#allocation2 + $0xf8] sm:$0xff]
      %v1548 = vlaneseq
      %v1549 = vshrl.u32 %v1548, 7
      %v1550 = vsub.s32 0, %v1549
      %v1551 = vrot.slane %v1507, %v1550
      %v1552 = vmul.f32 %v1516, %v1551
      %v1553 = vmul.f32 %v1517, %v1551
      %v1554 = vmul.f32 %v1518, %v1551
      %v1555 = vmul.f32 %v1519, %v1551
      %v1556 = vmul.f32 %v1520, %v1551
      %v1557 = vmul.f32 %v1521, %v1551
      %v1558 = vmul.f32 %v1522, %v1551
      %v1559 = vmul.f32 %v1523, %v1551
      %v1560 = vmul.f32 %v1524, %v1551
      %v1561 = vmul.f32 %v1525, %v1551
      %v1562 = vmul.f32 %v1526, %v1551
      %v1563 = vmul.f32 %v1527, %v1551
      %v1564 = vmul.f32 %v1528, %v1551
      %v1565 = vmul.f32 %v1529, %v1551
      %v1566 = vmul.f32 %v1530, %v1551
      %v1567 = vmul.f32 %v1531, %v1551
      %v1568 = vmul.f32 %v1532, %v1551
      %v1569 = vmul.f32 %v1533, %v1551
      %v1570 = vmul.f32 %v1534, %v1551
      %v1571 = vmul.f32 %v1535, %v1551
      %v1572 = vmul.f32 %v1536, %v1551
      %v1573 = vmul.f32 %v1537, %v1551
      %v1574 = vmul.f32 %v1538, %v1551
      %v1575 = vmul.f32 %v1539, %v1551
      %v1576 = vmul.f32 %v1540, %v1551
      %v1577 = vmul.f32 %v1541, %v1551
      %v1578 = vmul.f32 %v1542, %v1551
      %v1579 = vmul.f32 %v1543, %v1551
      %v1580 = vmul.f32 %v1544, %v1551
      %v1581 = vmul.f32 %v1545, %v1551
      %v1582 = vmul.f32 %v1546, %v1551
      %v1583 = vmul.f32 %v1547, %v1551
      %v1584 = vadd.f32 %v1515, %v1552
      %v1585 = vadd.f32 %v1515, %v1553
      %v1586 = vadd.f32 %v1515, %v1554
      %v1587 = vadd.f32 %v1515, %v1555
      %v1588 = vadd.f32 %v1515, %v1556
      %v1589 = vadd.f32 %v1515, %v1557
      %v1590 = vadd.f32 %v1515, %v1558
      %v1591 = vadd.f32 %v1515, %v1559
      %v1592 = vadd.f32 %v1515, %v1560
      %v1593 = vadd.f32 %v1515, %v1561
      %v1594 = vadd.f32 %v1515, %v1562
      %v1595 = vadd.f32 %v1515, %v1563
      %v1596 = vadd.f32 %v1515, %v1564
      %v1597 = vadd.f32 %v1515, %v1565
      %v1598 = vadd.f32 %v1515, %v1566
      %v1599 = vadd.f32 %v1515, %v1567
      %v1600 = vadd.f32 %v1515, %v1568
      %v1601 = vadd.f32 %v1515, %v1569
      %v1602 = vadd.f32 %v1515, %v1570
      %v1603 = vadd.f32 %v1515, %v1571
      %v1604 = vadd.f32 %v1515, %v1572
      %v1605 = vadd.f32 %v1515, %v1573
      %v1606 = vadd.f32 %v1515, %v1574
      %v1607 = vadd.f32 %v1515, %v1575
      %v1608 = vadd.f32 %v1515, %v1576
      %v1609 = vadd.f32 %v1515, %v1577
      %v1610 = vadd.f32 %v1515, %v1578
      %v1611 = vadd.f32 %v1515, %v1579
      %v1612 = vadd.f32 %v1515, %v1580
      %v1613 = vadd.f32 %v1515, %v1581
      %v1614 = vadd.f32 %v1515, %v1582
      %v1615 = vadd.f32 %v1515, %v1583
      %v1616 = vld [vmem:[#allocation2 + $0x100] sm:$0xff]
      %v1617 = vld [vmem:[#allocation2 + $0x108] sm:$0xff]
      %v1618 = vlaneseq
      %v1619 = vshrl.u32 %v1618, 7
      %v1620 = vsub.s32 1, %v1619
      %v1621 = vrot.slane %v1507, %v1620
      %v1622 = vmul.f32 %v1518, %v1621
      %v1623 = vmul.f32 %v1519, %v1621
      %v1624 = vmul.f32 %v1520, %v1621
      %v1625 = vmul.f32 %v1521, %v1621
      %v1626 = vmul.f32 %v1522, %v1621
      %v1627 = vmul.f32 %v1523, %v1621
      %v1628 = vmul.f32 %v1524, %v1621
      %v1629 = vmul.f32 %v1525, %v1621
      %v1630 = vmul.f32 %v1526, %v1621
      %v1631 = vmul.f32 %v1527, %v1621
      %v1632 = vmul.f32 %v1528, %v1621
      %v1633 = vmul.f32 %v1529, %v1621
      %v1634 = vmul.f32 %v1530, %v1621
      %v1635 = vmul.f32 %v1531, %v1621
      %v1636 = vmul.f32 %v1532, %v1621
      %v1637 = vmul.f32 %v1533, %v1621
      %v1638 = vmul.f32 %v1534, %v1621
      %v1639 = vmul.f32 %v1535, %v1621
      %v1640 = vmul.f32 %v1536, %v1621
      %v1641 = vmul.f32 %v1537, %v1621
      %v1642 = vmul.f32 %v1538, %v1621
      %v1643 = vmul.f32 %v1539, %v1621
      %v1644 = vmul.f32 %v1540, %v1621
      %v1645 = vmul.f32 %v1541, %v1621
      %v1646 = vmul.f32 %v1542, %v1621
      %v1647 = vmul.f32 %v1543, %v1621
      %v1648 = vmul.f32 %v1544, %v1621
      %v1649 = vmul.f32 %v1545, %v1621
      %v1650 = vmul.f32 %v1546, %v1621
      %v1651 = vmul.f32 %v1547, %v1621
      %v1652 = vmul.f32 %v1616, %v1621
      %v1653 = vmul.f32 %v1617, %v1621
      %v1654 = vadd.f32 %v1584, %v1622
      %v1655 = vadd.f32 %v1585, %v1623
      %v1656 = vadd.f32 %v1586, %v1624
      %v1657 = vadd.f32 %v1587, %v1625
      %v1658 = vadd.f32 %v1588, %v1626
      %v1659 = vadd.f32 %v1589, %v1627
      %v1660 = vadd.f32 %v1590, %v1628
      %v1661 = vadd.f32 %v1591, %v1629
      %v1662 = vadd.f32 %v1592, %v1630
      %v1663 = vadd.f32 %v1593, %v1631
      %v1664 = vadd.f32 %v1594, %v1632
      %v1665 = vadd.f32 %v1595, %v1633
      %v1666 = vadd.f32 %v1596, %v1634
      %v1667 = vadd.f32 %v1597, %v1635
      %v1668 = vadd.f32 %v1598, %v1636
      %v1669 = vadd.f32 %v1599, %v1637
      %v1670 = vadd.f32 %v1600, %v1638
      %v1671 = vadd.f32 %v1601, %v1639
      %v1672 = vadd.f32 %v1602, %v1640
      %v1673 = vadd.f32 %v1603, %v1641
      %v1674 = vadd.f32 %v1604, %v1642
      %v1675 = vadd.f32 %v1605, %v1643
      %v1676 = vadd.f32 %v1606, %v1644
      %v1677 = vadd.f32 %v1607, %v1645
      %v1678 = vadd.f32 %v1608, %v1646
      %v1679 = vadd.f32 %v1609, %v1647
      %v1680 = vadd.f32 %v1610, %v1648
      %v1681 = vadd.f32 %v1611, %v1649
      %v1682 = vadd.f32 %v1612, %v1650
      %v1683 = vadd.f32 %v1613, %v1651
      %v1684 = vadd.f32 %v1614, %v1652
      %v1685 = vadd.f32 %v1615, %v1653
      %v1686 = vld [vmem:[#allocation2 + $0x110] sm:$0xff]
      %v1687 = vld [vmem:[#allocation2 + $0x118] sm:$0xff]
      %v1688 = vlaneseq
      %v1689 = vshrl.u32 %v1688, 7
      %v1690 = vsub.s32 2, %v1689
      %v1691 = vrot.slane %v1507, %v1690
      %v1692 = vmul.f32 %v1520, %v1691
      %v1693 = vmul.f32 %v1521, %v1691
      %v1694 = vmul.f32 %v1522, %v1691
      %v1695 = vmul.f32 %v1523, %v1691
      %v1696 = vmul.f32 %v1524, %v1691
      %v1697 = vmul.f32 %v1525, %v1691
      %v1698 = vmul.f32 %v1526, %v1691
      %v1699 = vmul.f32 %v1527, %v1691
      %v1700 = vmul.f32 %v1528, %v1691
      %v1701 = vmul.f32 %v1529, %v1691
      %v1702 = vmul.f32 %v1530, %v1691
      %v1703 = vmul.f32 %v1531, %v1691
      %v1704 = vmul.f32 %v1532, %v1691
      %v1705 = vmul.f32 %v1533, %v1691
      %v1706 = vmul.f32 %v1534, %v1691
      %v1707 = vmul.f32 %v1535, %v1691
      %v1708 = vmul.f32 %v1536, %v1691
      %v1709 = vmul.f32 %v1537, %v1691
      %v1710 = vmul.f32 %v1538, %v1691
      %v1711 = vmul.f32 %v1539, %v1691
      %v1712 = vmul.f32 %v1540, %v1691
      %v1713 = vmul.f32 %v1541, %v1691
      %v1714 = vmul.f32 %v1542, %v1691
      %v1715 = vmul.f32 %v1543, %v1691
      %v1716 = vmul.f32 %v1544, %v1691
      %v1717 = vmul.f32 %v1545, %v1691
      %v1718 = vmul.f32 %v1546, %v1691
      %v1719 = vmul.f32 %v1547, %v1691
      %v1720 = vmul.f32 %v1616, %v1691
      %v1721 = vmul.f32 %v1617, %v1691
      %v1722 = vmul.f32 %v1686, %v1691
      %v1723 = vmul.f32 %v1687, %v1691
      %v1724 = vadd.f32 %v1654, %v1692
      %v1725 = vadd.f32 %v1655, %v1693
      %v1726 = vadd.f32 %v1656, %v1694
      %v1727 = vadd.f32 %v1657, %v1695
      %v1728 = vadd.f32 %v1658, %v1696
      %v1729 = vadd.f32 %v1659, %v1697
      %v1730 = vadd.f32 %v1660, %v1698
      %v1731 = vadd.f32 %v1661, %v1699
      %v1732 = vadd.f32 %v1662, %v1700
      %v1733 = vadd.f32 %v1663, %v1701
      %v1734 = vadd.f32 %v1664, %v1702
      %v1735 = vadd.f32 %v1665, %v1703
      %v1736 = vadd.f32 %v1666, %v1704
      %v1737 = vadd.f32 %v1667, %v1705
      %v1738 = vadd.f32 %v1668, %v1706
      %v1739 = vadd.f32 %v1669, %v1707
      %v1740 = vadd.f32 %v1670, %v1708
      %v1741 = vadd.f32 %v1671, %v1709
      %v1742 = vadd.f32 %v1672, %v1710
      %v1743 = vadd.f32 %v1673, %v1711
      %v1744 = vadd.f32 %v1674, %v1712
      %v1745 = vadd.f32 %v1675, %v1713
      %v1746 = vadd.f32 %v1676, %v1714
      %v1747 = vadd.f32 %v1677, %v1715
      %v1748 = vadd.f32 %v1678, %v1716
      %v1749 = vadd.f32 %v1679, %v1717
      %v1750 = vadd.f32 %v1680, %v1718
      %v1751 = vadd.f32 %v1681, %v1719
      %v1752 = vadd.f32 %v1682, %v1720
      %v1753 = vadd.f32 %v1683, %v1721
      %v1754 = vadd.f32 %v1684, %v1722
      %v1755 = vadd.f32 %v1685, %v1723
      %v1756 = vld [vmem:[#allocation2 + $0x120] sm:$0xff]
      %v1757 = vld [vmem:[#allocation2 + $0x128] sm:$0xff]
      %v1758 = vlaneseq
      %v1759 = vshrl.u32 %v1758, 7
      %v1760 = vsub.s32 3, %v1759
      %v1761 = vrot.slane %v1507, %v1760
      %v1762 = vmul.f32 %v1522, %v1761
      %v1763 = vmul.f32 %v1523, %v1761
      %v1764 = vmul.f32 %v1524, %v1761
      %v1765 = vmul.f32 %v1525, %v1761
      %v1766 = vmul.f32 %v1526, %v1761
      %v1767 = vmul.f32 %v1527, %v1761
      %v1768 = vmul.f32 %v1528, %v1761
      %v1769 = vmul.f32 %v1529, %v1761
      %v1770 = vmul.f32 %v1530, %v1761
      %v1771 = vmul.f32 %v1531, %v1761
      %v1772 = vmul.f32 %v1532, %v1761
      %v1773 = vmul.f32 %v1533, %v1761
      %v1774 = vmul.f32 %v1534, %v1761
      %v1775 = vmul.f32 %v1535, %v1761
      %v1776 = vmul.f32 %v1536, %v1761
      %v1777 = vmul.f32 %v1537, %v1761
      %v1778 = vmul.f32 %v1538, %v1761
      %v1779 = vmul.f32 %v1539, %v1761
      %v1780 = vmul.f32 %v1540, %v1761
      %v1781 = vmul.f32 %v1541, %v1761
      %v1782 = vmul.f32 %v1542, %v1761
      %v1783 = vmul.f32 %v1543, %v1761
      %v1784 = vmul.f32 %v1544, %v1761
      %v1785 = vmul.f32 %v1545, %v1761
      %v1786 = vmul.f32 %v1546, %v1761
      %v1787 = vmul.f32 %v1547, %v1761
      %v1788 = vmul.f32 %v1616, %v1761
      %v1789 = vmul.f32 %v1617, %v1761
      %v1790 = vmul.f32 %v1686, %v1761
      %v1791 = vmul.f32 %v1687, %v1761
      %v1792 = vmul.f32 %v1756, %v1761
      %v1793 = vmul.f32 %v1757, %v1761
      %v1794 = vadd.f32 %v1724, %v1762
      %v1795 = vadd.f32 %v1725, %v1763
      %v1796 = vadd.f32 %v1726, %v1764
      %v1797 = vadd.f32 %v1727, %v1765
      %v1798 = vadd.f32 %v1728, %v1766
      %v1799 = vadd.f32 %v1729, %v1767
      %v1800 = vadd.f32 %v1730, %v1768
      %v1801 = vadd.f32 %v1731, %v1769
      %v1802 = vadd.f32 %v1732, %v1770
      %v1803 = vadd.f32 %v1733, %v1771
      %v1804 = vadd.f32 %v1734, %v1772
      %v1805 = vadd.f32 %v1735, %v1773
      %v1806 = vadd.f32 %v1736, %v1774
      %v1807 = vadd.f32 %v1737, %v1775
      %v1808 = vadd.f32 %v1738, %v1776
      %v1809 = vadd.f32 %v1739, %v1777
      %v1810 = vadd.f32 %v1740, %v1778
      %v1811 = vadd.f32 %v1741, %v1779
      %v1812 = vadd.f32 %v1742, %v1780
      %v1813 = vadd.f32 %v1743, %v1781
      %v1814 = vadd.f32 %v1744, %v1782
      %v1815 = vadd.f32 %v1745, %v1783
      %v1816 = vadd.f32 %v1746, %v1784
      %v1817 = vadd.f32 %v1747, %v1785
      %v1818 = vadd.f32 %v1748, %v1786
      %v1819 = vadd.f32 %v1749, %v1787
      %v1820 = vadd.f32 %v1750, %v1788
      %v1821 = vadd.f32 %v1751, %v1789
      %v1822 = vadd.f32 %v1752, %v1790
      %v1823 = vadd.f32 %v1753, %v1791
      %v1824 = vadd.f32 %v1754, %v1792
      %v1825 = vadd.f32 %v1755, %v1793
      %v1826 = vsub.f32 0.0, %v1794
      %v1827 = vsub.f32 0.0, %v1795
      %v1828 = vsub.f32 0.0, %v1796
      %v1829 = vsub.f32 0.0, %v1797
      %v1830 = vsub.f32 0.0, %v1798
      %v1831 = vsub.f32 0.0, %v1799
      %v1832 = vsub.f32 0.0, %v1800
      %v1833 = vsub.f32 0.0, %v1801
      %v1834 = vsub.f32 0.0, %v1802
      %v1835 = vsub.f32 0.0, %v1803
      %v1836 = vsub.f32 0.0, %v1804
      %v1837 = vsub.f32 0.0, %v1805
      %v1838 = vsub.f32 0.0, %v1806
      %v1839 = vsub.f32 0.0, %v1807
      %v1840 = vsub.f32 0.0, %v1808
      %v1841 = vsub.f32 0.0, %v1809
      %v1842 = vsub.f32 0.0, %v1810
      %v1843 = vsub.f32 0.0, %v1811
      %v1844 = vsub.f32 0.0, %v1812
      %v1845 = vsub.f32 0.0, %v1813
      %v1846 = vsub.f32 0.0, %v1814
      %v1847 = vsub.f32 0.0, %v1815
      %v1848 = vsub.f32 0.0, %v1816
      %v1849 = vsub.f32 0.0, %v1817
      %v1850 = vsub.f32 0.0, %v1818
      %v1851 = vsub.f32 0.0, %v1819
      %v1852 = vsub.f32 0.0, %v1820
      %v1853 = vsub.f32 0.0, %v1821
      %v1854 = vsub.f32 0.0, %v1822
      %v1855 = vsub.f32 0.0, %v1823
      %v1856 = vsub.f32 0.0, %v1824
      %v1857 = vsub.f32 0.0, %v1825
      %v1858 = vmul.f32 %v1826, 1.442695
      %v1859 = vpow.pop %v1858
      %v1860 = vmul.f32 %v1827, 1.442695
      %v1861 = vpow.pop %v1860
      %v1862 = vmul.f32 %v1828, 1.442695
      %v1863 = vpow.pop %v1862
      %v1864 = vmul.f32 %v1829, 1.442695
      %v1865 = vpow.pop %v1864
      %v1866 = vmul.f32 %v1830, 1.442695
      %v1867 = vpow.pop %v1866
      %v1868 = vmul.f32 %v1831, 1.442695
      %v1869 = vpow.pop %v1868
      %v1870 = vmul.f32 %v1832, 1.442695
      %v1871 = vpow.pop %v1870
      %v1872 = vmul.f32 %v1833, 1.442695
      %v1873 = vpow.pop %v1872
      %v1874 = vmul.f32 %v1834, 1.442695
      %v1875 = vpow.pop %v1874
      %v1876 = vmul.f32 %v1835, 1.442695
      %v1877 = vpow.pop %v1876
      %v1878 = vmul.f32 %v1836, 1.442695
      %v1879 = vpow.pop %v1878
      %v1880 = vmul.f32 %v1837, 1.442695
      %v1881 = vpow.pop %v1880
      %v1882 = vmul.f32 %v1838, 1.442695
      %v1883 = vpow.pop %v1882
      %v1884 = vmul.f32 %v1839, 1.442695
      %v1885 = vpow.pop %v1884
      %v1886 = vmul.f32 %v1840, 1.442695
      %v1887 = vpow.pop %v1886
      %v1888 = vmul.f32 %v1841, 1.442695
      %v1889 = vpow.pop %v1888
      %v1890 = vmul.f32 %v1842, 1.442695
      %v1891 = vpow.pop %v1890
      %v1892 = vmul.f32 %v1843, 1.442695
      %v1893 = vpow.pop %v1892
      %v1894 = vmul.f32 %v1844, 1.442695
      %v1895 = vpow.pop %v1894
      %v1896 = vmul.f32 %v1845, 1.442695
      %v1897 = vpow.pop %v1896
      %v1898 = vmul.f32 %v1846, 1.442695
      %v1899 = vpow.pop %v1898
      %v1900 = vmul.f32 %v1847, 1.442695
      %v1901 = vpow.pop %v1900
      %v1902 = vmul.f32 %v1848, 1.442695
      %v1903 = vpow.pop %v1902
      %v1904 = vmul.f32 %v1849, 1.442695
      %v1905 = vpow.pop %v1904
      %v1906 = vmul.f32 %v1850, 1.442695
      %v1907 = vpow.pop %v1906
      %v1908 = vmul.f32 %v1851, 1.442695
      %v1909 = vpow.pop %v1908
      %v1910 = vmul.f32 %v1852, 1.442695
      %v1911 = vpow.pop %v1910
      %v1912 = vmul.f32 %v1853, 1.442695
      %v1913 = vpow.pop %v1912
      %v1914 = vmul.f32 %v1854, 1.442695
      %v1915 = vpow.pop %v1914
      %v1916 = vmul.f32 %v1855, 1.442695
      %v1917 = vpow.pop %v1916
      %v1918 = vmul.f32 %v1856, 1.442695
      %v1919 = vpow.pop %v1918
      %v1920 = vmul.f32 %v1857, 1.442695
      %v1921 = vpow.pop %v1920
      %v1922 = vadd.f32 %v1859, 1.0
      %v1923 = vadd.f32 %v1861, 1.0
      %v1924 = vadd.f32 %v1863, 1.0
      %v1925 = vadd.f32 %v1865, 1.0
      %v1926 = vadd.f32 %v1867, 1.0
      %v1927 = vadd.f32 %v1869, 1.0
      %v1928 = vadd.f32 %v1871, 1.0
      %v1929 = vadd.f32 %v1873, 1.0
      %v1930 = vadd.f32 %v1875, 1.0
      %v1931 = vadd.f32 %v1877, 1.0
      %v1932 = vadd.f32 %v1879, 1.0
      %v1933 = vadd.f32 %v1881, 1.0
      %v1934 = vadd.f32 %v1883, 1.0
      %v1935 = vadd.f32 %v1885, 1.0
      %v1936 = vadd.f32 %v1887, 1.0
      %v1937 = vadd.f32 %v1889, 1.0
      %v1938 = vadd.f32 %v1891, 1.0
      %v1939 = vadd.f32 %v1893, 1.0
      %v1940 = vadd.f32 %v1895, 1.0
      %v1941 = vadd.f32 %v1897, 1.0
      %v1942 = vadd.f32 %v1899, 1.0
      %v1943 = vadd.f32 %v1901, 1.0
      %v1944 = vadd.f32 %v1903, 1.0
      %v1945 = vadd.f32 %v1905, 1.0
      %v1946 = vadd.f32 %v1907, 1.0
      %v1947 = vadd.f32 %v1909, 1.0
      %v1948 = vadd.f32 %v1911, 1.0
      %v1949 = vadd.f32 %v1913, 1.0
      %v1950 = vadd.f32 %v1915, 1.0
      %v1951 = vadd.f32 %v1917, 1.0
      %v1952 = vadd.f32 %v1919, 1.0
      %v1953 = vadd.f32 %v1921, 1.0
      %v1954 = vrcp.pop %v1922
      %v1955 = vrcp.pop %v1923
      %v1956 = vrcp.pop %v1924
      %v1957 = vrcp.pop %v1925
      %v1958 = vrcp.pop %v1926
      %v1959 = vrcp.pop %v1927
      %v1960 = vrcp.pop %v1928
      %v1961 = vrcp.pop %v1929
      %v1962 = vrcp.pop %v1930
      %v1963 = vrcp.pop %v1931
      %v1964 = vrcp.pop %v1932
      %v1965 = vrcp.pop %v1933
      %v1966 = vrcp.pop %v1934
      %v1967 = vrcp.pop %v1935
      %v1968 = vrcp.pop %v1936
      %v1969 = vrcp.pop %v1937
      %v1970 = vrcp.pop %v1938
      %v1971 = vrcp.pop %v1939
      %v1972 = vrcp.pop %v1940
      %v1973 = vrcp.pop %v1941
      %v1974 = vrcp.pop %v1942
      %v1975 = vrcp.pop %v1943
      %v1976 = vrcp.pop %v1944
      %v1977 = vrcp.pop %v1945
      %v1978 = vrcp.pop %v1946
      %v1979 = vrcp.pop %v1947
      %v1980 = vrcp.pop %v1948
      %v1981 = vrcp.pop %v1949
      %v1982 = vrcp.pop %v1950
      %v1983 = vrcp.pop %v1951
      %v1984 = vrcp.pop %v1952
      %v1985 = vrcp.pop %v1953
      %v1986 = vmul.f32 %v1794, %v1954
      %v1987 = vmul.f32 %v1795, %v1955
      %v1988 = vmul.f32 %v1796, %v1956
      %v1989 = vmul.f32 %v1797, %v1957
      %v1990 = vmul.f32 %v1798, %v1958
      %v1991 = vmul.f32 %v1799, %v1959
      %v1992 = vmul.f32 %v1800, %v1960
      %v1993 = vmul.f32 %v1801, %v1961
      %v1994 = vmul.f32 %v1802, %v1962
      %v1995 = vmul.f32 %v1803, %v1963
      %v1996 = vmul.f32 %v1804, %v1964
      %v1997 = vmul.f32 %v1805, %v1965
      %v1998 = vmul.f32 %v1806, %v1966
      %v1999 = vmul.f32 %v1807, %v1967
      %v2000 = vmul.f32 %v1808, %v1968
      %v2001 = vmul.f32 %v1809, %v1969
      %v2002 = vmul.f32 %v1810, %v1970
      %v2003 = vmul.f32 %v1811, %v1971
      %v2004 = vmul.f32 %v1812, %v1972
      %v2005 = vmul.f32 %v1813, %v1973
      %v2006 = vmul.f32 %v1814, %v1974
      %v2007 = vmul.f32 %v1815, %v1975
      %v2008 = vmul.f32 %v1816, %v1976
      %v2009 = vmul.f32 %v1817, %v1977
      %v2010 = vmul.f32 %v1818, %v1978
      %v2011 = vmul.f32 %v1819, %v1979
      %v2012 = vmul.f32 %v1820, %v1980
      %v2013 = vmul.f32 %v1821, %v1981
      %v2014 = vmul.f32 %v1822, %v1982
      %v2015 = vmul.f32 %v1823, %v1983
      %v2016 = vmul.f32 %v1824, %v1984
      %v2017 = vmul.f32 %v1825, %v1985
      %v2018 = vld [vmem:[%s7] sm:$0xff]
      %v2019 = vld [vmem:[%s7 + $0x8] sm:$0xf]
      %v2020 = vld [vmem:[%s7 + $0xc] sm:$0xff]
      %v2021 = vld [vmem:[%s7 + $0x14] sm:$0xf]
      %v2022 = vld [vmem:[%s7 + $0x18] sm:$0xff]
      %v2023 = vld [vmem:[%s7 + $0x20] sm:$0xf]
      %v2024 = vld [vmem:[%s7 + $0x24] sm:$0xff]
      %v2025 = vld [vmem:[%s7 + $0x2c] sm:$0xf]
      %v2026 = vpack.c.bf16 %v1987, %v1986
      %v2027 = vpack.c.bf16 %v1989, %v1988
      %v2028 = vpack.c.bf16 %v1991, %v1990
      %v2029 = vpack.c.bf16 %v1993, %v1992
      %v2030 = vpack.c.bf16 %v1995, %v1994
      %v2031 = vpack.c.bf16 %v1997, %v1996
      %v2032 = vpack.c.bf16 %v1999, %v1998
      %v2033 = vpack.c.bf16 %v2001, %v2000
      %v2034 = vpack.c.bf16 %v2003, %v2002
      %v2035 = vpack.c.bf16 %v2005, %v2004
      %v2036 = vpack.c.bf16 %v2007, %v2006
      %v2037 = vpack.c.bf16 %v2009, %v2008
      %v2038 = vpack.c.bf16 %v2011, %v2010
      %v2039 = vpack.c.bf16 %v2013, %v2012
      %v2040 = vpack.c.bf16 %v2015, %v2014
      %v2041 = vpack.c.bf16 %v2017, %v2016
      %v2050 = vunpack.c.l.b16 %v2018
      %v2051 = vunpack.c.h.b16 %v2018
      %v2052 = vunpack.c.l.b16 %v2019
      %v2053 = vunpack.c.l.b16 %v2020
      %v2054 = vunpack.c.h.b16 %v2020
      %v2055 = vunpack.c.l.b16 %v2021
      %v2056 = vunpack.c.l.b16 %v2022
      %v2057 = vunpack.c.h.b16 %v2022
      %v2058 = vunpack.c.l.b16 %v2023
      %v2059 = vunpack.c.l.b16 %v2024
      %v2060 = vunpack.c.h.b16 %v2024
      %v2061 = vunpack.c.l.b16 %v2025
      %v2062 = vpack.c.b16 %v2053, %v2050
      %v2063 = vpack.c.b16 %v2054, %v2051
      %v2064 = vpack.c.b16 %v2055, %v2052
      %v2065 = vpack.c.b16 %v2059, %v2056
      %v2066 = vpack.c.b16 %v2060, %v2057
      %v2067 = vpack.c.b16 %v2061, %v2058
      %v2075 = vsel %vm1468, %v2026, 0
      %v2078 = vsel %vm1468, %v2027, 0
      %v2081 = vsel %vm1468, %v2028, 0
      %v2084 = vsel %vm1468, %v2029, 0
      %v2087 = vsel %vm1468, %v2030, 0
      %v2090 = vsel %vm1468, %v2031, 0
      %v2093 = vsel %vm1468, %v2032, 0
      %v2096 = vsel %vm1468, %v2033, 0
      %v2099 = vsel %vm1468, %v2034, 0
      %v2102 = vsel %vm1468, %v2035, 0
      %v2105 = vsel %vm1468, %v2036, 0
      %v2108 = vsel %vm1468, %v2037, 0
      %v2111 = vsel %vm1468, %v2038, 0
      %v2114 = vsel %vm1468, %v2039, 0
      %v2117 = vsel %vm1468, %v2040, 0
      %v2120 = vsel %vm1468, %v2041, 0
      %2122 = vmatprep.subr.bf16.mxu0 %v2063
      %2123 = vmatpush1.bf16.msra.mxu0 %v2062
      %2124 = vmatprep.subr.bf16.mxu0 %v2066
      %2125 = vmatpush1.bf16.msra.mxu0 %v2065
      %2126 = vmatprep.subr.bf16.mxu0 0
      %2127 = vmatpush1.bf16.msra.mxu0 0
      %2128 = vmatprep.subr.bf16.mxu0 0
      %2129 = vmatpush1.bf16.msra.mxu0 0
      %2130 = vmatprep.subr.bf16.mxu0 0
      %2131 = vmatpush1.bf16.msra.mxu0 0
      %2132 = vmatprep.subr.bf16.mxu0 0
      %2133 = vmatpush1.bf16.msra.mxu0 0
      %2134 = vmatprep.subr.bf16.mxu0 0
      %2135 = vmatpush1.bf16.msra.mxu0 0
      %2136 = vmatprep.subr.bf16.mxu0 0
      %2137 = vmatpush1.bf16.msra.mxu0 0
      %2138 = vmatprep.subr.bf16.mxu0 0
      %2139 = vmatpush1.bf16.msra.mxu0 0
      %2140 = vmatprep.subr.bf16.mxu0 0
      %2141 = vmatpush1.bf16.msra.mxu0 0
      %2142 = vmatprep.subr.bf16.mxu0 0
      %2143 = vmatpush1.bf16.msra.mxu0 0
      %2144 = vmatprep.subr.bf16.mxu0 0
      %2145 = vmatpush1.bf16.msra.mxu0 0
      %2146 = vmatprep.subr.bf16.mxu0 0
      %2147 = vmatpush1.bf16.msra.mxu0 0
      %2148 = vmatprep.subr.bf16.mxu0 0
      %2149 = vmatpush1.bf16.msra.mxu0 0
      %2150 = vmatprep.subr.bf16.mxu0 0
      %2151 = vmatpush1.bf16.msra.mxu0 0
      %2152 = vmatprep.subr.bf16.mxu0 0
      %2153 = vmatpush1.bf16.msra.mxu0 0
      %2154 = vmatprep.mubr.bf16.mxu0 0
      %2155 = vmatmul.mubr.bf16.gmra.mrb[0].mxu0 %v2075
      %v2156 = vpop.f32.mrb[0].mxu0
      %v2157 = vadd.f32 0.0, %v2156
      %v2158 = vpop.f32.mrb[0].mxu0
      %v2159 = vadd.f32 0.0, %v2158
      %v2160 = vpop.f32.mrb[0].mxu0
      %v2161 = vadd.f32 0.0, %v2160
      %v2162 = vpop.f32.mrb[0].mxu0
      %v2163 = vadd.f32 0.0, %v2162
      %2164 = vmatprep.mubr.bf16.mxu0 0
      %2165 = vmatmul.mubr.bf16.gmra.mrb[0].mxu0 %v2078
      %v2166 = vpop.f32.mrb[0].mxu0
      %v2167 = vadd.f32 0.0, %v2166
      %v2168 = vpop.f32.mrb[0].mxu0
      %v2169 = vadd.f32 0.0, %v2168
      %v2170 = vpop.f32.mrb[0].mxu0
      %v2171 = vadd.f32 0.0, %v2170
      %v2172 = vpop.f32.mrb[0].mxu0
      %v2173 = vadd.f32 0.0, %v2172
      %2174 = vmatprep.mubr.bf16.mxu0 0
      %2175 = vmatmul.mubr.bf16.gmra.mrb[0].mxu0 %v2081
      %v2176 = vpop.f32.mrb[0].mxu0
      %v2177 = vadd.f32 0.0, %v2176
      %v2178 = vpop.f32.mrb[0].mxu0
      %v2179 = vadd.f32 0.0, %v2178
      %v2180 = vpop.f32.mrb[0].mxu0
      %v2181 = vadd.f32 0.0, %v2180
      %v2182 = vpop.f32.mrb[0].mxu0
      %v2183 = vadd.f32 0.0, %v2182
      %2184 = vmatprep.mubr.bf16.mxu0 0
      %2185 = vmatmul.mubr.bf16.gmra.mrb[0].mxu0 %v2084
      %v2186 = vpop.f32.mrb[0].mxu0
      %v2187 = vadd.f32 0.0, %v2186
      %v2188 = vpop.f32.mrb[0].mxu0
      %v2189 = vadd.f32 0.0, %v2188
      %v2190 = vpop.f32.mrb[0].mxu0
      %v2191 = vadd.f32 0.0, %v2190
      %v2192 = vpop.f32.mrb[0].mxu0
      %v2193 = vadd.f32 0.0, %v2192
      %2194 = vmatprep.mubr.bf16.mxu0 0
      %2195 = vmatmul.mubr.bf16.gmra.mrb[0].mxu0 %v2087
      %v2196 = vpop.f32.mrb[0].mxu0
      %v2197 = vadd.f32 0.0, %v2196
      %v2198 = vpop.f32.mrb[0].mxu0
      %v2199 = vadd.f32 0.0, %v2198
      %v2200 = vpop.f32.mrb[0].mxu0
      %v2201 = vadd.f32 0.0, %v2200
      %v2202 = vpop.f32.mrb[0].mxu0
      %v2203 = vadd.f32 0.0, %v2202
      %2204 = vmatprep.mubr.bf16.mxu0 0
      %2205 = vmatmul.mubr.bf16.gmra.mrb[0].mxu0 %v2090
      %v2206 = vpop.f32.mrb[0].mxu0
      %v2207 = vadd.f32 0.0, %v2206
      %v2208 = vpop.f32.mrb[0].mxu0
      %v2209 = vadd.f32 0.0, %v2208
      %v2210 = vpop.f32.mrb[0].mxu0
      %v2211 = vadd.f32 0.0, %v2210
      %v2212 = vpop.f32.mrb[0].mxu0
      %v2213 = vadd.f32 0.0, %v2212
      %2214 = vmatprep.mubr.bf16.mxu0 0
      %2215 = vmatmul.mubr.bf16.gmra.mrb[0].mxu0 %v2093
      %v2216 = vpop.f32.mrb[0].mxu0
      %v2217 = vadd.f32 0.0, %v2216
      %v2218 = vpop.f32.mrb[0].mxu0
      %v2219 = vadd.f32 0.0, %v2218
      %v2220 = vpop.f32.mrb[0].mxu0
      %v2221 = vadd.f32 0.0, %v2220
      %v2222 = vpop.f32.mrb[0].mxu0
      %v2223 = vadd.f32 0.0, %v2222
      %2224 = vmatprep.mubr.bf16.mxu0 0
      %2225 = vmatmul.mubr.bf16.gmra.mrb[0].mxu0 %v2096
      %v2226 = vpop.f32.mrb[0].mxu0
      %v2227 = vadd.f32 0.0, %v2226
      %v2228 = vpop.f32.mrb[0].mxu0
      %v2229 = vadd.f32 0.0, %v2228
      %v2230 = vpop.f32.mrb[0].mxu0
      %v2231 = vadd.f32 0.0, %v2230
      %v2232 = vpop.f32.mrb[0].mxu0
      %v2233 = vadd.f32 0.0, %v2232
      %2234 = vmatprep.mubr.bf16.mxu0 0
      %2235 = vmatmul.mubr.bf16.gmra.mrb[0].mxu0 %v2099
      %v2236 = vpop.f32.mrb[0].mxu0
      %v2237 = vadd.f32 0.0, %v2236
      %v2238 = vpop.f32.mrb[0].mxu0
      %v2239 = vadd.f32 0.0, %v2238
      %v2240 = vpop.f32.mrb[0].mxu0
      %v2241 = vadd.f32 0.0, %v2240
      %v2242 = vpop.f32.mrb[0].mxu0
      %v2243 = vadd.f32 0.0, %v2242
      %2244 = vmatprep.mubr.bf16.mxu0 0
      %2245 = vmatmul.mubr.bf16.gmra.mrb[0].mxu0 %v2102
      %v2246 = vpop.f32.mrb[0].mxu0
      %v2247 = vadd.f32 0.0, %v2246
      %v2248 = vpop.f32.mrb[0].mxu0
      %v2249 = vadd.f32 0.0, %v2248
      %v2250 = vpop.f32.mrb[0].mxu0
      %v2251 = vadd.f32 0.0, %v2250
      %v2252 = vpop.f32.mrb[0].mxu0
      %v2253 = vadd.f32 0.0, %v2252
      %2254 = vmatprep.mubr.bf16.mxu0 0
      %2255 = vmatmul.mubr.bf16.gmra.mrb[0].mxu0 %v2105
      %v2256 = vpop.f32.mrb[0].mxu0
      %v2257 = vadd.f32 0.0, %v2256
      %v2258 = vpop.f32.mrb[0].mxu0
      %v2259 = vadd.f32 0.0, %v2258
      %v2260 = vpop.f32.mrb[0].mxu0
      %v2261 = vadd.f32 0.0, %v2260
      %v2262 = vpop.f32.mrb[0].mxu0
      %v2263 = vadd.f32 0.0, %v2262
      %2264 = vmatprep.mubr.bf16.mxu0 0
      %2265 = vmatmul.mubr.bf16.gmra.mrb[0].mxu0 %v2108
      %v2266 = vpop.f32.mrb[0].mxu0
      %v2267 = vadd.f32 0.0, %v2266
      %v2268 = vpop.f32.mrb[0].mxu0
      %v2269 = vadd.f32 0.0, %v2268
      %v2270 = vpop.f32.mrb[0].mxu0
      %v2271 = vadd.f32 0.0, %v2270
      %v2272 = vpop.f32.mrb[0].mxu0
      %v2273 = vadd.f32 0.0, %v2272
      %2274 = vmatprep.mubr.bf16.mxu0 0
      %2275 = vmatmul.mubr.bf16.gmra.mrb[0].mxu0 %v2111
      %v2276 = vpop.f32.mrb[0].mxu0
      %v2277 = vadd.f32 0.0, %v2276
      %v2278 = vpop.f32.mrb[0].mxu0
      %v2279 = vadd.f32 0.0, %v2278
      %v2280 = vpop.f32.mrb[0].mxu0
      %v2281 = vadd.f32 0.0, %v2280
      %v2282 = vpop.f32.mrb[0].mxu0
      %v2283 = vadd.f32 0.0, %v2282
      %2284 = vmatprep.mubr.bf16.mxu0 0
      %2285 = vmatmul.mubr.bf16.gmra.mrb[0].mxu0 %v2114
      %v2286 = vpop.f32.mrb[0].mxu0
      %v2287 = vadd.f32 0.0, %v2286
      %v2288 = vpop.f32.mrb[0].mxu0
      %v2289 = vadd.f32 0.0, %v2288
      %v2290 = vpop.f32.mrb[0].mxu0
      %v2291 = vadd.f32 0.0, %v2290
      %v2292 = vpop.f32.mrb[0].mxu0
      %v2293 = vadd.f32 0.0, %v2292
      %2294 = vmatprep.mubr.bf16.mxu0 0
      %2295 = vmatmul.mubr.bf16.gmra.mrb[0].mxu0 %v2117
      %v2296 = vpop.f32.mrb[0].mxu0
      %v2297 = vadd.f32 0.0, %v2296
      %v2298 = vpop.f32.mrb[0].mxu0
      %v2299 = vadd.f32 0.0, %v2298
      %v2300 = vpop.f32.mrb[0].mxu0
      %v2301 = vadd.f32 0.0, %v2300
      %v2302 = vpop.f32.mrb[0].mxu0
      %v2303 = vadd.f32 0.0, %v2302
      %2304 = vmatprep.mubr.bf16.mxu0 0
      %2305 = vmatmul.mubr.bf16.gmra.mrb[0].mxu0 %v2120
      %v2306 = vpop.f32.mrb[0].mxu0
      %v2307 = vadd.f32 0.0, %v2306
      %v2308 = vpop.f32.mrb[0].mxu0
      %v2309 = vadd.f32 0.0, %v2308
      %v2310 = vpop.f32.mrb[0].mxu0
      %v2311 = vadd.f32 0.0, %v2310
      %v2312 = vpop.f32.mrb[0].mxu0
      %v2313 = vadd.f32 0.0, %v2312
      %2314 = vdwg.mxu0
      %2315 = vmatprep.subr.bf16.mxu0 0
      %2316 = vmatpush1.bf16.msra.mxu0 %v2064
      %2317 = vmatprep.subr.bf16.mxu0 0
      %2318 = vmatpush1.bf16.msra.mxu0 %v2067
      %2319 = vmatprep.subr.bf16.mxu0 0
      %2320 = vmatpush1.bf16.msra.mxu0 0
      %2321 = vmatprep.subr.bf16.mxu0 0
      %2322 = vmatpush1.bf16.msra.mxu0 0
      %2323 = vmatprep.subr.bf16.mxu0 0
      %2324 = vmatpush1.bf16.msra.mxu0 0
      %2325 = vmatprep.subr.bf16.mxu0 0
      %2326 = vmatpush1.bf16.msra.mxu0 0
      %2327 = vmatprep.subr.bf16.mxu0 0
      %2328 = vmatpush1.bf16.msra.mxu0 0
      %2329 = vmatprep.subr.bf16.mxu0 0
      %2330 = vmatpush1.bf16.msra.mxu0 0
      %2331 = vmatprep.subr.bf16.mxu0 0
      %2332 = vmatpush1.bf16.msra.mxu0 0
      %2333 = vmatprep.subr.bf16.mxu0 0
      %2334 = vmatpush1.bf16.msra.mxu0 0
      %2335 = vmatprep.subr.bf16.mxu0 0
      %2336 = vmatpush1.bf16.msra.mxu0 0
      %2337 = vmatprep.subr.bf16.mxu0 0
      %2338 = vmatpush1.bf16.msra.mxu0 0
      %2339 = vmatprep.subr.bf16.mxu0 0
      %2340 = vmatpush1.bf16.msra.mxu0 0
      %2341 = vmatprep.subr.bf16.mxu0 0
      %2342 = vmatpush1.bf16.msra.mxu0 0
      %2343 = vmatprep.subr.bf16.mxu0 0
      %2344 = vmatpush1.bf16.msra.mxu0 0
      %2345 = vmatprep.subr.bf16.mxu0 0
      %2346 = vmatpush1.bf16.msra.mxu0 0
      %2347 = vmatprep.mubr.bf16.mxu0 0
      %2348 = vmatmul.mubr.bf16.gmra.mrb[0].mxu0 %v2075
      %v2349 = vpop.f32.mrb[0].mxu0
      %v2350 = vadd.f32 0.0, %v2349
      %v2351 = vpop.f32.mrb[0].mxu0
      %v2352 = vpop.f32.mrb[0].mxu0
      %v2353 = vadd.f32 0.0, %v2352
      %v2354 = vpop.f32.mrb[0].mxu0
      %2355 = vmatprep.mubr.bf16.mxu0 0
      %2356 = vmatmul.mubr.bf16.gmra.mrb[0].mxu0 %v2078
      %v2357 = vpop.f32.mrb[0].mxu0
      %v2358 = vadd.f32 0.0, %v2357
      %v2359 = vpop.f32.mrb[0].mxu0
      %v2360 = vpop.f32.mrb[0].mxu0
      %v2361 = vadd.f32 0.0, %v2360
      %v2362 = vpop.f32.mrb[0].mxu0
      %2363 = vmatprep.mubr.bf16.mxu0 0
      %2364 = vmatmul.mubr.bf16.gmra.mrb[0].mxu0 %v2081
      %v2365 = vpop.f32.mrb[0].mxu0
      %v2366 = vadd.f32 0.0, %v2365
      %v2367 = vpop.f32.mrb[0].mxu0
      %v2368 = vpop.f32.mrb[0].mxu0
      %v2369 = vadd.f32 0.0, %v2368
      %v2370 = vpop.f32.mrb[0].mxu0
      %2371 = vmatprep.mubr.bf16.mxu0 0
      %2372 = vmatmul.mubr.bf16.gmra.mrb[0].mxu0 %v2084
      %v2373 = vpop.f32.mrb[0].mxu0
      %v2374 = vadd.f32 0.0, %v2373
      %v2375 = vpop.f32.mrb[0].mxu0
      %v2376 = vpop.f32.mrb[0].mxu0
      %v2377 = vadd.f32 0.0, %v2376
      %v2378 = vpop.f32.mrb[0].mxu0
      %2379 = vmatprep.mubr.bf16.mxu0 0
      %2380 = vmatmul.mubr.bf16.gmra.mrb[0].mxu0 %v2087
      %v2381 = vpop.f32.mrb[0].mxu0
      %v2382 = vadd.f32 0.0, %v2381
      %v2383 = vpop.f32.mrb[0].mxu0
      %v2384 = vpop.f32.mrb[0].mxu0
      %v2385 = vadd.f32 0.0, %v2384
      %v2386 = vpop.f32.mrb[0].mxu0
      %2387 = vmatprep.mubr.bf16.mxu0 0
      %2388 = vmatmul.mubr.bf16.gmra.mrb[0].mxu0 %v2090
      %v2389 = vpop.f32.mrb[0].mxu0
      %v2390 = vadd.f32 0.0, %v2389
      %v2391 = vpop.f32.mrb[0].mxu0
      %v2392 = vpop.f32.mrb[0].mxu0
      %v2393 = vadd.f32 0.0, %v2392
      %v2394 = vpop.f32.mrb[0].mxu0
      %2395 = vmatprep.mubr.bf16.mxu0 0
      %2396 = vmatmul.mubr.bf16.gmra.mrb[0].mxu0 %v2093
      %v2397 = vpop.f32.mrb[0].mxu0
      %v2398 = vadd.f32 0.0, %v2397
      %v2399 = vpop.f32.mrb[0].mxu0
      %v2400 = vpop.f32.mrb[0].mxu0
      %v2401 = vadd.f32 0.0, %v2400
      %v2402 = vpop.f32.mrb[0].mxu0
      %2403 = vmatprep.mubr.bf16.mxu0 0
      %2404 = vmatmul.mubr.bf16.gmra.mrb[0].mxu0 %v2096
      %v2405 = vpop.f32.mrb[0].mxu0
      %v2406 = vadd.f32 0.0, %v2405
      %v2407 = vpop.f32.mrb[0].mxu0
      %v2408 = vpop.f32.mrb[0].mxu0
      %v2409 = vadd.f32 0.0, %v2408
      %v2410 = vpop.f32.mrb[0].mxu0
      %2411 = vmatprep.mubr.bf16.mxu0 0
      %2412 = vmatmul.mubr.bf16.gmra.mrb[0].mxu0 %v2099
      %v2413 = vpop.f32.mrb[0].mxu0
      %v2414 = vadd.f32 0.0, %v2413
      %v2415 = vpop.f32.mrb[0].mxu0
      %v2416 = vpop.f32.mrb[0].mxu0
      %v2417 = vadd.f32 0.0, %v2416
      %v2418 = vpop.f32.mrb[0].mxu0
      %2419 = vmatprep.mubr.bf16.mxu0 0
      %2420 = vmatmul.mubr.bf16.gmra.mrb[0].mxu0 %v2102
      %v2421 = vpop.f32.mrb[0].mxu0
      %v2422 = vadd.f32 0.0, %v2421
      %v2423 = vpop.f32.mrb[0].mxu0
      %v2424 = vpop.f32.mrb[0].mxu0
      %v2425 = vadd.f32 0.0, %v2424
      %v2426 = vpop.f32.mrb[0].mxu0
      %2427 = vmatprep.mubr.bf16.mxu0 0
      %2428 = vmatmul.mubr.bf16.gmra.mrb[0].mxu0 %v2105
      %v2429 = vpop.f32.mrb[0].mxu0
      %v2430 = vadd.f32 0.0, %v2429
      %v2431 = vpop.f32.mrb[0].mxu0
      %v2432 = vpop.f32.mrb[0].mxu0
      %v2433 = vadd.f32 0.0, %v2432
      %v2434 = vpop.f32.mrb[0].mxu0
      %2435 = vmatprep.mubr.bf16.mxu0 0
      %2436 = vmatmul.mubr.bf16.gmra.mrb[0].mxu0 %v2108
      %v2437 = vpop.f32.mrb[0].mxu0
      %v2438 = vadd.f32 0.0, %v2437
      %v2439 = vpop.f32.mrb[0].mxu0
      %v2440 = vpop.f32.mrb[0].mxu0
      %v2441 = vadd.f32 0.0, %v2440
      %v2442 = vpop.f32.mrb[0].mxu0
      %2443 = vmatprep.mubr.bf16.mxu0 0
      %2444 = vmatmul.mubr.bf16.gmra.mrb[0].mxu0 %v2111
      %v2445 = vpop.f32.mrb[0].mxu0
      %v2446 = vadd.f32 0.0, %v2445
      %v2447 = vpop.f32.mrb[0].mxu0
      %v2448 = vpop.f32.mrb[0].mxu0
      %v2449 = vadd.f32 0.0, %v2448
      %v2450 = vpop.f32.mrb[0].mxu0
      %2451 = vmatprep.mubr.bf16.mxu0 0
      %2452 = vmatmul.mubr.bf16.gmra.mrb[0].mxu0 %v2114
      %v2453 = vpop.f32.mrb[0].mxu0
      %v2454 = vadd.f32 0.0, %v2453
      %v2455 = vpop.f32.mrb[0].mxu0
      %v2456 = vpop.f32.mrb[0].mxu0
      %v2457 = vadd.f32 0.0, %v2456
      %v2458 = vpop.f32.mrb[0].mxu0
      %2459 = vmatprep.mubr.bf16.mxu0 0
      %2460 = vmatmul.mubr.bf16.gmra.mrb[0].mxu0 %v2117
      %v2461 = vpop.f32.mrb[0].mxu0
      %v2462 = vadd.f32 0.0, %v2461
      %v2463 = vpop.f32.mrb[0].mxu0
      %v2464 = vpop.f32.mrb[0].mxu0
      %v2465 = vadd.f32 0.0, %v2464
      %v2466 = vpop.f32.mrb[0].mxu0
      %2467 = vmatprep.mubr.bf16.mxu0 0
      %2468 = vmatmul.mubr.bf16.gmra.mrb[0].mxu0 %v2120
      %v2469 = vpop.f32.mrb[0].mxu0
      %v2470 = vadd.f32 0.0, %v2469
      %v2471 = vpop.f32.mrb[0].mxu0
      %v2472 = vpop.f32.mrb[0].mxu0
      %v2473 = vadd.f32 0.0, %v2472
      %v2474 = vpop.f32.mrb[0].mxu0
      %2475 = vdwg.mxu0
      %2476 = vst [vmem:[#allocation6] sm:$0xff] %v2159
      %2477 = vst [vmem:[#allocation6 + $0x8] sm:$0xff] %v2163
      %2478 = vst [vmem:[#allocation6 + $0x10] sm:$0xff] %v2169
      %2479 = vst [vmem:[#allocation6 + $0x18] sm:$0xff] %v2173
      %2480 = vst [vmem:[#allocation6 + $0x20] sm:$0xff] %v2179
      %2481 = vst [vmem:[#allocation6 + $0x28] sm:$0xff] %v2183
      %2482 = vst [vmem:[#allocation6 + $0x30] sm:$0xff] %v2189
      %2483 = vst [vmem:[#allocation6 + $0x38] sm:$0xff] %v2193
      %2484 = vst [vmem:[#allocation6 + $0x40] sm:$0xff] %v2199
      %2485 = vst [vmem:[#allocation6 + $0x48] sm:$0xff] %v2203
      %2486 = vst [vmem:[#allocation6 + $0x50] sm:$0xff] %v2209
      %2487 = vst [vmem:[#allocation6 + $0x58] sm:$0xff] %v2213
      %2488 = vst [vmem:[#allocation6 + $0x60] sm:$0xff] %v2219
      %2489 = vst [vmem:[#allocation6 + $0x68] sm:$0xff] %v2223
      %2490 = vst [vmem:[#allocation6 + $0x70] sm:$0xff] %v2229
      %2491 = vst [vmem:[#allocation6 + $0x78] sm:$0xff] %v2233
      %2492 = vst [vmem:[#allocation6 + $0x80] sm:$0xff] %v2239
      %2493 = vst [vmem:[#allocation6 + $0x88] sm:$0xff] %v2243
      %2494 = vst [vmem:[#allocation6 + $0x90] sm:$0xff] %v2249
      %2495 = vst [vmem:[#allocation6 + $0x98] sm:$0xff] %v2253
      %2496 = vst [vmem:[#allocation6 + $0xa0] sm:$0xff] %v2259
      %2497 = vst [vmem:[#allocation6 + $0xa8] sm:$0xff] %v2263
      %2498 = vst [vmem:[#allocation6 + $0xb0] sm:$0xff] %v2269
      %2499 = vst [vmem:[#allocation6 + $0xb8] sm:$0xff] %v2273
      %2500 = vst [vmem:[#allocation6 + $0xc0] sm:$0xff] %v2279
      %2501 = vst [vmem:[#allocation6 + $0xc8] sm:$0xff] %v2283
      %2502 = vst [vmem:[#allocation6 + $0xd0] sm:$0xff] %v2289
      %2503 = vst [vmem:[#allocation6 + $0xd8] sm:$0xff] %v2293
      %2504 = vst [vmem:[#allocation6 + $0xe0] sm:$0xff] %v2299
      %2505 = vst [vmem:[#allocation6 + $0xe8] sm:$0xff] %v2303
      %2506 = vst [vmem:[#allocation6 + $0xf0] sm:$0xff] %v2309
      %2507 = vst [vmem:[#allocation6 + $0xf8] sm:$0xff] %v2313
      %v2508 = vld [vmem:[%s8] sm:$0x1]
      %v2510 = vlaneseq
      %v2511 = vshrl.u32 %v2510, 7
      %v2512 = vsub.s32 0, %v2511
      %v2513 = vrot.slane %v2508, %v2512
      %v2515 = vadd.f32 %v2350, %v2513
      %v2516 = vadd.f32 %v2353, %v2513
      %v2517 = vadd.f32 %v2358, %v2513
      %v2518 = vadd.f32 %v2361, %v2513
      %v2519 = vadd.f32 %v2366, %v2513
      %v2520 = vadd.f32 %v2369, %v2513
      %v2521 = vadd.f32 %v2374, %v2513
      %v2522 = vadd.f32 %v2377, %v2513
      %v2523 = vadd.f32 %v2382, %v2513
      %v2524 = vadd.f32 %v2385, %v2513
      %v2525 = vadd.f32 %v2390, %v2513
      %v2526 = vadd.f32 %v2393, %v2513
      %v2527 = vadd.f32 %v2398, %v2513
      %v2528 = vadd.f32 %v2401, %v2513
      %v2529 = vadd.f32 %v2406, %v2513
      %v2530 = vadd.f32 %v2409, %v2513
      %v2531 = vadd.f32 %v2414, %v2513
      %v2532 = vadd.f32 %v2417, %v2513
      %v2533 = vadd.f32 %v2422, %v2513
      %v2534 = vadd.f32 %v2425, %v2513
      %v2535 = vadd.f32 %v2430, %v2513
      %v2536 = vadd.f32 %v2433, %v2513
      %v2537 = vadd.f32 %v2438, %v2513
      %v2538 = vadd.f32 %v2441, %v2513
      %v2539 = vadd.f32 %v2446, %v2513
      %v2540 = vadd.f32 %v2449, %v2513
      %v2541 = vadd.f32 %v2454, %v2513
      %v2542 = vadd.f32 %v2457, %v2513
      %v2543 = vadd.f32 %v2462, %v2513
      %v2544 = vadd.f32 %v2465, %v2513
      %v2545 = vadd.f32 %v2470, %v2513
      %v2546 = vadd.f32 %v2473, %v2513
      %v2547 = vmax.f32 %v2515, 0.0
      %v2548 = vmax.f32 %v2516, 0.0
      %v2549 = vmax.f32 %v2517, 0.0
      %v2550 = vmax.f32 %v2518, 0.0
      %v2551 = vmax.f32 %v2519, 0.0
      %v2552 = vmax.f32 %v2520, 0.0
      %v2553 = vmax.f32 %v2521, 0.0
      %v2554 = vmax.f32 %v2522, 0.0
      %v2555 = vmax.f32 %v2523, 0.0
      %v2556 = vmax.f32 %v2524, 0.0
      %v2557 = vmax.f32 %v2525, 0.0
      %v2558 = vmax.f32 %v2526, 0.0
      %v2559 = vmax.f32 %v2527, 0.0
      %v2560 = vmax.f32 %v2528, 0.0
      %v2561 = vmax.f32 %v2529, 0.0
      %v2562 = vmax.f32 %v2530, 0.0
      %v2563 = vmax.f32 %v2531, 0.0
      %v2564 = vmax.f32 %v2532, 0.0
      %v2565 = vmax.f32 %v2533, 0.0
      %v2566 = vmax.f32 %v2534, 0.0
      %v2567 = vmax.f32 %v2535, 0.0
      %v2568 = vmax.f32 %v2536, 0.0
      %v2569 = vmax.f32 %v2537, 0.0
      %v2570 = vmax.f32 %v2538, 0.0
      %v2571 = vmax.f32 %v2539, 0.0
      %v2572 = vmax.f32 %v2540, 0.0
      %v2573 = vmax.f32 %v2541, 0.0
      %v2574 = vmax.f32 %v2542, 0.0
      %v2575 = vmax.f32 %v2543, 0.0
      %v2576 = vmax.f32 %v2544, 0.0
      %v2577 = vmax.f32 %v2545, 0.0
      %v2578 = vmax.f32 %v2546, 0.0
      %v2579 = vand.u32 2147483647, %v2515
      %v2580 = vand.u32 2147483647, %v2516
      %v2581 = vand.u32 2147483647, %v2517
      %v2582 = vand.u32 2147483647, %v2518
      %v2583 = vand.u32 2147483647, %v2519
      %v2584 = vand.u32 2147483647, %v2520
      %v2585 = vand.u32 2147483647, %v2521
      %v2586 = vand.u32 2147483647, %v2522
      %v2587 = vand.u32 2147483647, %v2523
      %v2588 = vand.u32 2147483647, %v2524
      %v2589 = vand.u32 2147483647, %v2525
      %v2590 = vand.u32 2147483647, %v2526
      %v2591 = vand.u32 2147483647, %v2527
      %v2592 = vand.u32 2147483647, %v2528
      %v2593 = vand.u32 2147483647, %v2529
      %v2594 = vand.u32 2147483647, %v2530
      %v2595 = vand.u32 2147483647, %v2531
      %v2596 = vand.u32 2147483647, %v2532
      %v2597 = vand.u32 2147483647, %v2533
      %v2598 = vand.u32 2147483647, %v2534
      %v2599 = vand.u32 2147483647, %v2535
      %v2600 = vand.u32 2147483647, %v2536
      %v2601 = vand.u32 2147483647, %v2537
      %v2602 = vand.u32 2147483647, %v2538
      %v2603 = vand.u32 2147483647, %v2539
      %v2604 = vand.u32 2147483647, %v2540
      %v2605 = vand.u32 2147483647, %v2541
      %v2606 = vand.u32 2147483647, %v2542
      %v2607 = vand.u32 2147483647, %v2543
      %v2608 = vand.u32 2147483647, %v2544
      %v2609 = vand.u32 2147483647, %v2545
      %v2610 = vand.u32 2147483647, %v2546
      %v2611 = vsub.f32 0.0, %v2579
      %v2612 = vsub.f32 0.0, %v2580
      %v2613 = vsub.f32 0.0, %v2581
      %v2614 = vsub.f32 0.0, %v2582
      %v2615 = vsub.f32 0.0, %v2583
      %v2616 = vsub.f32 0.0, %v2584
      %v2617 = vsub.f32 0.0, %v2585
      %v2618 = vsub.f32 0.0, %v2586
      %v2619 = vsub.f32 0.0, %v2587
      %v2620 = vsub.f32 0.0, %v2588
      %v2621 = vsub.f32 0.0, %v2589
      %v2622 = vsub.f32 0.0, %v2590
      %v2623 = vsub.f32 0.0, %v2591
      %v2624 = vsub.f32 0.0, %v2592
      %v2625 = vsub.f32 0.0, %v2593
      %v2626 = vsub.f32 0.0, %v2594
      %v2627 = vsub.f32 0.0, %v2595
      %v2628 = vsub.f32 0.0, %v2596
      %v2629 = vsub.f32 0.0, %v2597
      %v2630 = vsub.f32 0.0, %v2598
      %v2631 = vsub.f32 0.0, %v2599
      %v2632 = vsub.f32 0.0, %v2600
      %v2633 = vsub.f32 0.0, %v2601
      %v2634 = vsub.f32 0.0, %v2602
      %v2635 = vsub.f32 0.0, %v2603
      %v2636 = vsub.f32 0.0, %v2604
      %v2637 = vsub.f32 0.0, %v2605
      %v2638 = vsub.f32 0.0, %v2606
      %v2639 = vsub.f32 0.0, %v2607
      %v2640 = vsub.f32 0.0, %v2608
      %v2641 = vsub.f32 0.0, %v2609
      %v2642 = vsub.f32 0.0, %v2610
      %v2643 = vmul.f32 %v2611, 1.442695
      %v2644 = vpow.pop %v2643
      %v2645 = vmul.f32 %v2612, 1.442695
      %v2646 = vpow.pop %v2645
      %v2647 = vmul.f32 %v2613, 1.442695
      %v2648 = vpow.pop %v2647
      %v2649 = vmul.f32 %v2614, 1.442695
      %v2650 = vpow.pop %v2649
      %v2651 = vmul.f32 %v2615, 1.442695
      %v2652 = vpow.pop %v2651
      %v2653 = vmul.f32 %v2616, 1.442695
      %v2654 = vpow.pop %v2653
      %v2655 = vmul.f32 %v2617, 1.442695
      %v2656 = vpow.pop %v2655
      %v2657 = vmul.f32 %v2618, 1.442695
      %v2658 = vpow.pop %v2657
      %v2659 = vmul.f32 %v2619, 1.442695
      %v2660 = vpow.pop %v2659
      %v2661 = vmul.f32 %v2620, 1.442695
      %v2662 = vpow.pop %v2661
      %v2663 = vmul.f32 %v2621, 1.442695
      %v2664 = vpow.pop %v2663
      %v2665 = vmul.f32 %v2622, 1.442695
      %v2666 = vpow.pop %v2665
      %v2667 = vmul.f32 %v2623, 1.442695
      %v2668 = vpow.pop %v2667
      %v2669 = vmul.f32 %v2624, 1.442695
      %v2670 = vpow.pop %v2669
      %v2671 = vmul.f32 %v2625, 1.442695
      %v2672 = vpow.pop %v2671
      %v2673 = vmul.f32 %v2626, 1.442695
      %v2674 = vpow.pop %v2673
      %v2675 = vmul.f32 %v2627, 1.442695
      %v2676 = vpow.pop %v2675
      %v2677 = vmul.f32 %v2628, 1.442695
      %v2678 = vpow.pop %v2677
      %v2679 = vmul.f32 %v2629, 1.442695
      %v2680 = vpow.pop %v2679
      %v2681 = vmul.f32 %v2630, 1.442695
      %v2682 = vpow.pop %v2681
      %v2683 = vmul.f32 %v2631, 1.442695
      %v2684 = vpow.pop %v2683
      %v2685 = vmul.f32 %v2632, 1.442695
      %v2686 = vpow.pop %v2685
      %v2687 = vmul.f32 %v2633, 1.442695
      %v2688 = vpow.pop %v2687
      %v2689 = vmul.f32 %v2634, 1.442695
      %v2690 = vpow.pop %v2689
      %v2691 = vmul.f32 %v2635, 1.442695
      %v2692 = vpow.pop %v2691
      %v2693 = vmul.f32 %v2636, 1.442695
      %v2694 = vpow.pop %v2693
      %v2695 = vmul.f32 %v2637, 1.442695
      %v2696 = vpow.pop %v2695
      %v2697 = vmul.f32 %v2638, 1.442695
      %v2698 = vpow.pop %v2697
      %v2699 = vmul.f32 %v2639, 1.442695
      %v2700 = vpow.pop %v2699
      %v2701 = vmul.f32 %v2640, 1.442695
      %v2702 = vpow.pop %v2701
      %v2703 = vmul.f32 %v2641, 1.442695
      %v2704 = vpow.pop %v2703
      %v2705 = vmul.f32 %v2642, 1.442695
      %v2706 = vpow.pop %v2705
      %v2707 = vadd.f32 %v2644, 1.0
      %v2708 = vadd.f32 %v2646, 1.0
      %v2709 = vadd.f32 %v2648, 1.0
      %v2710 = vadd.f32 %v2650, 1.0
      %v2711 = vadd.f32 %v2652, 1.0
      %v2712 = vadd.f32 %v2654, 1.0
      %v2713 = vadd.f32 %v2656, 1.0
      %v2714 = vadd.f32 %v2658, 1.0
      %v2715 = vadd.f32 %v2660, 1.0
      %v2716 = vadd.f32 %v2662, 1.0
      %v2717 = vadd.f32 %v2664, 1.0
      %v2718 = vadd.f32 %v2666, 1.0
      %v2719 = vadd.f32 %v2668, 1.0
      %v2720 = vadd.f32 %v2670, 1.0
      %v2721 = vadd.f32 %v2672, 1.0
      %v2722 = vadd.f32 %v2674, 1.0
      %v2723 = vadd.f32 %v2676, 1.0
      %v2724 = vadd.f32 %v2678, 1.0
      %v2725 = vadd.f32 %v2680, 1.0
      %v2726 = vadd.f32 %v2682, 1.0
      %v2727 = vadd.f32 %v2684, 1.0
      %v2728 = vadd.f32 %v2686, 1.0
      %v2729 = vadd.f32 %v2688, 1.0
      %v2730 = vadd.f32 %v2690, 1.0
      %v2731 = vadd.f32 %v2692, 1.0
      %v2732 = vadd.f32 %v2694, 1.0
      %v2733 = vadd.f32 %v2696, 1.0
      %v2734 = vadd.f32 %v2698, 1.0
      %v2735 = vadd.f32 %v2700, 1.0
      %v2736 = vadd.f32 %v2702, 1.0
      %v2737 = vadd.f32 %v2704, 1.0
      %v2738 = vadd.f32 %v2706, 1.0
      %v2739 = vlog2.pop %v2707
      %v2740 = vmul.f32 %v2739, 0.6931472
      %v2741 = vlog2.pop %v2708
      %v2742 = vmul.f32 %v2741, 0.6931472
      %v2743 = vlog2.pop %v2709
      %v2744 = vmul.f32 %v2743, 0.6931472
      %v2745 = vlog2.pop %v2710
      %v2746 = vmul.f32 %v2745, 0.6931472
      %v2747 = vlog2.pop %v2711
      %v2748 = vmul.f32 %v2747, 0.6931472
      %v2749 = vlog2.pop %v2712
      %v2750 = vmul.f32 %v2749, 0.6931472
      %v2751 = vlog2.pop %v2713
      %v2752 = vmul.f32 %v2751, 0.6931472
      %v2753 = vlog2.pop %v2714
      %v2754 = vmul.f32 %v2753, 0.6931472
      %v2755 = vlog2.pop %v2715
      %v2756 = vmul.f32 %v2755, 0.6931472
      %v2757 = vlog2.pop %v2716
      %v2758 = vmul.f32 %v2757, 0.6931472
      %v2759 = vlog2.pop %v2717
      %v2760 = vmul.f32 %v2759, 0.6931472
      %v2761 = vlog2.pop %v2718
      %v2762 = vmul.f32 %v2761, 0.6931472
      %v2763 = vlog2.pop %v2719
      %v2764 = vmul.f32 %v2763, 0.6931472
      %v2765 = vlog2.pop %v2720
      %v2766 = vmul.f32 %v2765, 0.6931472
      %v2767 = vlog2.pop %v2721
      %v2768 = vmul.f32 %v2767, 0.6931472
      %v2769 = vlog2.pop %v2722
      %v2770 = vmul.f32 %v2769, 0.6931472
      %v2771 = vlog2.pop %v2723
      %v2772 = vmul.f32 %v2771, 0.6931472
      %v2773 = vlog2.pop %v2724
      %v2774 = vmul.f32 %v2773, 0.6931472
      %v2775 = vlog2.pop %v2725
      %v2776 = vmul.f32 %v2775, 0.6931472
      %v2777 = vlog2.pop %v2726
      %v2778 = vmul.f32 %v2777, 0.6931472
      %v2779 = vlog2.pop %v2727
      %v2780 = vmul.f32 %v2779, 0.6931472
      %v2781 = vlog2.pop %v2728
      %v2782 = vmul.f32 %v2781, 0.6931472
      %v2783 = vlog2.pop %v2729
      %v2784 = vmul.f32 %v2783, 0.6931472
      %v2785 = vlog2.pop %v2730
      %v2786 = vmul.f32 %v2785, 0.6931472
      %v2787 = vlog2.pop %v2731
      %v2788 = vmul.f32 %v2787, 0.6931472
      %v2789 = vlog2.pop %v2732
      %v2790 = vmul.f32 %v2789, 0.6931472
      %v2791 = vlog2.pop %v2733
      %v2792 = vmul.f32 %v2791, 0.6931472
      %v2793 = vlog2.pop %v2734
      %v2794 = vmul.f32 %v2793, 0.6931472
      %v2795 = vlog2.pop %v2735
      %v2796 = vmul.f32 %v2795, 0.6931472
      %v2797 = vlog2.pop %v2736
      %v2798 = vmul.f32 %v2797, 0.6931472
      %v2799 = vlog2.pop %v2737
      %v2800 = vmul.f32 %v2799, 0.6931472
      %v2801 = vlog2.pop %v2738
      %v2802 = vmul.f32 %v2801, 0.6931472
      %v2803 = vadd.f32 %v2547, %v2740
      %v2804 = vadd.f32 %v2548, %v2742
      %v2805 = vadd.f32 %v2549, %v2744
      %v2806 = vadd.f32 %v2550, %v2746
      %v2807 = vadd.f32 %v2551, %v2748
      %v2808 = vadd.f32 %v2552, %v2750
      %v2809 = vadd.f32 %v2553, %v2752
      %v2810 = vadd.f32 %v2554, %v2754
      %v2811 = vadd.f32 %v2555, %v2756
      %v2812 = vadd.f32 %v2556, %v2758
      %v2813 = vadd.f32 %v2557, %v2760
      %v2814 = vadd.f32 %v2558, %v2762
      %v2815 = vadd.f32 %v2559, %v2764
      %v2816 = vadd.f32 %v2560, %v2766
      %v2817 = vadd.f32 %v2561, %v2768
      %v2818 = vadd.f32 %v2562, %v2770
      %v2819 = vadd.f32 %v2563, %v2772
      %v2820 = vadd.f32 %v2564, %v2774
      %v2821 = vadd.f32 %v2565, %v2776
      %v2822 = vadd.f32 %v2566, %v2778
      %v2823 = vadd.f32 %v2567, %v2780
      %v2824 = vadd.f32 %v2568, %v2782
      %v2825 = vadd.f32 %v2569, %v2784
      %v2826 = vadd.f32 %v2570, %v2786
      %v2827 = vadd.f32 %v2571, %v2788
      %v2828 = vadd.f32 %v2572, %v2790
      %v2829 = vadd.f32 %v2573, %v2792
      %v2830 = vadd.f32 %v2574, %v2794
      %v2831 = vadd.f32 %v2575, %v2796
      %v2832 = vadd.f32 %v2576, %v2798
      %v2833 = vadd.f32 %v2577, %v2800
      %v2834 = vadd.f32 %v2578, %v2802
      %v2835 = vld [vmem:[%s10] sm:$0xff]
      %v2836 = vld [vmem:[%s10 + $0x8] sm:$0xff]
      %v2837 = vld [vmem:[%s10 + $0x10] sm:$0xff]
      %v2838 = vld [vmem:[%s10 + $0x18] sm:$0xff]
      %v2840 = vsel %vm1468, %v2803, 0
      %v2843 = vsel %vm1468, %v2804, 0
      %v2846 = vsel %vm1468, %v2805, 0
      %v2849 = vsel %vm1468, %v2806, 0
      %v2852 = vsel %vm1468, %v2807, 0
      %v2855 = vsel %vm1468, %v2808, 0
      %v2858 = vsel %vm1468, %v2809, 0
      %v2861 = vsel %vm1468, %v2810, 0
      %v2864 = vsel %vm1468, %v2811, 0
      %v2867 = vsel %vm1468, %v2812, 0
      %v2870 = vsel %vm1468, %v2813, 0
      %v2873 = vsel %vm1468, %v2814, 0
      %v2876 = vsel %vm1468, %v2815, 0
      %v2879 = vsel %vm1468, %v2816, 0
      %v2882 = vsel %vm1468, %v2817, 0
      %v2885 = vsel %vm1468, %v2818, 0
      %v2888 = vsel %vm1468, %v2819, 0
      %v2891 = vsel %vm1468, %v2820, 0
      %v2894 = vsel %vm1468, %v2821, 0
      %v2897 = vsel %vm1468, %v2822, 0
      %v2900 = vsel %vm1468, %v2823, 0
      %v2903 = vsel %vm1468, %v2824, 0
      %v2906 = vsel %vm1468, %v2825, 0
      %v2909 = vsel %vm1468, %v2826, 0
      %v2912 = vsel %vm1468, %v2827, 0
      %v2915 = vsel %vm1468, %v2828, 0
      %v2918 = vsel %vm1468, %v2829, 0
      %v2921 = vsel %vm1468, %v2830, 0
      %v2924 = vsel %vm1468, %v2831, 0
      %v2927 = vsel %vm1468, %v2832, 0
      %v2930 = vsel %vm1468, %v2833, 0
      %v2933 = vsel %vm1468, %v2834, 0
      %2935 = vmatprep.subr.mxu0 0.0
      %2936 = vmatpush1.msra.mxu0 %v2835
      %2937 = vmatprep.subr.mxu0 0.0
      %2938 = vmatpush1.msra.mxu0 %v2836
      %2939 = vmatprep.subr.mxu0 0.0
      %2940 = vmatpush1.msra.mxu0 %v2837
      %2941 = vmatprep.subr.mxu0 0.0
      %2942 = vmatpush1.msra.mxu0 %v2838
      %2943 = vmatprep.subr.mxu0 0.0
      %2944 = vmatpush1.msra.mxu0 0.0
      %2945 = vmatprep.subr.mxu0 0.0
      %2946 = vmatpush1.msra.mxu0 0.0
      %2947 = vmatprep.subr.mxu0 0.0
      %2948 = vmatpush1.msra.mxu0 0.0
      %2949 = vmatprep.subr.mxu0 0.0
      %2950 = vmatpush1.msra.mxu0 0.0
      %2951 = vmatprep.subr.mxu0 0.0
      %2952 = vmatpush1.msra.mxu0 0.0
      %2953 = vmatprep.subr.mxu0 0.0
      %2954 = vmatpush1.msra.mxu0 0.0
      %2955 = vmatprep.subr.mxu0 0.0
      %2956 = vmatpush1.msra.mxu0 0.0
      %2957 = vmatprep.subr.mxu0 0.0
      %2958 = vmatpush1.msra.mxu0 0.0
      %2959 = vmatprep.subr.mxu0 0.0
      %2960 = vmatpush1.msra.mxu0 0.0
      %2961 = vmatprep.subr.mxu0 0.0
      %2962 = vmatpush1.msra.mxu0 0.0
      %2963 = vmatprep.subr.mxu0 0.0
      %2964 = vmatpush1.msra.mxu0 0.0
      %2965 = vmatprep.subr.mxu0 0.0
      %2966 = vmatpush1.msra.mxu0 0.0
      %2967 = vmatprep.subr.mxu0 0.0
      %2968 = vmatpush1.msra.mxu0 0.0
      %2969 = vmatprep.subr.mxu0 0.0
      %2970 = vmatpush1.msra.mxu0 0.0
      %2971 = vmatprep.subr.mxu0 0.0
      %2972 = vmatpush1.msra.mxu0 0.0
      %2973 = vmatprep.subr.mxu0 0.0
      %2974 = vmatpush1.msra.mxu0 0.0
      %2975 = vmatprep.subr.mxu0 0.0
      %2976 = vmatpush1.msra.mxu0 0.0
      %2977 = vmatprep.subr.mxu0 0.0
      %2978 = vmatpush1.msra.mxu0 0.0
      %2979 = vmatprep.subr.mxu0 0.0
      %2980 = vmatpush1.msra.mxu0 0.0
      %2981 = vmatprep.subr.mxu0 0.0
      %2982 = vmatpush1.msra.mxu0 0.0
      %2983 = vmatprep.subr.mxu0 0.0
      %2984 = vmatpush1.msra.mxu0 0.0
      %2985 = vmatprep.subr.mxu0 0.0
      %2986 = vmatpush1.msra.mxu0 0.0
      %2987 = vmatprep.subr.mxu0 0.0
      %2988 = vmatpush1.msra.mxu0 0.0
      %2989 = vmatprep.subr.mxu0 0.0
      %2990 = vmatpush1.msra.mxu0 0.0
      %2991 = vmatprep.subr.mxu0 0.0
      %2992 = vmatpush1.msra.mxu0 0.0
      %2993 = vmatprep.subr.mxu0 0.0
      %2994 = vmatpush1.msra.mxu0 0.0
      %2995 = vmatprep.subr.mxu0 0.0
      %2996 = vmatpush1.msra.mxu0 0.0
      %2997 = vmatprep.subr.mxu0 0.0
      %2998 = vmatpush1.msra.mxu0 0.0
      %2999 = vmatprep.mubr.f32.mxu0 0.0
      %3000 = vmatmul.mubr.f32.gmra.mrb[0].mxu0 %v2840
      %v3001 = vpop.f32.mrb[0].mxu0
      %v3002 = vadd.f32 0.0, %v3001
      %v3003 = vpop.f32.mrb[0].mxu0
      %3004 = vmatprep.mubr.f32.mxu0 0.0
      %3005 = vmatmul.mubr.f32.gmra.mrb[0].mxu0 %v2843
      %v3006 = vpop.f32.mrb[0].mxu0
      %v3007 = vadd.f32 0.0, %v3006
      %v3008 = vpop.f32.mrb[0].mxu0
      %3009 = vmatprep.mubr.f32.mxu0 0.0
      %3010 = vmatmul.mubr.f32.gmra.mrb[0].mxu0 %v2846
      %v3011 = vpop.f32.mrb[0].mxu0
      %v3012 = vadd.f32 0.0, %v3011
      %v3013 = vpop.f32.mrb[0].mxu0
      %3014 = vmatprep.mubr.f32.mxu0 0.0
      %3015 = vmatmul.mubr.f32.gmra.mrb[0].mxu0 %v2849
      %v3016 = vpop.f32.mrb[0].mxu0
      %v3017 = vadd.f32 0.0, %v3016
      %v3018 = vpop.f32.mrb[0].mxu0
      %3019 = vmatprep.mubr.f32.mxu0 0.0
      %3020 = vmatmul.mubr.f32.gmra.mrb[0].mxu0 %v2852
      %v3021 = vpop.f32.mrb[0].mxu0
      %v3022 = vadd.f32 0.0, %v3021
      %v3023 = vpop.f32.mrb[0].mxu0
      %3024 = vmatprep.mubr.f32.mxu0 0.0
      %3025 = vmatmul.mubr.f32.gmra.mrb[0].mxu0 %v2855
      %v3026 = vpop.f32.mrb[0].mxu0
      %v3027 = vadd.f32 0.0, %v3026
      %v3028 = vpop.f32.mrb[0].mxu0
      %3029 = vmatprep.mubr.f32.mxu0 0.0
      %3030 = vmatmul.mubr.f32.gmra.mrb[0].mxu0 %v2858
      %v3031 = vpop.f32.mrb[0].mxu0
      %v3032 = vadd.f32 0.0, %v3031
      %v3033 = vpop.f32.mrb[0].mxu0
      %3034 = vmatprep.mubr.f32.mxu0 0.0
      %3035 = vmatmul.mubr.f32.gmra.mrb[0].mxu0 %v2861
      %v3036 = vpop.f32.mrb[0].mxu0
      %v3037 = vadd.f32 0.0, %v3036
      %v3038 = vpop.f32.mrb[0].mxu0
      %3039 = vmatprep.mubr.f32.mxu0 0.0
      %3040 = vmatmul.mubr.f32.gmra.mrb[0].mxu0 %v2864
      %v3041 = vpop.f32.mrb[0].mxu0
      %v3042 = vadd.f32 0.0, %v3041
      %v3043 = vpop.f32.mrb[0].mxu0
      %3044 = vmatprep.mubr.f32.mxu0 0.0
      %3045 = vmatmul.mubr.f32.gmra.mrb[0].mxu0 %v2867
      %v3046 = vpop.f32.mrb[0].mxu0
      %v3047 = vadd.f32 0.0, %v3046
      %v3048 = vpop.f32.mrb[0].mxu0
      %3049 = vmatprep.mubr.f32.mxu0 0.0
      %3050 = vmatmul.mubr.f32.gmra.mrb[0].mxu0 %v2870
      %v3051 = vpop.f32.mrb[0].mxu0
      %v3052 = vadd.f32 0.0, %v3051
      %v3053 = vpop.f32.mrb[0].mxu0
      %3054 = vmatprep.mubr.f32.mxu0 0.0
      %3055 = vmatmul.mubr.f32.gmra.mrb[0].mxu0 %v2873
      %v3056 = vpop.f32.mrb[0].mxu0
      %v3057 = vadd.f32 0.0, %v3056
      %v3058 = vpop.f32.mrb[0].mxu0
      %3059 = vmatprep.mubr.f32.mxu0 0.0
      %3060 = vmatmul.mubr.f32.gmra.mrb[0].mxu0 %v2876
      %v3061 = vpop.f32.mrb[0].mxu0
      %v3062 = vadd.f32 0.0, %v3061
      %v3063 = vpop.f32.mrb[0].mxu0
      %3064 = vmatprep.mubr.f32.mxu0 0.0
      %3065 = vmatmul.mubr.f32.gmra.mrb[0].mxu0 %v2879
      %v3066 = vpop.f32.mrb[0].mxu0
      %v3067 = vadd.f32 0.0, %v3066
      %v3068 = vpop.f32.mrb[0].mxu0
      %3069 = vmatprep.mubr.f32.mxu0 0.0
      %3070 = vmatmul.mubr.f32.gmra.mrb[0].mxu0 %v2882
      %v3071 = vpop.f32.mrb[0].mxu0
      %v3072 = vadd.f32 0.0, %v3071
      %v3073 = vpop.f32.mrb[0].mxu0
      %3074 = vmatprep.mubr.f32.mxu0 0.0
      %3075 = vmatmul.mubr.f32.gmra.mrb[0].mxu0 %v2885
      %v3076 = vpop.f32.mrb[0].mxu0
      %v3077 = vadd.f32 0.0, %v3076
      %v3078 = vpop.f32.mrb[0].mxu0
      %3079 = vmatprep.mubr.f32.mxu0 0.0
      %3080 = vmatmul.mubr.f32.gmra.mrb[0].mxu0 %v2888
      %v3081 = vpop.f32.mrb[0].mxu0
      %v3082 = vadd.f32 0.0, %v3081
      %v3083 = vpop.f32.mrb[0].mxu0
      %3084 = vmatprep.mubr.f32.mxu0 0.0
      %3085 = vmatmul.mubr.f32.gmra.mrb[0].mxu0 %v2891
      %v3086 = vpop.f32.mrb[0].mxu0
      %v3087 = vadd.f32 0.0, %v3086
      %v3088 = vpop.f32.mrb[0].mxu0
      %3089 = vmatprep.mubr.f32.mxu0 0.0
      %3090 = vmatmul.mubr.f32.gmra.mrb[0].mxu0 %v2894
      %v3091 = vpop.f32.mrb[0].mxu0
      %v3092 = vadd.f32 0.0, %v3091
      %v3093 = vpop.f32.mrb[0].mxu0
      %3094 = vmatprep.mubr.f32.mxu0 0.0
      %3095 = vmatmul.mubr.f32.gmra.mrb[0].mxu0 %v2897
      %v3096 = vpop.f32.mrb[0].mxu0
      %v3097 = vadd.f32 0.0, %v3096
      %v3098 = vpop.f32.mrb[0].mxu0
      %3099 = vmatprep.mubr.f32.mxu0 0.0
      %3100 = vmatmul.mubr.f32.gmra.mrb[0].mxu0 %v2900
      %v3101 = vpop.f32.mrb[0].mxu0
      %v3102 = vadd.f32 0.0, %v3101
      %v3103 = vpop.f32.mrb[0].mxu0
      %3104 = vmatprep.mubr.f32.mxu0 0.0
      %3105 = vmatmul.mubr.f32.gmra.mrb[0].mxu0 %v2903
      %v3106 = vpop.f32.mrb[0].mxu0
      %v3107 = vadd.f32 0.0, %v3106
      %v3108 = vpop.f32.mrb[0].mxu0
      %3109 = vmatprep.mubr.f32.mxu0 0.0
      %3110 = vmatmul.mubr.f32.gmra.mrb[0].mxu0 %v2906
      %v3111 = vpop.f32.mrb[0].mxu0
      %v3112 = vadd.f32 0.0, %v3111
      %v3113 = vpop.f32.mrb[0].mxu0
      %3114 = vmatprep.mubr.f32.mxu0 0.0
      %3115 = vmatmul.mubr.f32.gmra.mrb[0].mxu0 %v2909
      %v3116 = vpop.f32.mrb[0].mxu0
      %v3117 = vadd.f32 0.0, %v3116
      %v3118 = vpop.f32.mrb[0].mxu0
      %3119 = vmatprep.mubr.f32.mxu0 0.0
      %3120 = vmatmul.mubr.f32.gmra.mrb[0].mxu0 %v2912
      %v3121 = vpop.f32.mrb[0].mxu0
      %v3122 = vadd.f32 0.0, %v3121
      %v3123 = vpop.f32.mrb[0].mxu0
      %3124 = vmatprep.mubr.f32.mxu0 0.0
      %3125 = vmatmul.mubr.f32.gmra.mrb[0].mxu0 %v2915
      %v3126 = vpop.f32.mrb[0].mxu0
      %v3127 = vadd.f32 0.0, %v3126
      %v3128 = vpop.f32.mrb[0].mxu0
      %3129 = vmatprep.mubr.f32.mxu0 0.0
      %3130 = vmatmul.mubr.f32.gmra.mrb[0].mxu0 %v2918
      %v3131 = vpop.f32.mrb[0].mxu0
      %v3132 = vadd.f32 0.0, %v3131
      %v3133 = vpop.f32.mrb[0].mxu0
      %3134 = vmatprep.mubr.f32.mxu0 0.0
      %3135 = vmatmul.mubr.f32.gmra.mrb[0].mxu0 %v2921
      %v3136 = vpop.f32.mrb[0].mxu0
      %v3137 = vadd.f32 0.0, %v3136
      %v3138 = vpop.f32.mrb[0].mxu0
      %3139 = vmatprep.mubr.f32.mxu0 0.0
      %3140 = vmatmul.mubr.f32.gmra.mrb[0].mxu0 %v2924
      %v3141 = vpop.f32.mrb[0].mxu0
      %v3142 = vadd.f32 0.0, %v3141
      %v3143 = vpop.f32.mrb[0].mxu0
      %3144 = vmatprep.mubr.f32.mxu0 0.0
      %3145 = vmatmul.mubr.f32.gmra.mrb[0].mxu0 %v2927
      %v3146 = vpop.f32.mrb[0].mxu0
      %v3147 = vadd.f32 0.0, %v3146
      %v3148 = vpop.f32.mrb[0].mxu0
      %3149 = vmatprep.mubr.f32.mxu0 0.0
      %3150 = vmatmul.mubr.f32.gmra.mrb[0].mxu0 %v2930
      %v3151 = vpop.f32.mrb[0].mxu0
      %v3152 = vadd.f32 0.0, %v3151
      %v3153 = vpop.f32.mrb[0].mxu0
      %3154 = vmatprep.mubr.f32.mxu0 0.0
      %3155 = vmatmul.mubr.f32.gmra.mrb[0].mxu0 %v2933
      %v3156 = vpop.f32.mrb[0].mxu0
      %v3157 = vadd.f32 0.0, %v3156
      %v3158 = vpop.f32.mrb[0].mxu0
      %3159 = vdwg.mxu0
      %v3160 = vmul.f32 %v2803, %v1986
      %v3161 = vmul.f32 %v2804, %v1987
      %v3162 = vmul.f32 %v2805, %v1988
      %v3163 = vmul.f32 %v2806, %v1989
      %v3164 = vmul.f32 %v2807, %v1990
      %v3165 = vmul.f32 %v2808, %v1991
      %v3166 = vmul.f32 %v2809, %v1992
      %v3167 = vmul.f32 %v2810, %v1993
      %v3168 = vmul.f32 %v2811, %v1994
      %v3169 = vmul.f32 %v2812, %v1995
      %v3170 = vmul.f32 %v2813, %v1996
      %v3171 = vmul.f32 %v2814, %v1997
      %v3172 = vmul.f32 %v2815, %v1998
      %v3173 = vmul.f32 %v2816, %v1999
      %v3174 = vmul.f32 %v2817, %v2000
      %v3175 = vmul.f32 %v2818, %v2001
      %v3176 = vmul.f32 %v2819, %v2002
      %v3177 = vmul.f32 %v2820, %v2003
      %v3178 = vmul.f32 %v2821, %v2004
      %v3179 = vmul.f32 %v2822, %v2005
      %v3180 = vmul.f32 %v2823, %v2006
      %v3181 = vmul.f32 %v2824, %v2007
      %v3182 = vmul.f32 %v2825, %v2008
      %v3183 = vmul.f32 %v2826, %v2009
      %v3184 = vmul.f32 %v2827, %v2010
      %v3185 = vmul.f32 %v2828, %v2011
      %v3186 = vmul.f32 %v2829, %v2012
      %v3187 = vmul.f32 %v2830, %v2013
      %v3188 = vmul.f32 %v2831, %v2014
      %v3189 = vmul.f32 %v2832, %v2015
      %v3190 = vmul.f32 %v2833, %v2016
      %v3191 = vmul.f32 %v2834, %v2017
      %v3193 = vsel %vm1468, %v3160, 0
      %v3196 = vsel %vm1468, %v3161, 0
      %v3199 = vsel %vm1468, %v3162, 0
      %v3202 = vsel %vm1468, %v3163, 0
      %v3205 = vsel %vm1468, %v3164, 0
      %v3208 = vsel %vm1468, %v3165, 0
      %v3211 = vsel %vm1468, %v3166, 0
      %v3214 = vsel %vm1468, %v3167, 0
      %v3217 = vsel %vm1468, %v3168, 0
      %v3220 = vsel %vm1468, %v3169, 0
      %v3223 = vsel %vm1468, %v3170, 0
      %v3226 = vsel %vm1468, %v3171, 0
      %v3229 = vsel %vm1468, %v3172, 0
      %v3232 = vsel %vm1468, %v3173, 0
      %v3235 = vsel %vm1468, %v3174, 0
      %v3238 = vsel %vm1468, %v3175, 0
      %v3241 = vsel %vm1468, %v3176, 0
      %v3244 = vsel %vm1468, %v3177, 0
      %v3247 = vsel %vm1468, %v3178, 0
      %v3250 = vsel %vm1468, %v3179, 0
      %v3253 = vsel %vm1468, %v3180, 0
      %v3256 = vsel %vm1468, %v3181, 0
      %v3259 = vsel %vm1468, %v3182, 0
      %v3262 = vsel %vm1468, %v3183, 0
      %v3265 = vsel %vm1468, %v3184, 0
      %v3268 = vsel %vm1468, %v3185, 0
      %v3271 = vsel %vm1468, %v3186, 0
      %v3274 = vsel %vm1468, %v3187, 0
      %v3277 = vsel %vm1468, %v3188, 0
      %v3280 = vsel %vm1468, %v3189, 0
      %v3283 = vsel %vm1468, %v3190, 0
      %v3286 = vsel %vm1468, %v3191, 0
      %3288 = vmatprep.subr.mxu0 0.0
      %3289 = vmatpush1.msra.mxu0 %v2835
      %3290 = vmatprep.subr.mxu0 0.0
      %3291 = vmatpush1.msra.mxu0 %v2836
      %3292 = vmatprep.subr.mxu0 0.0
      %3293 = vmatpush1.msra.mxu0 %v2837
      %3294 = vmatprep.subr.mxu0 0.0
      %3295 = vmatpush1.msra.mxu0 %v2838
      %3296 = vmatprep.subr.mxu0 0.0
      %3297 = vmatpush1.msra.mxu0 0.0
      %3298 = vmatprep.subr.mxu0 0.0
      %3299 = vmatpush1.msra.mxu0 0.0
      %3300 = vmatprep.subr.mxu0 0.0
      %3301 = vmatpush1.msra.mxu0 0.0
      %3302 = vmatprep.subr.mxu0 0.0
      %3303 = vmatpush1.msra.mxu0 0.0
      %3304 = vmatprep.subr.mxu0 0.0
      %3305 = vmatpush1.msra.mxu0 0.0
      %3306 = vmatprep.subr.mxu0 0.0
      %3307 = vmatpush1.msra.mxu0 0.0
      %3308 = vmatprep.subr.mxu0 0.0
      %3309 = vmatpush1.msra.mxu0 0.0
      %3310 = vmatprep.subr.mxu0 0.0
      %3311 = vmatpush1.msra.mxu0 0.0
      %3312 = vmatprep.subr.mxu0 0.0
      %3313 = vmatpush1.msra.mxu0 0.0
      %3314 = vmatprep.subr.mxu0 0.0
      %3315 = vmatpush1.msra.mxu0 0.0
      %3316 = vmatprep.subr.mxu0 0.0
      %3317 = vmatpush1.msra.mxu0 0.0
      %3318 = vmatprep.subr.mxu0 0.0
      %3319 = vmatpush1.msra.mxu0 0.0
      %3320 = vmatprep.subr.mxu0 0.0
      %3321 = vmatpush1.msra.mxu0 0.0
      %3322 = vmatprep.subr.mxu0 0.0
      %3323 = vmatpush1.msra.mxu0 0.0
      %3324 = vmatprep.subr.mxu0 0.0
      %3325 = vmatpush1.msra.mxu0 0.0
      %3326 = vmatprep.subr.mxu0 0.0
      %3327 = vmatpush1.msra.mxu0 0.0
      %3328 = vmatprep.subr.mxu0 0.0
      %3329 = vmatpush1.msra.mxu0 0.0
      %3330 = vmatprep.subr.mxu0 0.0
      %3331 = vmatpush1.msra.mxu0 0.0
      %3332 = vmatprep.subr.mxu0 0.0
      %3333 = vmatpush1.msra.mxu0 0.0
      %3334 = vmatprep.subr.mxu0 0.0
      %3335 = vmatpush1.msra.mxu0 0.0
      %3336 = vmatprep.subr.mxu0 0.0
      %3337 = vmatpush1.msra.mxu0 0.0
      %3338 = vmatprep.subr.mxu0 0.0
      %3339 = vmatpush1.msra.mxu0 0.0
      %3340 = vmatprep.subr.mxu0 0.0
      %3341 = vmatpush1.msra.mxu0 0.0
      %3342 = vmatprep.subr.mxu0 0.0
      %3343 = vmatpush1.msra.mxu0 0.0
      %3344 = vmatprep.subr.mxu0 0.0
      %3345 = vmatpush1.msra.mxu0 0.0
      %3346 = vmatprep.subr.mxu0 0.0
      %3347 = vmatpush1.msra.mxu0 0.0
      %3348 = vmatprep.subr.mxu0 0.0
      %3349 = vmatpush1.msra.mxu0 0.0
      %3350 = vmatprep.subr.mxu0 0.0
      %3351 = vmatpush1.msra.mxu0 0.0
      %3352 = vmatprep.mubr.f32.mxu0 0.0
      %3353 = vmatmul.mubr.f32.gmra.mrb[0].mxu0 %v3193
      %v3354 = vpop.f32.mrb[0].mxu0
      %v3355 = vadd.f32 0.0, %v3354
      %v3356 = vpop.f32.mrb[0].mxu0
      %3357 = vmatprep.mubr.f32.mxu0 0.0
      %3358 = vmatmul.mubr.f32.gmra.mrb[0].mxu0 %v3196
      %v3359 = vpop.f32.mrb[0].mxu0
      %v3360 = vadd.f32 0.0, %v3359
      %v3361 = vpop.f32.mrb[0].mxu0
      %3362 = vmatprep.mubr.f32.mxu0 0.0
      %3363 = vmatmul.mubr.f32.gmra.mrb[0].mxu0 %v3199
      %v3364 = vpop.f32.mrb[0].mxu0
      %v3365 = vadd.f32 0.0, %v3364
      %v3366 = vpop.f32.mrb[0].mxu0
      %3367 = vmatprep.mubr.f32.mxu0 0.0
      %3368 = vmatmul.mubr.f32.gmra.mrb[0].mxu0 %v3202
      %v3369 = vpop.f32.mrb[0].mxu0
      %v3370 = vadd.f32 0.0, %v3369
      %v3371 = vpop.f32.mrb[0].mxu0
      %3372 = vmatprep.mubr.f32.mxu0 0.0
      %3373 = vmatmul.mubr.f32.gmra.mrb[0].mxu0 %v3205
      %v3374 = vpop.f32.mrb[0].mxu0
      %v3375 = vadd.f32 0.0, %v3374
      %v3376 = vpop.f32.mrb[0].mxu0
      %3377 = vmatprep.mubr.f32.mxu0 0.0
      %3378 = vmatmul.mubr.f32.gmra.mrb[0].mxu0 %v3208
      %v3379 = vpop.f32.mrb[0].mxu0
      %v3380 = vadd.f32 0.0, %v3379
      %v3381 = vpop.f32.mrb[0].mxu0
      %3382 = vmatprep.mubr.f32.mxu0 0.0
      %3383 = vmatmul.mubr.f32.gmra.mrb[0].mxu0 %v3211
      %v3384 = vpop.f32.mrb[0].mxu0
      %v3385 = vadd.f32 0.0, %v3384
      %v3386 = vpop.f32.mrb[0].mxu0
      %3387 = vmatprep.mubr.f32.mxu0 0.0
      %3388 = vmatmul.mubr.f32.gmra.mrb[0].mxu0 %v3214
      %v3389 = vpop.f32.mrb[0].mxu0
      %v3390 = vadd.f32 0.0, %v3389
      %v3391 = vpop.f32.mrb[0].mxu0
      %3392 = vmatprep.mubr.f32.mxu0 0.0
      %3393 = vmatmul.mubr.f32.gmra.mrb[0].mxu0 %v3217
      %v3394 = vpop.f32.mrb[0].mxu0
      %v3395 = vadd.f32 0.0, %v3394
      %v3396 = vpop.f32.mrb[0].mxu0
      %3397 = vmatprep.mubr.f32.mxu0 0.0
      %3398 = vmatmul.mubr.f32.gmra.mrb[0].mxu0 %v3220
      %v3399 = vpop.f32.mrb[0].mxu0
      %v3400 = vadd.f32 0.0, %v3399
      %v3401 = vpop.f32.mrb[0].mxu0
      %3402 = vmatprep.mubr.f32.mxu0 0.0
      %3403 = vmatmul.mubr.f32.gmra.mrb[0].mxu0 %v3223
      %v3404 = vpop.f32.mrb[0].mxu0
      %v3405 = vadd.f32 0.0, %v3404
      %v3406 = vpop.f32.mrb[0].mxu0
      %3407 = vmatprep.mubr.f32.mxu0 0.0
      %3408 = vmatmul.mubr.f32.gmra.mrb[0].mxu0 %v3226
      %v3409 = vpop.f32.mrb[0].mxu0
      %v3410 = vadd.f32 0.0, %v3409
      %v3411 = vpop.f32.mrb[0].mxu0
      %3412 = vmatprep.mubr.f32.mxu0 0.0
      %3413 = vmatmul.mubr.f32.gmra.mrb[0].mxu0 %v3229
      %v3414 = vpop.f32.mrb[0].mxu0
      %v3415 = vadd.f32 0.0, %v3414
      %v3416 = vpop.f32.mrb[0].mxu0
      %3417 = vmatprep.mubr.f32.mxu0 0.0
      %3418 = vmatmul.mubr.f32.gmra.mrb[0].mxu0 %v3232
      %v3419 = vpop.f32.mrb[0].mxu0
      %v3420 = vadd.f32 0.0, %v3419
      %v3421 = vpop.f32.mrb[0].mxu0
      %3422 = vmatprep.mubr.f32.mxu0 0.0
      %3423 = vmatmul.mubr.f32.gmra.mrb[0].mxu0 %v3235
      %v3424 = vpop.f32.mrb[0].mxu0
      %v3425 = vadd.f32 0.0, %v3424
      %v3426 = vpop.f32.mrb[0].mxu0
      %3427 = vmatprep.mubr.f32.mxu0 0.0
      %3428 = vmatmul.mubr.f32.gmra.mrb[0].mxu0 %v3238
      %v3429 = vpop.f32.mrb[0].mxu0
      %v3430 = vadd.f32 0.0, %v3429
      %v3431 = vpop.f32.mrb[0].mxu0
      %3432 = vmatprep.mubr.f32.mxu0 0.0
      %3433 = vmatmul.mubr.f32.gmra.mrb[0].mxu0 %v3241
      %v3434 = vpop.f32.mrb[0].mxu0
      %v3435 = vadd.f32 0.0, %v3434
      %v3436 = vpop.f32.mrb[0].mxu0
      %3437 = vmatprep.mubr.f32.mxu0 0.0
      %3438 = vmatmul.mubr.f32.gmra.mrb[0].mxu0 %v3244
      %v3439 = vpop.f32.mrb[0].mxu0
      %v3440 = vadd.f32 0.0, %v3439
      %v3441 = vpop.f32.mrb[0].mxu0
      %3442 = vmatprep.mubr.f32.mxu0 0.0
      %3443 = vmatmul.mubr.f32.gmra.mrb[0].mxu0 %v3247
      %v3444 = vpop.f32.mrb[0].mxu0
      %v3445 = vadd.f32 0.0, %v3444
      %v3446 = vpop.f32.mrb[0].mxu0
      %3447 = vmatprep.mubr.f32.mxu0 0.0
      %3448 = vmatmul.mubr.f32.gmra.mrb[0].mxu0 %v3250
      %v3449 = vpop.f32.mrb[0].mxu0
      %v3450 = vadd.f32 0.0, %v3449
      %v3451 = vpop.f32.mrb[0].mxu0
      %3452 = vmatprep.mubr.f32.mxu0 0.0
      %3453 = vmatmul.mubr.f32.gmra.mrb[0].mxu0 %v3253
      %v3454 = vpop.f32.mrb[0].mxu0
      %v3455 = vadd.f32 0.0, %v3454
      %v3456 = vpop.f32.mrb[0].mxu0
      %3457 = vmatprep.mubr.f32.mxu0 0.0
      %3458 = vmatmul.mubr.f32.gmra.mrb[0].mxu0 %v3256
      %v3459 = vpop.f32.mrb[0].mxu0
      %v3460 = vadd.f32 0.0, %v3459
      %v3461 = vpop.f32.mrb[0].mxu0
      %3462 = vmatprep.mubr.f32.mxu0 0.0
      %3463 = vmatmul.mubr.f32.gmra.mrb[0].mxu0 %v3259
      %v3464 = vpop.f32.mrb[0].mxu0
      %v3465 = vadd.f32 0.0, %v3464
      %v3466 = vpop.f32.mrb[0].mxu0
      %3467 = vmatprep.mubr.f32.mxu0 0.0
      %3468 = vmatmul.mubr.f32.gmra.mrb[0].mxu0 %v3262
      %v3469 = vpop.f32.mrb[0].mxu0
      %v3470 = vadd.f32 0.0, %v3469
      %v3471 = vpop.f32.mrb[0].mxu0
      %3472 = vmatprep.mubr.f32.mxu0 0.0
      %3473 = vmatmul.mubr.f32.gmra.mrb[0].mxu0 %v3265
      %v3474 = vpop.f32.mrb[0].mxu0
      %v3475 = vadd.f32 0.0, %v3474
      %v3476 = vpop.f32.mrb[0].mxu0
      %3477 = vmatprep.mubr.f32.mxu0 0.0
      %3478 = vmatmul.mubr.f32.gmra.mrb[0].mxu0 %v3268
      %v3479 = vpop.f32.mrb[0].mxu0
      %v3480 = vadd.f32 0.0, %v3479
      %v3481 = vpop.f32.mrb[0].mxu0
      %3482 = vmatprep.mubr.f32.mxu0 0.0
      %3483 = vmatmul.mubr.f32.gmra.mrb[0].mxu0 %v3271
      %v3484 = vpop.f32.mrb[0].mxu0
      %v3485 = vadd.f32 0.0, %v3484
      %v3486 = vpop.f32.mrb[0].mxu0
      %3487 = vmatprep.mubr.f32.mxu0 0.0
      %3488 = vmatmul.mubr.f32.gmra.mrb[0].mxu0 %v3274
      %v3489 = vpop.f32.mrb[0].mxu0
      %v3490 = vadd.f32 0.0, %v3489
      %v3491 = vpop.f32.mrb[0].mxu0
      %3492 = vmatprep.mubr.f32.mxu0 0.0
      %3493 = vmatmul.mubr.f32.gmra.mrb[0].mxu0 %v3277
      %v3494 = vpop.f32.mrb[0].mxu0
      %v3495 = vadd.f32 0.0, %v3494
      %v3496 = vpop.f32.mrb[0].mxu0
      %3497 = vmatprep.mubr.f32.mxu0 0.0
      %3498 = vmatmul.mubr.f32.gmra.mrb[0].mxu0 %v3280
      %v3499 = vpop.f32.mrb[0].mxu0
      %v3500 = vadd.f32 0.0, %v3499
      %v3501 = vpop.f32.mrb[0].mxu0
      %3502 = vmatprep.mubr.f32.mxu0 0.0
      %3503 = vmatmul.mubr.f32.gmra.mrb[0].mxu0 %v3283
      %v3504 = vpop.f32.mrb[0].mxu0
      %v3505 = vadd.f32 0.0, %v3504
      %v3506 = vpop.f32.mrb[0].mxu0
      %3507 = vmatprep.mubr.f32.mxu0 0.0
      %3508 = vmatmul.mubr.f32.gmra.mrb[0].mxu0 %v3286
      %v3509 = vpop.f32.mrb[0].mxu0
      %v3510 = vadd.f32 0.0, %v3509
      %v3511 = vpop.f32.mrb[0].mxu0
      %3512 = vdwg.mxu0
      %v3513 = vld [vmem:[%s9] sm:$0x1]
      %v3515 = vlaneseq
      %v3516 = vshrl.u32 %v3515, 7
      %v3517 = vsub.s32 0, %v3516
      %v3518 = vrot.slane %v3513, %v3517
      %v3520 = vmul.f32 %v3002, %v3518
      %v3521 = vmul.f32 %v3007, %v3518
      %v3522 = vmul.f32 %v3012, %v3518
      %v3523 = vmul.f32 %v3017, %v3518
      %v3524 = vmul.f32 %v3022, %v3518
      %v3525 = vmul.f32 %v3027, %v3518
      %v3526 = vmul.f32 %v3032, %v3518
      %v3527 = vmul.f32 %v3037, %v3518
      %v3528 = vmul.f32 %v3042, %v3518
      %v3529 = vmul.f32 %v3047, %v3518
      %v3530 = vmul.f32 %v3052, %v3518
      %v3531 = vmul.f32 %v3057, %v3518
      %v3532 = vmul.f32 %v3062, %v3518
      %v3533 = vmul.f32 %v3067, %v3518
      %v3534 = vmul.f32 %v3072, %v3518
      %v3535 = vmul.f32 %v3077, %v3518
      %v3536 = vmul.f32 %v3082, %v3518
      %v3537 = vmul.f32 %v3087, %v3518
      %v3538 = vmul.f32 %v3092, %v3518
      %v3539 = vmul.f32 %v3097, %v3518
      %v3540 = vmul.f32 %v3102, %v3518
      %v3541 = vmul.f32 %v3107, %v3518
      %v3542 = vmul.f32 %v3112, %v3518
      %v3543 = vmul.f32 %v3117, %v3518
      %v3544 = vmul.f32 %v3122, %v3518
      %v3545 = vmul.f32 %v3127, %v3518
      %v3546 = vmul.f32 %v3132, %v3518
      %v3547 = vmul.f32 %v3137, %v3518
      %v3548 = vmul.f32 %v3142, %v3518
      %v3549 = vmul.f32 %v3147, %v3518
      %v3550 = vmul.f32 %v3152, %v3518
      %v3551 = vmul.f32 %v3157, %v3518
      %v3552 = vmul.f32 %v3520, 1.442695
      %v3553 = vpow.pop %v3552
      %v3554 = vmul.f32 %v3521, 1.442695
      %v3555 = vpow.pop %v3554
      %v3556 = vmul.f32 %v3522, 1.442695
      %v3557 = vpow.pop %v3556
      %v3558 = vmul.f32 %v3523, 1.442695
      %v3559 = vpow.pop %v3558
      %v3560 = vmul.f32 %v3524, 1.442695
      %v3561 = vpow.pop %v3560
      %v3562 = vmul.f32 %v3525, 1.442695
      %v3563 = vpow.pop %v3562
      %v3564 = vmul.f32 %v3526, 1.442695
      %v3565 = vpow.pop %v3564
      %v3566 = vmul.f32 %v3527, 1.442695
      %v3567 = vpow.pop %v3566
      %v3568 = vmul.f32 %v3528, 1.442695
      %v3569 = vpow.pop %v3568
      %v3570 = vmul.f32 %v3529, 1.442695
      %v3571 = vpow.pop %v3570
      %v3572 = vmul.f32 %v3530, 1.442695
      %v3573 = vpow.pop %v3572
      %v3574 = vmul.f32 %v3531, 1.442695
      %v3575 = vpow.pop %v3574
      %v3576 = vmul.f32 %v3532, 1.442695
      %v3577 = vpow.pop %v3576
      %v3578 = vmul.f32 %v3533, 1.442695
      %v3579 = vpow.pop %v3578
      %v3580 = vmul.f32 %v3534, 1.442695
      %v3581 = vpow.pop %v3580
      %v3582 = vmul.f32 %v3535, 1.442695
      %v3583 = vpow.pop %v3582
      %v3584 = vmul.f32 %v3536, 1.442695
      %v3585 = vpow.pop %v3584
      %v3586 = vmul.f32 %v3537, 1.442695
      %v3587 = vpow.pop %v3586
      %v3588 = vmul.f32 %v3538, 1.442695
      %v3589 = vpow.pop %v3588
      %v3590 = vmul.f32 %v3539, 1.442695
      %v3591 = vpow.pop %v3590
      %v3592 = vmul.f32 %v3540, 1.442695
      %v3593 = vpow.pop %v3592
      %v3594 = vmul.f32 %v3541, 1.442695
      %v3595 = vpow.pop %v3594
      %v3596 = vmul.f32 %v3542, 1.442695
      %v3597 = vpow.pop %v3596
      %v3598 = vmul.f32 %v3543, 1.442695
      %v3599 = vpow.pop %v3598
      %v3600 = vmul.f32 %v3544, 1.442695
      %v3601 = vpow.pop %v3600
      %v3602 = vmul.f32 %v3545, 1.442695
      %v3603 = vpow.pop %v3602
      %v3604 = vmul.f32 %v3546, 1.442695
      %v3605 = vpow.pop %v3604
      %v3606 = vmul.f32 %v3547, 1.442695
      %v3607 = vpow.pop %v3606
      %v3608 = vmul.f32 %v3548, 1.442695
      %v3609 = vpow.pop %v3608
      %v3610 = vmul.f32 %v3549, 1.442695
      %v3611 = vpow.pop %v3610
      %v3612 = vmul.f32 %v3550, 1.442695
      %v3613 = vpow.pop %v3612
      %v3614 = vmul.f32 %v3551, 1.442695
      %v3615 = vpow.pop %v3614
      %3616 = vst [vmem:[#allocation3] sm:$0xff] %v3553
      %3617 = vst [vmem:[#allocation3 + $0x8] sm:$0xff] %v3555
      %3618 = vst [vmem:[#allocation3 + $0x10] sm:$0xff] %v3557
      %3619 = vst [vmem:[#allocation3 + $0x18] sm:$0xff] %v3559
      %3620 = vst [vmem:[#allocation3 + $0x20] sm:$0xff] %v3561
      %3621 = vst [vmem:[#allocation3 + $0x28] sm:$0xff] %v3563
      %3622 = vst [vmem:[#allocation3 + $0x30] sm:$0xff] %v3565
      %3623 = vst [vmem:[#allocation3 + $0x38] sm:$0xff] %v3567
      %3624 = vst [vmem:[#allocation3 + $0x40] sm:$0xff] %v3569
      %3625 = vst [vmem:[#allocation3 + $0x48] sm:$0xff] %v3571
      %3626 = vst [vmem:[#allocation3 + $0x50] sm:$0xff] %v3573
      %3627 = vst [vmem:[#allocation3 + $0x58] sm:$0xff] %v3575
      %3628 = vst [vmem:[#allocation3 + $0x60] sm:$0xff] %v3577
      %3629 = vst [vmem:[#allocation3 + $0x68] sm:$0xff] %v3579
      %3630 = vst [vmem:[#allocation3 + $0x70] sm:$0xff] %v3581
      %3631 = vst [vmem:[#allocation3 + $0x78] sm:$0xff] %v3583
      %3632 = vst [vmem:[#allocation3 + $0x80] sm:$0xff] %v3585
      %3633 = vst [vmem:[#allocation3 + $0x88] sm:$0xff] %v3587
      %3634 = vst [vmem:[#allocation3 + $0x90] sm:$0xff] %v3589
      %3635 = vst [vmem:[#allocation3 + $0x98] sm:$0xff] %v3591
      %3636 = vst [vmem:[#allocation3 + $0xa0] sm:$0xff] %v3593
      %3637 = vst [vmem:[#allocation3 + $0xa8] sm:$0xff] %v3595
      %3638 = vst [vmem:[#allocation3 + $0xb0] sm:$0xff] %v3597
      %3639 = vst [vmem:[#allocation3 + $0xb8] sm:$0xff] %v3599
      %3640 = vst [vmem:[#allocation3 + $0xc0] sm:$0xff] %v3601
      %3641 = vst [vmem:[#allocation3 + $0xc8] sm:$0xff] %v3603
      %3642 = vst [vmem:[#allocation3 + $0xd0] sm:$0xff] %v3605
      %3643 = vst [vmem:[#allocation3 + $0xd8] sm:$0xff] %v3607
      %3644 = vst [vmem:[#allocation3 + $0xe0] sm:$0xff] %v3609
      %3645 = vst [vmem:[#allocation3 + $0xe8] sm:$0xff] %v3611
      %3646 = vst [vmem:[#allocation3 + $0xf0] sm:$0xff] %v3613
      %3647 = vst [vmem:[#allocation3 + $0xf8] sm:$0xff] %v3615
      %v3648 = vmul.f32 %v3355, %v2157
      %v3649 = vmul.f32 %v3360, %v2161
      %v3650 = vmul.f32 %v3365, %v2167
      %v3651 = vmul.f32 %v3370, %v2171
      %v3652 = vmul.f32 %v3375, %v2177
      %v3653 = vmul.f32 %v3380, %v2181
      %v3654 = vmul.f32 %v3385, %v2187
      %v3655 = vmul.f32 %v3390, %v2191
      %v3656 = vmul.f32 %v3395, %v2197
      %v3657 = vmul.f32 %v3400, %v2201
      %v3658 = vmul.f32 %v3405, %v2207
      %v3659 = vmul.f32 %v3410, %v2211
      %v3660 = vmul.f32 %v3415, %v2217
      %v3661 = vmul.f32 %v3420, %v2221
      %v3662 = vmul.f32 %v3425, %v2227
      %v3663 = vmul.f32 %v3430, %v2231
      %v3664 = vmul.f32 %v3435, %v2237
      %v3665 = vmul.f32 %v3440, %v2241
      %v3666 = vmul.f32 %v3445, %v2247
      %v3667 = vmul.f32 %v3450, %v2251
      %v3668 = vmul.f32 %v3455, %v2257
      %v3669 = vmul.f32 %v3460, %v2261
      %v3670 = vmul.f32 %v3465, %v2267
      %v3671 = vmul.f32 %v3470, %v2271
      %v3672 = vmul.f32 %v3475, %v2277
      %v3673 = vmul.f32 %v3480, %v2281
      %v3674 = vmul.f32 %v3485, %v2287
      %v3675 = vmul.f32 %v3490, %v2291
      %v3676 = vmul.f32 %v3495, %v2297
      %v3677 = vmul.f32 %v3500, %v2301
      %v3678 = vmul.f32 %v3505, %v2307
      %v3679 = vmul.f32 %v3510, %v2311
      %3680 = vst [vmem:[#allocation4] sm:$0xff] %v3648
      %3681 = vst [vmem:[#allocation4 + $0x8] sm:$0xff] %v3649
      %3682 = vst [vmem:[#allocation4 + $0x10] sm:$0xff] %v3650
      %3683 = vst [vmem:[#allocation4 + $0x18] sm:$0xff] %v3651
      %3684 = vst [vmem:[#allocation4 + $0x20] sm:$0xff] %v3652
      %3685 = vst [vmem:[#allocation4 + $0x28] sm:$0xff] %v3653
      %3686 = vst [vmem:[#allocation4 + $0x30] sm:$0xff] %v3654
      %3687 = vst [vmem:[#allocation4 + $0x38] sm:$0xff] %v3655
      %3688 = vst [vmem:[#allocation4 + $0x40] sm:$0xff] %v3656
      %3689 = vst [vmem:[#allocation4 + $0x48] sm:$0xff] %v3657
      %3690 = vst [vmem:[#allocation4 + $0x50] sm:$0xff] %v3658
      %3691 = vst [vmem:[#allocation4 + $0x58] sm:$0xff] %v3659
      %3692 = vst [vmem:[#allocation4 + $0x60] sm:$0xff] %v3660
      %3693 = vst [vmem:[#allocation4 + $0x68] sm:$0xff] %v3661
      %3694 = vst [vmem:[#allocation4 + $0x70] sm:$0xff] %v3662
      %3695 = vst [vmem:[#allocation4 + $0x78] sm:$0xff] %v3663
      %3696 = vst [vmem:[#allocation4 + $0x80] sm:$0xff] %v3664
      %3697 = vst [vmem:[#allocation4 + $0x88] sm:$0xff] %v3665
      %3698 = vst [vmem:[#allocation4 + $0x90] sm:$0xff] %v3666
      %3699 = vst [vmem:[#allocation4 + $0x98] sm:$0xff] %v3667
      %3700 = vst [vmem:[#allocation4 + $0xa0] sm:$0xff] %v3668
      %3701 = vst [vmem:[#allocation4 + $0xa8] sm:$0xff] %v3669
      %3702 = vst [vmem:[#allocation4 + $0xb0] sm:$0xff] %v3670
      %3703 = vst [vmem:[#allocation4 + $0xb8] sm:$0xff] %v3671
      %3704 = vst [vmem:[#allocation4 + $0xc0] sm:$0xff] %v3672
      %3705 = vst [vmem:[#allocation4 + $0xc8] sm:$0xff] %v3673
      %3706 = vst [vmem:[#allocation4 + $0xd0] sm:$0xff] %v3674
      %3707 = vst [vmem:[#allocation4 + $0xd8] sm:$0xff] %v3675
      %3708 = vst [vmem:[#allocation4 + $0xe0] sm:$0xff] %v3676
      %3709 = vst [vmem:[#allocation4 + $0xe8] sm:$0xff] %v3677
      %3710 = vst [vmem:[#allocation4 + $0xf0] sm:$0xff] %v3678
      %3711 = vst [vmem:[#allocation4 + $0xf8] sm:$0xff] %v3679
      %v3712 = vld [vmem:[#allocation3] sm:$0xff]
      %v3713 = vld [vmem:[#allocation3 + $0x8] sm:$0xff]
      %v3714 = vmul.f32 %v3712, 0.0
      %v3715 = vmul.f32 %v3713, 0.0
      %v3716 = vld [vmem:[#allocation4] sm:$0xff]
      %v3717 = vld [vmem:[#allocation4 + $0x8] sm:$0xff]
      %v3718 = vadd.f32 %v3714, %v3716
      %v3719 = vadd.f32 %v3715, %v3717
      %3720 = vst [vmem:[#allocation5] sm:$0xff] %v3718
      %3721 = vst [vmem:[#allocation5 + $0x8] sm:$0xff] %v3719
      %v3722 = vld [vmem:[#allocation3 + $0x10] sm:$0xff]
      %v3723 = vld [vmem:[#allocation3 + $0x18] sm:$0xff]
      %v3724 = vmul.f32 %v3722, %v3718
      %v3725 = vmul.f32 %v3723, %v3719
      %v3726 = vld [vmem:[#allocation4 + $0x10] sm:$0xff]
      %v3727 = vld [vmem:[#allocation4 + $0x18] sm:$0xff]
      %v3728 = vadd.f32 %v3724, %v3726
      %v3729 = vadd.f32 %v3725, %v3727
      %3730 = vst [vmem:[#allocation5 + $0x10] sm:$0xff] %v3728
      %3731 = vst [vmem:[#allocation5 + $0x18] sm:$0xff] %v3729
      %v3732 = vld [vmem:[#allocation3 + $0x20] sm:$0xff]
      %v3733 = vld [vmem:[#allocation3 + $0x28] sm:$0xff]
      %v3734 = vmul.f32 %v3732, %v3728
      %v3735 = vmul.f32 %v3733, %v3729
      %v3736 = vld [vmem:[#allocation4 + $0x20] sm:$0xff]
      %v3737 = vld [vmem:[#allocation4 + $0x28] sm:$0xff]
      %v3738 = vadd.f32 %v3734, %v3736
      %v3739 = vadd.f32 %v3735, %v3737
      %3740 = vst [vmem:[#allocation5 + $0x20] sm:$0xff] %v3738
      %3741 = vst [vmem:[#allocation5 + $0x28] sm:$0xff] %v3739
      %v3742 = vld [vmem:[#allocation3 + $0x30] sm:$0xff]
      %v3743 = vld [vmem:[#allocation3 + $0x38] sm:$0xff]
      %v3744 = vmul.f32 %v3742, %v3738
      %v3745 = vmul.f32 %v3743, %v3739
      %v3746 = vld [vmem:[#allocation4 + $0x30] sm:$0xff]
      %v3747 = vld [vmem:[#allocation4 + $0x38] sm:$0xff]
      %v3748 = vadd.f32 %v3744, %v3746
      %v3749 = vadd.f32 %v3745, %v3747
      %3750 = vst [vmem:[#allocation5 + $0x30] sm:$0xff] %v3748
      %3751 = vst [vmem:[#allocation5 + $0x38] sm:$0xff] %v3749
      %v3752 = vld [vmem:[#allocation3 + $0x40] sm:$0xff]
      %v3753 = vld [vmem:[#allocation3 + $0x48] sm:$0xff]
      %v3754 = vmul.f32 %v3752, %v3748
      %v3755 = vmul.f32 %v3753, %v3749
      %v3756 = vld [vmem:[#allocation4 + $0x40] sm:$0xff]
      %v3757 = vld [vmem:[#allocation4 + $0x48] sm:$0xff]
      %v3758 = vadd.f32 %v3754, %v3756
      %v3759 = vadd.f32 %v3755, %v3757
      %3760 = vst [vmem:[#allocation5 + $0x40] sm:$0xff] %v3758
      %3761 = vst [vmem:[#allocation5 + $0x48] sm:$0xff] %v3759
      %v3762 = vld [vmem:[#allocation3 + $0x50] sm:$0xff]
      %v3763 = vld [vmem:[#allocation3 + $0x58] sm:$0xff]
      %v3764 = vmul.f32 %v3762, %v3758
      %v3765 = vmul.f32 %v3763, %v3759
      %v3766 = vld [vmem:[#allocation4 + $0x50] sm:$0xff]
      %v3767 = vld [vmem:[#allocation4 + $0x58] sm:$0xff]
      %v3768 = vadd.f32 %v3764, %v3766
      %v3769 = vadd.f32 %v3765, %v3767
      %3770 = vst [vmem:[#allocation5 + $0x50] sm:$0xff] %v3768
      %3771 = vst [vmem:[#allocation5 + $0x58] sm:$0xff] %v3769
      %v3772 = vld [vmem:[#allocation3 + $0x60] sm:$0xff]
      %v3773 = vld [vmem:[#allocation3 + $0x68] sm:$0xff]
      %v3774 = vmul.f32 %v3772, %v3768
      %v3775 = vmul.f32 %v3773, %v3769
      %v3776 = vld [vmem:[#allocation4 + $0x60] sm:$0xff]
      %v3777 = vld [vmem:[#allocation4 + $0x68] sm:$0xff]
      %v3778 = vadd.f32 %v3774, %v3776
      %v3779 = vadd.f32 %v3775, %v3777
      %3780 = vst [vmem:[#allocation5 + $0x60] sm:$0xff] %v3778
      %3781 = vst [vmem:[#allocation5 + $0x68] sm:$0xff] %v3779
      %v3782 = vld [vmem:[#allocation3 + $0x70] sm:$0xff]
      %v3783 = vld [vmem:[#allocation3 + $0x78] sm:$0xff]
      %v3784 = vmul.f32 %v3782, %v3778
      %v3785 = vmul.f32 %v3783, %v3779
      %v3786 = vld [vmem:[#allocation4 + $0x70] sm:$0xff]
      %v3787 = vld [vmem:[#allocation4 + $0x78] sm:$0xff]
      %v3788 = vadd.f32 %v3784, %v3786
      %v3789 = vadd.f32 %v3785, %v3787
      %3790 = vst [vmem:[#allocation5 + $0x70] sm:$0xff] %v3788
      %3791 = vst [vmem:[#allocation5 + $0x78] sm:$0xff] %v3789
      %v3792 = vld [vmem:[#allocation3 + $0x80] sm:$0xff]
      %v3793 = vld [vmem:[#allocation3 + $0x88] sm:$0xff]
      %v3794 = vmul.f32 %v3792, %v3788
      %v3795 = vmul.f32 %v3793, %v3789
      %v3796 = vld [vmem:[#allocation4 + $0x80] sm:$0xff]
      %v3797 = vld [vmem:[#allocation4 + $0x88] sm:$0xff]
      %v3798 = vadd.f32 %v3794, %v3796
      %v3799 = vadd.f32 %v3795, %v3797
      %3800 = vst [vmem:[#allocation5 + $0x80] sm:$0xff] %v3798
      %3801 = vst [vmem:[#allocation5 + $0x88] sm:$0xff] %v3799
      %v3802 = vld [vmem:[#allocation3 + $0x90] sm:$0xff]
      %v3803 = vld [vmem:[#allocation3 + $0x98] sm:$0xff]
      %v3804 = vmul.f32 %v3802, %v3798
      %v3805 = vmul.f32 %v3803, %v3799
      %v3806 = vld [vmem:[#allocation4 + $0x90] sm:$0xff]
      %v3807 = vld [vmem:[#allocation4 + $0x98] sm:$0xff]
      %v3808 = vadd.f32 %v3804, %v3806
      %v3809 = vadd.f32 %v3805, %v3807
      %3810 = vst [vmem:[#allocation5 + $0x90] sm:$0xff] %v3808
      %3811 = vst [vmem:[#allocation5 + $0x98] sm:$0xff] %v3809
      %v3812 = vld [vmem:[#allocation3 + $0xa0] sm:$0xff]
      %v3813 = vld [vmem:[#allocation3 + $0xa8] sm:$0xff]
      %v3814 = vmul.f32 %v3812, %v3808
      %v3815 = vmul.f32 %v3813, %v3809
      %v3816 = vld [vmem:[#allocation4 + $0xa0] sm:$0xff]
      %v3817 = vld [vmem:[#allocation4 + $0xa8] sm:$0xff]
      %v3818 = vadd.f32 %v3814, %v3816
      %v3819 = vadd.f32 %v3815, %v3817
      %3820 = vst [vmem:[#allocation5 + $0xa0] sm:$0xff] %v3818
      %3821 = vst [vmem:[#allocation5 + $0xa8] sm:$0xff] %v3819
      %v3822 = vld [vmem:[#allocation3 + $0xb0] sm:$0xff]
      %v3823 = vld [vmem:[#allocation3 + $0xb8] sm:$0xff]
      %v3824 = vmul.f32 %v3822, %v3818
      %v3825 = vmul.f32 %v3823, %v3819
      %v3826 = vld [vmem:[#allocation4 + $0xb0] sm:$0xff]
      %v3827 = vld [vmem:[#allocation4 + $0xb8] sm:$0xff]
      %v3828 = vadd.f32 %v3824, %v3826
      %v3829 = vadd.f32 %v3825, %v3827
      %3830 = vst [vmem:[#allocation5 + $0xb0] sm:$0xff] %v3828
      %3831 = vst [vmem:[#allocation5 + $0xb8] sm:$0xff] %v3829
      %v3832 = vld [vmem:[#allocation3 + $0xc0] sm:$0xff]
      %v3833 = vld [vmem:[#allocation3 + $0xc8] sm:$0xff]
      %v3834 = vmul.f32 %v3832, %v3828
      %v3835 = vmul.f32 %v3833, %v3829
      %v3836 = vld [vmem:[#allocation4 + $0xc0] sm:$0xff]
      %v3837 = vld [vmem:[#allocation4 + $0xc8] sm:$0xff]
      %v3838 = vadd.f32 %v3834, %v3836
      %v3839 = vadd.f32 %v3835, %v3837
      %3840 = vst [vmem:[#allocation5 + $0xc0] sm:$0xff] %v3838
      %3841 = vst [vmem:[#allocation5 + $0xc8] sm:$0xff] %v3839
      %v3842 = vld [vmem:[#allocation3 + $0xd0] sm:$0xff]
      %v3843 = vld [vmem:[#allocation3 + $0xd8] sm:$0xff]
      %v3844 = vmul.f32 %v3842, %v3838
      %v3845 = vmul.f32 %v3843, %v3839
      %v3846 = vld [vmem:[#allocation4 + $0xd0] sm:$0xff]
      %v3847 = vld [vmem:[#allocation4 + $0xd8] sm:$0xff]
      %v3848 = vadd.f32 %v3844, %v3846
      %v3849 = vadd.f32 %v3845, %v3847
      %3850 = vst [vmem:[#allocation5 + $0xd0] sm:$0xff] %v3848
      %3851 = vst [vmem:[#allocation5 + $0xd8] sm:$0xff] %v3849
      %v3852 = vld [vmem:[#allocation3 + $0xe0] sm:$0xff]
      %v3853 = vld [vmem:[#allocation3 + $0xe8] sm:$0xff]
      %v3854 = vmul.f32 %v3852, %v3848
      %v3855 = vmul.f32 %v3853, %v3849
      %v3856 = vld [vmem:[#allocation4 + $0xe0] sm:$0xff]
      %v3857 = vld [vmem:[#allocation4 + $0xe8] sm:$0xff]
      %v3858 = vadd.f32 %v3854, %v3856
      %v3859 = vadd.f32 %v3855, %v3857
      %3860 = vst [vmem:[#allocation5 + $0xe0] sm:$0xff] %v3858
      %3861 = vst [vmem:[#allocation5 + $0xe8] sm:$0xff] %v3859
      %v3862 = vld [vmem:[#allocation3 + $0xf0] sm:$0xff]
      %v3863 = vld [vmem:[#allocation3 + $0xf8] sm:$0xff]
      %v3864 = vmul.f32 %v3862, %v3858
      %v3865 = vmul.f32 %v3863, %v3859
      %v3866 = vld [vmem:[#allocation4 + $0xf0] sm:$0xff]
      %v3867 = vld [vmem:[#allocation4 + $0xf8] sm:$0xff]
      %v3868 = vadd.f32 %v3864, %v3866
      %v3869 = vadd.f32 %v3865, %v3867
      %3870 = vst [vmem:[#allocation5 + $0xf0] sm:$0xff] %v3868
      %3871 = vst [vmem:[#allocation5 + $0xf8] sm:$0xff] %v3869
      %v3872 = vld [vmem:[#allocation6] sm:$0xff]
      %v3873 = vld [vmem:[#allocation6 + $0x8] sm:$0xff]
      %v3874 = vld [vmem:[#allocation6 + $0x10] sm:$0xff]
      %v3875 = vld [vmem:[#allocation6 + $0x18] sm:$0xff]
      %v3876 = vld [vmem:[#allocation6 + $0x20] sm:$0xff]
      %v3877 = vld [vmem:[#allocation6 + $0x28] sm:$0xff]
      %v3878 = vld [vmem:[#allocation6 + $0x30] sm:$0xff]
      %v3879 = vld [vmem:[#allocation6 + $0x38] sm:$0xff]
      %v3880 = vld [vmem:[#allocation6 + $0x40] sm:$0xff]
      %v3881 = vld [vmem:[#allocation6 + $0x48] sm:$0xff]
      %v3882 = vld [vmem:[#allocation6 + $0x50] sm:$0xff]
      %v3883 = vld [vmem:[#allocation6 + $0x58] sm:$0xff]
      %v3884 = vld [vmem:[#allocation6 + $0x60] sm:$0xff]
      %v3885 = vld [vmem:[#allocation6 + $0x68] sm:$0xff]
      %v3886 = vld [vmem:[#allocation6 + $0x70] sm:$0xff]
      %v3887 = vld [vmem:[#allocation6 + $0x78] sm:$0xff]
      %v3888 = vld [vmem:[#allocation6 + $0x80] sm:$0xff]
      %v3889 = vld [vmem:[#allocation6 + $0x88] sm:$0xff]
      %v3890 = vld [vmem:[#allocation6 + $0x90] sm:$0xff]
      %v3891 = vld [vmem:[#allocation6 + $0x98] sm:$0xff]
      %v3892 = vld [vmem:[#allocation6 + $0xa0] sm:$0xff]
      %v3893 = vld [vmem:[#allocation6 + $0xa8] sm:$0xff]
      %v3894 = vld [vmem:[#allocation6 + $0xb0] sm:$0xff]
      %v3895 = vld [vmem:[#allocation6 + $0xb8] sm:$0xff]
      %v3896 = vld [vmem:[#allocation6 + $0xc0] sm:$0xff]
      %v3897 = vld [vmem:[#allocation6 + $0xc8] sm:$0xff]
      %v3898 = vld [vmem:[#allocation6 + $0xd0] sm:$0xff]
      %v3899 = vld [vmem:[#allocation6 + $0xd8] sm:$0xff]
      %v3900 = vld [vmem:[#allocation6 + $0xe0] sm:$0xff]
      %v3901 = vld [vmem:[#allocation6 + $0xe8] sm:$0xff]
      %v3902 = vld [vmem:[#allocation6 + $0xf0] sm:$0xff]
      %v3903 = vld [vmem:[#allocation6 + $0xf8] sm:$0xff]
      %v3904 = vld [vmem:[#allocation5] sm:$0xff]
      %v3905 = vld [vmem:[#allocation5 + $0x8] sm:$0xff]
      %v3906 = vld [vmem:[#allocation5 + $0x10] sm:$0xff]
      %v3907 = vld [vmem:[#allocation5 + $0x18] sm:$0xff]
      %v3908 = vld [vmem:[#allocation5 + $0x20] sm:$0xff]
      %v3909 = vld [vmem:[#allocation5 + $0x28] sm:$0xff]
      %v3910 = vld [vmem:[#allocation5 + $0x30] sm:$0xff]
      %v3911 = vld [vmem:[#allocation5 + $0x38] sm:$0xff]
      %v3912 = vld [vmem:[#allocation5 + $0x40] sm:$0xff]
      %v3913 = vld [vmem:[#allocation5 + $0x48] sm:$0xff]
      %v3914 = vld [vmem:[#allocation5 + $0x50] sm:$0xff]
      %v3915 = vld [vmem:[#allocation5 + $0x58] sm:$0xff]
      %v3916 = vld [vmem:[#allocation5 + $0x60] sm:$0xff]
      %v3917 = vld [vmem:[#allocation5 + $0x68] sm:$0xff]
      %v3918 = vld [vmem:[#allocation5 + $0x70] sm:$0xff]
      %v3919 = vld [vmem:[#allocation5 + $0x78] sm:$0xff]
      %v3920 = vld [vmem:[#allocation5 + $0x80] sm:$0xff]
      %v3921 = vld [vmem:[#allocation5 + $0x88] sm:$0xff]
      %v3922 = vld [vmem:[#allocation5 + $0x90] sm:$0xff]
      %v3923 = vld [vmem:[#allocation5 + $0x98] sm:$0xff]
      %v3924 = vld [vmem:[#allocation5 + $0xa0] sm:$0xff]
      %v3925 = vld [vmem:[#allocation5 + $0xa8] sm:$0xff]
      %v3926 = vld [vmem:[#allocation5 + $0xb0] sm:$0xff]
      %v3927 = vld [vmem:[#allocation5 + $0xb8] sm:$0xff]
      %v3928 = vld [vmem:[#allocation5 + $0xc0] sm:$0xff]
      %v3929 = vld [vmem:[#allocation5 + $0xc8] sm:$0xff]
      %v3930 = vld [vmem:[#allocation5 + $0xd0] sm:$0xff]
      %v3931 = vld [vmem:[#allocation5 + $0xd8] sm:$0xff]
      %v3932 = vld [vmem:[#allocation5 + $0xe0] sm:$0xff]
      %v3933 = vld [vmem:[#allocation5 + $0xe8] sm:$0xff]
      %v3934 = vld [vmem:[#allocation5 + $0xf0] sm:$0xff]
      %v3935 = vld [vmem:[#allocation5 + $0xf8] sm:$0xff]
      %v3936 = vmul.f32 %v3872, %v3904
      %v3937 = vmul.f32 %v3873, %v3905
      %v3938 = vmul.f32 %v3874, %v3906
      %v3939 = vmul.f32 %v3875, %v3907
      %v3940 = vmul.f32 %v3876, %v3908
      %v3941 = vmul.f32 %v3877, %v3909
      %v3942 = vmul.f32 %v3878, %v3910
      %v3943 = vmul.f32 %v3879, %v3911
      %v3944 = vmul.f32 %v3880, %v3912
      %v3945 = vmul.f32 %v3881, %v3913
      %v3946 = vmul.f32 %v3882, %v3914
      %v3947 = vmul.f32 %v3883, %v3915
      %v3948 = vmul.f32 %v3884, %v3916
      %v3949 = vmul.f32 %v3885, %v3917
      %v3950 = vmul.f32 %v3886, %v3918
      %v3951 = vmul.f32 %v3887, %v3919
      %v3952 = vmul.f32 %v3888, %v3920
      %v3953 = vmul.f32 %v3889, %v3921
      %v3954 = vmul.f32 %v3890, %v3922
      %v3955 = vmul.f32 %v3891, %v3923
      %v3956 = vmul.f32 %v3892, %v3924
      %v3957 = vmul.f32 %v3893, %v3925
      %v3958 = vmul.f32 %v3894, %v3926
      %v3959 = vmul.f32 %v3895, %v3927
      %v3960 = vmul.f32 %v3896, %v3928
      %v3961 = vmul.f32 %v3897, %v3929
      %v3962 = vmul.f32 %v3898, %v3930
      %v3963 = vmul.f32 %v3899, %v3931
      %v3964 = vmul.f32 %v3900, %v3932
      %v3965 = vmul.f32 %v3901, %v3933
      %v3966 = vmul.f32 %v3902, %v3934
      %v3967 = vmul.f32 %v3903, %v3935
      %v3968 = vld [vmem:[%s15] sm:$0xff]
      %v3969 = vld [vmem:[%s15 + $0x8] sm:$0xff]
      %v3970 = vld [vmem:[%s15 + $0x10] sm:$0xff]
      %v3971 = vld [vmem:[%s15 + $0x18] sm:$0xff]
      %v3972 = vld [vmem:[%s15 + $0x20] sm:$0xff]
      %v3973 = vld [vmem:[%s15 + $0x28] sm:$0xff]
      %v3974 = vld [vmem:[%s15 + $0x30] sm:$0xff]
      %v3975 = vld [vmem:[%s15 + $0x38] sm:$0xff]
      %v3976 = vld [vmem:[%s15 + $0x40] sm:$0xff]
      %v3977 = vld [vmem:[%s15 + $0x48] sm:$0xff]
      %v3978 = vld [vmem:[%s15 + $0x50] sm:$0xff]
      %v3979 = vld [vmem:[%s15 + $0x58] sm:$0xff]
      %v3980 = vld [vmem:[%s15 + $0x60] sm:$0xff]
      %v3981 = vld [vmem:[%s15 + $0x68] sm:$0xff]
      %v3982 = vld [vmem:[%s15 + $0x70] sm:$0xff]
      %v3983 = vld [vmem:[%s15 + $0x78] sm:$0xff]
      %v3984 = vld [vmem:[%s11] sm:$0x1]
      %v3986 = vlaneseq
      %v3987 = vshrl.u32 %v3986, 7
      %v3988 = vsub.s32 0, %v3987
      %v3989 = vrot.slane %v3984, %v3988
      %v3991 = vmul.f32 %v1986, %v3989
      %v3992 = vmul.f32 %v1987, %v3989
      %v3993 = vmul.f32 %v1988, %v3989
      %v3994 = vmul.f32 %v1989, %v3989
      %v3995 = vmul.f32 %v1990, %v3989
      %v3996 = vmul.f32 %v1991, %v3989
      %v3997 = vmul.f32 %v1992, %v3989
      %v3998 = vmul.f32 %v1993, %v3989
      %v3999 = vmul.f32 %v1994, %v3989
      %v4000 = vmul.f32 %v1995, %v3989
      %v4001 = vmul.f32 %v1996, %v3989
      %v4002 = vmul.f32 %v1997, %v3989
      %v4003 = vmul.f32 %v1998, %v3989
      %v4004 = vmul.f32 %v1999, %v3989
      %v4005 = vmul.f32 %v2000, %v3989
      %v4006 = vmul.f32 %v2001, %v3989
      %v4007 = vmul.f32 %v2002, %v3989
      %v4008 = vmul.f32 %v2003, %v3989
      %v4009 = vmul.f32 %v2004, %v3989
      %v4010 = vmul.f32 %v2005, %v3989
      %v4011 = vmul.f32 %v2006, %v3989
      %v4012 = vmul.f32 %v2007, %v3989
      %v4013 = vmul.f32 %v2008, %v3989
      %v4014 = vmul.f32 %v2009, %v3989
      %v4015 = vmul.f32 %v2010, %v3989
      %v4016 = vmul.f32 %v2011, %v3989
      %v4017 = vmul.f32 %v2012, %v3989
      %v4018 = vmul.f32 %v2013, %v3989
      %v4019 = vmul.f32 %v2014, %v3989
      %v4020 = vmul.f32 %v2015, %v3989
      %v4021 = vmul.f32 %v2016, %v3989
      %v4022 = vmul.f32 %v2017, %v3989
      %4023 = vmatprep.subr.mxu0 0.0
      %4024 = vmatpush1.msra.mxu0 %v3968
      %4025 = vmatprep.subr.mxu0 0.0
      %4026 = vmatpush1.msra.mxu0 %v3969
      %4027 = vmatprep.subr.mxu0 0.0
      %4028 = vmatpush1.msra.mxu0 %v3970
      %4029 = vmatprep.subr.mxu0 0.0
      %4030 = vmatpush1.msra.mxu0 %v3971
      %4031 = vmatprep.subr.mxu0 0.0
      %4032 = vmatpush1.msra.mxu0 %v3972
      %4033 = vmatprep.subr.mxu0 0.0
      %4034 = vmatpush1.msra.mxu0 %v3973
      %4035 = vmatprep.subr.mxu0 0.0
      %4036 = vmatpush1.msra.mxu0 %v3974
      %4037 = vmatprep.subr.mxu0 0.0
      %4038 = vmatpush1.msra.mxu0 %v3975
      %4039 = vmatprep.subr.mxu0 0.0
      %4040 = vmatpush1.msra.mxu0 %v3976
      %4041 = vmatprep.subr.mxu0 0.0
      %4042 = vmatpush1.msra.mxu0 %v3977
      %4043 = vmatprep.subr.mxu0 0.0
      %4044 = vmatpush1.msra.mxu0 %v3978
      %4045 = vmatprep.subr.mxu0 0.0
      %4046 = vmatpush1.msra.mxu0 %v3979
      %4047 = vmatprep.subr.mxu0 0.0
      %4048 = vmatpush1.msra.mxu0 %v3980
      %4049 = vmatprep.subr.mxu0 0.0
      %4050 = vmatpush1.msra.mxu0 %v3981
      %4051 = vmatprep.subr.mxu0 0.0
      %4052 = vmatpush1.msra.mxu0 %v3982
      %4053 = vmatprep.subr.mxu0 0.0
      %4054 = vmatpush1.msra.mxu0 %v3983
      %4055 = vmatprep.subr.mxu0 0.0
      %4056 = vmatpush1.msra.mxu0 0.0
      %4057 = vmatprep.subr.mxu0 0.0
      %4058 = vmatpush1.msra.mxu0 0.0
      %4059 = vmatprep.subr.mxu0 0.0
      %4060 = vmatpush1.msra.mxu0 0.0
      %4061 = vmatprep.subr.mxu0 0.0
      %4062 = vmatpush1.msra.mxu0 0.0
      %4063 = vmatprep.subr.mxu0 0.0
      %4064 = vmatpush1.msra.mxu0 0.0
      %4065 = vmatprep.subr.mxu0 0.0
      %4066 = vmatpush1.msra.mxu0 0.0
      %4067 = vmatprep.subr.mxu0 0.0
      %4068 = vmatpush1.msra.mxu0 0.0
      %4069 = vmatprep.subr.mxu0 0.0
      %4070 = vmatpush1.msra.mxu0 0.0
      %4071 = vmatprep.subr.mxu0 0.0
      %4072 = vmatpush1.msra.mxu0 0.0
      %4073 = vmatprep.subr.mxu0 0.0
      %4074 = vmatpush1.msra.mxu0 0.0
      %4075 = vmatprep.subr.mxu0 0.0
      %4076 = vmatpush1.msra.mxu0 0.0
      %4077 = vmatprep.subr.mxu0 0.0
      %4078 = vmatpush1.msra.mxu0 0.0
      %4079 = vmatprep.subr.mxu0 0.0
      %4080 = vmatpush1.msra.mxu0 0.0
      %4081 = vmatprep.subr.mxu0 0.0
      %4082 = vmatpush1.msra.mxu0 0.0
      %4083 = vmatprep.subr.mxu0 0.0
      %4084 = vmatpush1.msra.mxu0 0.0
      %4085 = vmatprep.subr.mxu0 0.0
      %4086 = vmatpush1.msra.mxu0 0.0
      %4087 = vmatprep.mubr.f32.mxu0 0.0
      %4088 = vmatmul.mubr.f32.gmra.mrb[0].mxu0 %v3936
      %v4089 = vpop.f32.mrb[0].mxu0
      %v4090 = vadd.f32 %v3991, %v4089
      %v4091 = vpop.f32.mrb[0].mxu0
      %4092 = vmatprep.mubr.f32.mxu0 0.0
      %4093 = vmatmul.mubr.f32.gmra.mrb[0].mxu0 %v3937
      %v4094 = vpop.f32.mrb[0].mxu0
      %v4095 = vadd.f32 %v3992, %v4094
      %v4096 = vpop.f32.mrb[0].mxu0
      %4097 = vmatprep.mubr.f32.mxu0 0.0
      %4098 = vmatmul.mubr.f32.gmra.mrb[0].mxu0 %v3938
      %v4099 = vpop.f32.mrb[0].mxu0
      %v4100 = vadd.f32 %v3993, %v4099
      %v4101 = vpop.f32.mrb[0].mxu0
      %4102 = vmatprep.mubr.f32.mxu0 0.0
      %4103 = vmatmul.mubr.f32.gmra.mrb[0].mxu0 %v3939
      %v4104 = vpop.f32.mrb[0].mxu0
      %v4105 = vadd.f32 %v3994, %v4104
      %v4106 = vpop.f32.mrb[0].mxu0
      %4107 = vmatprep.mubr.f32.mxu0 0.0
      %4108 = vmatmul.mubr.f32.gmra.mrb[0].mxu0 %v3940
      %v4109 = vpop.f32.mrb[0].mxu0
      %v4110 = vadd.f32 %v3995, %v4109
      %v4111 = vpop.f32.mrb[0].mxu0
      %4112 = vmatprep.mubr.f32.mxu0 0.0
      %4113 = vmatmul.mubr.f32.gmra.mrb[0].mxu0 %v3941
      %v4114 = vpop.f32.mrb[0].mxu0
      %v4115 = vadd.f32 %v3996, %v4114
      %v4116 = vpop.f32.mrb[0].mxu0
      %4117 = vmatprep.mubr.f32.mxu0 0.0
      %4118 = vmatmul.mubr.f32.gmra.mrb[0].mxu0 %v3942
      %v4119 = vpop.f32.mrb[0].mxu0
      %v4120 = vadd.f32 %v3997, %v4119
      %v4121 = vpop.f32.mrb[0].mxu0
      %4122 = vmatprep.mubr.f32.mxu0 0.0
      %4123 = vmatmul.mubr.f32.gmra.mrb[0].mxu0 %v3943
      %v4124 = vpop.f32.mrb[0].mxu0
      %v4125 = vadd.f32 %v3998, %v4124
      %v4126 = vpop.f32.mrb[0].mxu0
      %4127 = vmatprep.mubr.f32.mxu0 0.0
      %4128 = vmatmul.mubr.f32.gmra.mrb[0].mxu0 %v3944
      %v4129 = vpop.f32.mrb[0].mxu0
      %v4130 = vadd.f32 %v3999, %v4129
      %v4131 = vpop.f32.mrb[0].mxu0
      %4132 = vmatprep.mubr.f32.mxu0 0.0
      %4133 = vmatmul.mubr.f32.gmra.mrb[0].mxu0 %v3945
      %v4134 = vpop.f32.mrb[0].mxu0
      %v4135 = vadd.f32 %v4000, %v4134
      %v4136 = vpop.f32.mrb[0].mxu0
      %4137 = vmatprep.mubr.f32.mxu0 0.0
      %4138 = vmatmul.mubr.f32.gmra.mrb[0].mxu0 %v3946
      %v4139 = vpop.f32.mrb[0].mxu0
      %v4140 = vadd.f32 %v4001, %v4139
      %v4141 = vpop.f32.mrb[0].mxu0
      %4142 = vmatprep.mubr.f32.mxu0 0.0
      %4143 = vmatmul.mubr.f32.gmra.mrb[0].mxu0 %v3947
      %v4144 = vpop.f32.mrb[0].mxu0
      %v4145 = vadd.f32 %v4002, %v4144
      %v4146 = vpop.f32.mrb[0].mxu0
      %4147 = vmatprep.mubr.f32.mxu0 0.0
      %4148 = vmatmul.mubr.f32.gmra.mrb[0].mxu0 %v3948
      %v4149 = vpop.f32.mrb[0].mxu0
      %v4150 = vadd.f32 %v4003, %v4149
      %v4151 = vpop.f32.mrb[0].mxu0
      %4152 = vmatprep.mubr.f32.mxu0 0.0
      %4153 = vmatmul.mubr.f32.gmra.mrb[0].mxu0 %v3949
      %v4154 = vpop.f32.mrb[0].mxu0
      %v4155 = vadd.f32 %v4004, %v4154
      %v4156 = vpop.f32.mrb[0].mxu0
      %4157 = vmatprep.mubr.f32.mxu0 0.0
      %4158 = vmatmul.mubr.f32.gmra.mrb[0].mxu0 %v3950
      %v4159 = vpop.f32.mrb[0].mxu0
      %v4160 = vadd.f32 %v4005, %v4159
      %v4161 = vpop.f32.mrb[0].mxu0
      %4162 = vmatprep.mubr.f32.mxu0 0.0
      %4163 = vmatmul.mubr.f32.gmra.mrb[0].mxu0 %v3951
      %v4164 = vpop.f32.mrb[0].mxu0
      %v4165 = vadd.f32 %v4006, %v4164
      %v4166 = vpop.f32.mrb[0].mxu0
      %4167 = vmatprep.mubr.f32.mxu0 0.0
      %4168 = vmatmul.mubr.f32.gmra.mrb[0].mxu0 %v3952
      %v4169 = vpop.f32.mrb[0].mxu0
      %v4170 = vadd.f32 %v4007, %v4169
      %v4171 = vpop.f32.mrb[0].mxu0
      %4172 = vmatprep.mubr.f32.mxu0 0.0
      %4173 = vmatmul.mubr.f32.gmra.mrb[0].mxu0 %v3953
      %v4174 = vpop.f32.mrb[0].mxu0
      %v4175 = vadd.f32 %v4008, %v4174
      %v4176 = vpop.f32.mrb[0].mxu0
      %4177 = vmatprep.mubr.f32.mxu0 0.0
      %4178 = vmatmul.mubr.f32.gmra.mrb[0].mxu0 %v3954
      %v4179 = vpop.f32.mrb[0].mxu0
      %v4180 = vadd.f32 %v4009, %v4179
      %v4181 = vpop.f32.mrb[0].mxu0
      %4182 = vmatprep.mubr.f32.mxu0 0.0
      %4183 = vmatmul.mubr.f32.gmra.mrb[0].mxu0 %v3955
      %v4184 = vpop.f32.mrb[0].mxu0
      %v4185 = vadd.f32 %v4010, %v4184
      %v4186 = vpop.f32.mrb[0].mxu0
      %4187 = vmatprep.mubr.f32.mxu0 0.0
      %4188 = vmatmul.mubr.f32.gmra.mrb[0].mxu0 %v3956
      %v4189 = vpop.f32.mrb[0].mxu0
      %v4190 = vadd.f32 %v4011, %v4189
      %v4191 = vpop.f32.mrb[0].mxu0
      %4192 = vmatprep.mubr.f32.mxu0 0.0
      %4193 = vmatmul.mubr.f32.gmra.mrb[0].mxu0 %v3957
      %v4194 = vpop.f32.mrb[0].mxu0
      %v4195 = vadd.f32 %v4012, %v4194
      %v4196 = vpop.f32.mrb[0].mxu0
      %4197 = vmatprep.mubr.f32.mxu0 0.0
      %4198 = vmatmul.mubr.f32.gmra.mrb[0].mxu0 %v3958
      %v4199 = vpop.f32.mrb[0].mxu0
      %v4200 = vadd.f32 %v4013, %v4199
      %v4201 = vpop.f32.mrb[0].mxu0
      %4202 = vmatprep.mubr.f32.mxu0 0.0
      %4203 = vmatmul.mubr.f32.gmra.mrb[0].mxu0 %v3959
      %v4204 = vpop.f32.mrb[0].mxu0
      %v4205 = vadd.f32 %v4014, %v4204
      %v4206 = vpop.f32.mrb[0].mxu0
      %4207 = vmatprep.mubr.f32.mxu0 0.0
      %4208 = vmatmul.mubr.f32.gmra.mrb[0].mxu0 %v3960
      %v4209 = vpop.f32.mrb[0].mxu0
      %v4210 = vadd.f32 %v4015, %v4209
      %v4211 = vpop.f32.mrb[0].mxu0
      %4212 = vmatprep.mubr.f32.mxu0 0.0
      %4213 = vmatmul.mubr.f32.gmra.mrb[0].mxu0 %v3961
      %v4214 = vpop.f32.mrb[0].mxu0
      %v4215 = vadd.f32 %v4016, %v4214
      %v4216 = vpop.f32.mrb[0].mxu0
      %4217 = vmatprep.mubr.f32.mxu0 0.0
      %4218 = vmatmul.mubr.f32.gmra.mrb[0].mxu0 %v3962
      %v4219 = vpop.f32.mrb[0].mxu0
      %v4220 = vadd.f32 %v4017, %v4219
      %v4221 = vpop.f32.mrb[0].mxu0
      %4222 = vmatprep.mubr.f32.mxu0 0.0
      %4223 = vmatmul.mubr.f32.gmra.mrb[0].mxu0 %v3963
      %v4224 = vpop.f32.mrb[0].mxu0
      %v4225 = vadd.f32 %v4018, %v4224
      %v4226 = vpop.f32.mrb[0].mxu0
      %4227 = vmatprep.mubr.f32.mxu0 0.0
      %4228 = vmatmul.mubr.f32.gmra.mrb[0].mxu0 %v3964
      %v4229 = vpop.f32.mrb[0].mxu0
      %v4230 = vadd.f32 %v4019, %v4229
      %v4231 = vpop.f32.mrb[0].mxu0
      %4232 = vmatprep.mubr.f32.mxu0 0.0
      %4233 = vmatmul.mubr.f32.gmra.mrb[0].mxu0 %v3965
      %v4234 = vpop.f32.mrb[0].mxu0
      %v4235 = vadd.f32 %v4020, %v4234
      %v4236 = vpop.f32.mrb[0].mxu0
      %4237 = vmatprep.mubr.f32.mxu0 0.0
      %4238 = vmatmul.mubr.f32.gmra.mrb[0].mxu0 %v3966
      %v4239 = vpop.f32.mrb[0].mxu0
      %v4240 = vadd.f32 %v4021, %v4239
      %v4241 = vpop.f32.mrb[0].mxu0
      %4242 = vmatprep.mubr.f32.mxu0 0.0
      %4243 = vmatmul.mubr.f32.gmra.mrb[0].mxu0 %v3967
      %v4244 = vpop.f32.mrb[0].mxu0
      %v4245 = vadd.f32 %v4022, %v4244
      %v4246 = vpop.f32.mrb[0].mxu0
      %4247 = vdwg.mxu0
      %v4248 = vsub.f32 0.0, %v1342
      %v4249 = vsub.f32 0.0, %v1345
      %v4250 = vsub.f32 0.0, %v1350
      %v4251 = vsub.f32 0.0, %v1353
      %v4252 = vsub.f32 0.0, %v1358
      %v4253 = vsub.f32 0.0, %v1361
      %v4254 = vsub.f32 0.0, %v1366
      %v4255 = vsub.f32 0.0, %v1369
      %v4256 = vsub.f32 0.0, %v1374
      %v4257 = vsub.f32 0.0, %v1377
      %v4258 = vsub.f32 0.0, %v1382
      %v4259 = vsub.f32 0.0, %v1385
      %v4260 = vsub.f32 0.0, %v1390
      %v4261 = vsub.f32 0.0, %v1393
      %v4262 = vsub.f32 0.0, %v1398
      %v4263 = vsub.f32 0.0, %v1401
      %v4264 = vsub.f32 0.0, %v1406
      %v4265 = vsub.f32 0.0, %v1409
      %v4266 = vsub.f32 0.0, %v1414
      %v4267 = vsub.f32 0.0, %v1417
      %v4268 = vsub.f32 0.0, %v1422
      %v4269 = vsub.f32 0.0, %v1425
      %v4270 = vsub.f32 0.0, %v1430
      %v4271 = vsub.f32 0.0, %v1433
      %v4272 = vsub.f32 0.0, %v1438
      %v4273 = vsub.f32 0.0, %v1441
      %v4274 = vsub.f32 0.0, %v1446
      %v4275 = vsub.f32 0.0, %v1449
      %v4276 = vsub.f32 0.0, %v1454
      %v4277 = vsub.f32 0.0, %v1457
      %v4278 = vsub.f32 0.0, %v1462
      %v4279 = vsub.f32 0.0, %v1465
      %v4280 = vmul.f32 %v4248, 1.442695
      %v4281 = vpow.pop %v4280
      %v4282 = vmul.f32 %v4249, 1.442695
      %v4283 = vpow.pop %v4282
      %v4284 = vmul.f32 %v4250, 1.442695
      %v4285 = vpow.pop %v4284
      %v4286 = vmul.f32 %v4251, 1.442695
      %v4287 = vpow.pop %v4286
      %v4288 = vmul.f32 %v4252, 1.442695
      %v4289 = vpow.pop %v4288
      %v4290 = vmul.f32 %v4253, 1.442695
      %v4291 = vpow.pop %v4290
      %v4292 = vmul.f32 %v4254, 1.442695
      %v4293 = vpow.pop %v4292
      %v4294 = vmul.f32 %v4255, 1.442695
      %v4295 = vpow.pop %v4294
      %v4296 = vmul.f32 %v4256, 1.442695
      %v4297 = vpow.pop %v4296
      %v4298 = vmul.f32 %v4257, 1.442695
      %v4299 = vpow.pop %v4298
      %v4300 = vmul.f32 %v4258, 1.442695
      %v4301 = vpow.pop %v4300
      %v4302 = vmul.f32 %v4259, 1.442695
      %v4303 = vpow.pop %v4302
      %v4304 = vmul.f32 %v4260, 1.442695
      %v4305 = vpow.pop %v4304
      %v4306 = vmul.f32 %v4261, 1.442695
      %v4307 = vpow.pop %v4306
      %v4308 = vmul.f32 %v4262, 1.442695
      %v4309 = vpow.pop %v4308
      %v4310 = vmul.f32 %v4263, 1.442695
      %v4311 = vpow.pop %v4310
      %v4312 = vmul.f32 %v4264, 1.442695
      %v4313 = vpow.pop %v4312
      %v4314 = vmul.f32 %v4265, 1.442695
      %v4315 = vpow.pop %v4314
      %v4316 = vmul.f32 %v4266, 1.442695
      %v4317 = vpow.pop %v4316
      %v4318 = vmul.f32 %v4267, 1.442695
      %v4319 = vpow.pop %v4318
      %v4320 = vmul.f32 %v4268, 1.442695
      %v4321 = vpow.pop %v4320
      %v4322 = vmul.f32 %v4269, 1.442695
      %v4323 = vpow.pop %v4322
      %v4324 = vmul.f32 %v4270, 1.442695
      %v4325 = vpow.pop %v4324
      %v4326 = vmul.f32 %v4271, 1.442695
      %v4327 = vpow.pop %v4326
      %v4328 = vmul.f32 %v4272, 1.442695
      %v4329 = vpow.pop %v4328
      %v4330 = vmul.f32 %v4273, 1.442695
      %v4331 = vpow.pop %v4330
      %v4332 = vmul.f32 %v4274, 1.442695
      %v4333 = vpow.pop %v4332
      %v4334 = vmul.f32 %v4275, 1.442695
      %v4335 = vpow.pop %v4334
      %v4336 = vmul.f32 %v4276, 1.442695
      %v4337 = vpow.pop %v4336
      %v4338 = vmul.f32 %v4277, 1.442695
      %v4339 = vpow.pop %v4338
      %v4340 = vmul.f32 %v4278, 1.442695
      %v4341 = vpow.pop %v4340
      %v4342 = vmul.f32 %v4279, 1.442695
      %v4343 = vpow.pop %v4342
      %v4344 = vadd.f32 %v4281, 1.0
      %v4345 = vadd.f32 %v4283, 1.0
      %v4346 = vadd.f32 %v4285, 1.0
      %v4347 = vadd.f32 %v4287, 1.0
      %v4348 = vadd.f32 %v4289, 1.0
      %v4349 = vadd.f32 %v4291, 1.0
      %v4350 = vadd.f32 %v4293, 1.0
      %v4351 = vadd.f32 %v4295, 1.0
      %v4352 = vadd.f32 %v4297, 1.0
      %v4353 = vadd.f32 %v4299, 1.0
      %v4354 = vadd.f32 %v4301, 1.0
      %v4355 = vadd.f32 %v4303, 1.0
      %v4356 = vadd.f32 %v4305, 1.0
      %v4357 = vadd.f32 %v4307, 1.0
      %v4358 = vadd.f32 %v4309, 1.0
      %v4359 = vadd.f32 %v4311, 1.0
      %v4360 = vadd.f32 %v4313, 1.0
      %v4361 = vadd.f32 %v4315, 1.0
      %v4362 = vadd.f32 %v4317, 1.0
      %v4363 = vadd.f32 %v4319, 1.0
      %v4364 = vadd.f32 %v4321, 1.0
      %v4365 = vadd.f32 %v4323, 1.0
      %v4366 = vadd.f32 %v4325, 1.0
      %v4367 = vadd.f32 %v4327, 1.0
      %v4368 = vadd.f32 %v4329, 1.0
      %v4369 = vadd.f32 %v4331, 1.0
      %v4370 = vadd.f32 %v4333, 1.0
      %v4371 = vadd.f32 %v4335, 1.0
      %v4372 = vadd.f32 %v4337, 1.0
      %v4373 = vadd.f32 %v4339, 1.0
      %v4374 = vadd.f32 %v4341, 1.0
      %v4375 = vadd.f32 %v4343, 1.0
      %v4376 = vrcp.pop %v4344
      %v4377 = vrcp.pop %v4345
      %v4378 = vrcp.pop %v4346
      %v4379 = vrcp.pop %v4347
      %v4380 = vrcp.pop %v4348
      %v4381 = vrcp.pop %v4349
      %v4382 = vrcp.pop %v4350
      %v4383 = vrcp.pop %v4351
      %v4384 = vrcp.pop %v4352
      %v4385 = vrcp.pop %v4353
      %v4386 = vrcp.pop %v4354
      %v4387 = vrcp.pop %v4355
      %v4388 = vrcp.pop %v4356
      %v4389 = vrcp.pop %v4357
      %v4390 = vrcp.pop %v4358
      %v4391 = vrcp.pop %v4359
      %v4392 = vrcp.pop %v4360
      %v4393 = vrcp.pop %v4361
      %v4394 = vrcp.pop %v4362
      %v4395 = vrcp.pop %v4363
      %v4396 = vrcp.pop %v4364
      %v4397 = vrcp.pop %v4365
      %v4398 = vrcp.pop %v4366
      %v4399 = vrcp.pop %v4367
      %v4400 = vrcp.pop %v4368
      %v4401 = vrcp.pop %v4369
      %v4402 = vrcp.pop %v4370
      %v4403 = vrcp.pop %v4371
      %v4404 = vrcp.pop %v4372
      %v4405 = vrcp.pop %v4373
      %v4406 = vrcp.pop %v4374
      %v4407 = vrcp.pop %v4375
      %v4408 = vmul.f32 %v1342, %v4376
      %v4409 = vmul.f32 %v1345, %v4377
      %v4410 = vmul.f32 %v1350, %v4378
      %v4411 = vmul.f32 %v1353, %v4379
      %v4412 = vmul.f32 %v1358, %v4380
      %v4413 = vmul.f32 %v1361, %v4381
      %v4414 = vmul.f32 %v1366, %v4382
      %v4415 = vmul.f32 %v1369, %v4383
      %v4416 = vmul.f32 %v1374, %v4384
      %v4417 = vmul.f32 %v1377, %v4385
      %v4418 = vmul.f32 %v1382, %v4386
      %v4419 = vmul.f32 %v1385, %v4387
      %v4420 = vmul.f32 %v1390, %v4388
      %v4421 = vmul.f32 %v1393, %v4389
      %v4422 = vmul.f32 %v1398, %v4390
      %v4423 = vmul.f32 %v1401, %v4391
      %v4424 = vmul.f32 %v1406, %v4392
      %v4425 = vmul.f32 %v1409, %v4393
      %v4426 = vmul.f32 %v1414, %v4394
      %v4427 = vmul.f32 %v1417, %v4395
      %v4428 = vmul.f32 %v1422, %v4396
      %v4429 = vmul.f32 %v1425, %v4397
      %v4430 = vmul.f32 %v1430, %v4398
      %v4431 = vmul.f32 %v1433, %v4399
      %v4432 = vmul.f32 %v1438, %v4400
      %v4433 = vmul.f32 %v1441, %v4401
      %v4434 = vmul.f32 %v1446, %v4402
      %v4435 = vmul.f32 %v1449, %v4403
      %v4436 = vmul.f32 %v1454, %v4404
      %v4437 = vmul.f32 %v1457, %v4405
      %v4438 = vmul.f32 %v1462, %v4406
      %v4439 = vmul.f32 %v1465, %v4407
      %v4440 = vmul.f32 %v4090, %v4408
      %v4441 = vmul.f32 %v4095, %v4409
      %v4442 = vmul.f32 %v4100, %v4410
      %v4443 = vmul.f32 %v4105, %v4411
      %v4444 = vmul.f32 %v4110, %v4412
      %v4445 = vmul.f32 %v4115, %v4413
      %v4446 = vmul.f32 %v4120, %v4414
      %v4447 = vmul.f32 %v4125, %v4415
      %v4448 = vmul.f32 %v4130, %v4416
      %v4449 = vmul.f32 %v4135, %v4417
      %v4450 = vmul.f32 %v4140, %v4418
      %v4451 = vmul.f32 %v4145, %v4419
      %v4452 = vmul.f32 %v4150, %v4420
      %v4453 = vmul.f32 %v4155, %v4421
      %v4454 = vmul.f32 %v4160, %v4422
      %v4455 = vmul.f32 %v4165, %v4423
      %v4456 = vmul.f32 %v4170, %v4424
      %v4457 = vmul.f32 %v4175, %v4425
      %v4458 = vmul.f32 %v4180, %v4426
      %v4459 = vmul.f32 %v4185, %v4427
      %v4460 = vmul.f32 %v4190, %v4428
      %v4461 = vmul.f32 %v4195, %v4429
      %v4462 = vmul.f32 %v4200, %v4430
      %v4463 = vmul.f32 %v4205, %v4431
      %v4464 = vmul.f32 %v4210, %v4432
      %v4465 = vmul.f32 %v4215, %v4433
      %v4466 = vmul.f32 %v4220, %v4434
      %v4467 = vmul.f32 %v4225, %v4435
      %v4468 = vmul.f32 %v4230, %v4436
      %v4469 = vmul.f32 %v4235, %v4437
      %v4470 = vmul.f32 %v4240, %v4438
      %v4471 = vmul.f32 %v4245, %v4439
      %v4472 = vld [vmem:[%s12] sm:$0xf]
      %v4473 = vld [vmem:[%s12 + $0x4] sm:$0xf]
      %v4474 = vld [vmem:[%s12 + $0x8] sm:$0xf]
      %v4475 = vld [vmem:[%s12 + $0xc] sm:$0xf]
      %v4476 = vpack.c.bf16 %v4441, %v4440
      %v4477 = vpack.c.bf16 %v4443, %v4442
      %v4478 = vpack.c.bf16 %v4445, %v4444
      %v4479 = vpack.c.bf16 %v4447, %v4446
      %v4480 = vpack.c.bf16 %v4449, %v4448
      %v4481 = vpack.c.bf16 %v4451, %v4450
      %v4482 = vpack.c.bf16 %v4453, %v4452
      %v4483 = vpack.c.bf16 %v4455, %v4454
      %v4484 = vpack.c.bf16 %v4457, %v4456
      %v4485 = vpack.c.bf16 %v4459, %v4458
      %v4486 = vpack.c.bf16 %v4461, %v4460
      %v4487 = vpack.c.bf16 %v4463, %v4462
      %v4488 = vpack.c.bf16 %v4465, %v4464
      %v4489 = vpack.c.bf16 %v4467, %v4466
      %v4490 = vpack.c.bf16 %v4469, %v4468
      %v4491 = vpack.c.bf16 %v4471, %v4470
      %v4496 = vunpack.c.l.b16 %v4472
      %v4497 = vunpack.c.l.b16 %v4473
      %v4498 = vunpack.c.l.b16 %v4474
      %v4499 = vunpack.c.l.b16 %v4475
      %v4500 = vpack.c.b16 %v4497, %v4496
      %v4501 = vpack.c.b16 %v4499, %v4498
      %v4505 = vsel %vm1468, %v4476, 0
      %v4508 = vsel %vm1468, %v4477, 0
      %v4511 = vsel %vm1468, %v4478, 0
      %v4514 = vsel %vm1468, %v4479, 0
      %v4517 = vsel %vm1468, %v4480, 0
      %v4520 = vsel %vm1468, %v4481, 0
      %v4523 = vsel %vm1468, %v4482, 0
      %v4526 = vsel %vm1468, %v4483, 0
      %v4529 = vsel %vm1468, %v4484, 0
      %v4532 = vsel %vm1468, %v4485, 0
      %v4535 = vsel %vm1468, %v4486, 0
      %v4538 = vsel %vm1468, %v4487, 0
      %v4541 = vsel %vm1468, %v4488, 0
      %v4544 = vsel %vm1468, %v4489, 0
      %v4547 = vsel %vm1468, %v4490, 0
      %v4550 = vsel %vm1468, %v4491, 0
      %4552 = vmatprep.subr.bf16.mxu0 0
      %4553 = vmatpush1.bf16.msra.mxu0 %v4500
      %4554 = vmatprep.subr.bf16.mxu0 0
      %4555 = vmatpush1.bf16.msra.mxu0 %v4501
      %4556 = vmatprep.subr.bf16.mxu0 0
      %4557 = vmatpush1.bf16.msra.mxu0 0
      %4558 = vmatprep.subr.bf16.mxu0 0
      %4559 = vmatpush1.bf16.msra.mxu0 0
      %4560 = vmatprep.subr.bf16.mxu0 0
      %4561 = vmatpush1.bf16.msra.mxu0 0
      %4562 = vmatprep.subr.bf16.mxu0 0
      %4563 = vmatpush1.bf16.msra.mxu0 0
      %4564 = vmatprep.subr.bf16.mxu0 0
      %4565 = vmatpush1.bf16.msra.mxu0 0
      %4566 = vmatprep.subr.bf16.mxu0 0
      %4567 = vmatpush1.bf16.msra.mxu0 0
      %4568 = vmatprep.subr.bf16.mxu0 0
      %4569 = vmatpush1.bf16.msra.mxu0 0
      %4570 = vmatprep.subr.bf16.mxu0 0
      %4571 = vmatpush1.bf16.msra.mxu0 0
      %4572 = vmatprep.subr.bf16.mxu0 0
      %4573 = vmatpush1.bf16.msra.mxu0 0
      %4574 = vmatprep.subr.bf16.mxu0 0
      %4575 = vmatpush1.bf16.msra.mxu0 0
      %4576 = vmatprep.subr.bf16.mxu0 0
      %4577 = vmatpush1.bf16.msra.mxu0 0
      %4578 = vmatprep.subr.bf16.mxu0 0
      %4579 = vmatpush1.bf16.msra.mxu0 0
      %4580 = vmatprep.subr.bf16.mxu0 0
      %4581 = vmatpush1.bf16.msra.mxu0 0
      %4582 = vmatprep.subr.bf16.mxu0 0
      %4583 = vmatpush1.bf16.msra.mxu0 0
      %4584 = vmatprep.mubr.bf16.mxu0 0
      %4585 = vmatmul.mubr.bf16.gmra.mrb[0].mxu0 %v4505
      %v4586 = vpop.f32.mrb[0].mxu0
      %v4587 = vadd.f32 0.0, %v4586
      %v4588 = vpop.f32.mrb[0].mxu0
      %v4589 = vpop.f32.mrb[0].mxu0
      %v4590 = vadd.f32 0.0, %v4589
      %v4591 = vpop.f32.mrb[0].mxu0
      %4592 = vmatprep.mubr.bf16.mxu0 0
      %4593 = vmatmul.mubr.bf16.gmra.mrb[0].mxu0 %v4508
      %v4594 = vpop.f32.mrb[0].mxu0
      %v4595 = vadd.f32 0.0, %v4594
      %v4596 = vpop.f32.mrb[0].mxu0
      %v4597 = vpop.f32.mrb[0].mxu0
      %v4598 = vadd.f32 0.0, %v4597
      %v4599 = vpop.f32.mrb[0].mxu0
      %4600 = vmatprep.mubr.bf16.mxu0 0
      %4601 = vmatmul.mubr.bf16.gmra.mrb[0].mxu0 %v4511
      %v4602 = vpop.f32.mrb[0].mxu0
      %v4603 = vadd.f32 0.0, %v4602
      %v4604 = vpop.f32.mrb[0].mxu0
      %v4605 = vpop.f32.mrb[0].mxu0
      %v4606 = vadd.f32 0.0, %v4605
      %v4607 = vpop.f32.mrb[0].mxu0
      %4608 = vmatprep.mubr.bf16.mxu0 0
      %4609 = vmatmul.mubr.bf16.gmra.mrb[0].mxu0 %v4514
      %v4610 = vpop.f32.mrb[0].mxu0
      %v4611 = vadd.f32 0.0, %v4610
      %v4612 = vpop.f32.mrb[0].mxu0
      %v4613 = vpop.f32.mrb[0].mxu0
      %v4614 = vadd.f32 0.0, %v4613
      %v4615 = vpop.f32.mrb[0].mxu0
      %4616 = vmatprep.mubr.bf16.mxu0 0
      %4617 = vmatmul.mubr.bf16.gmra.mrb[0].mxu0 %v4517
      %v4618 = vpop.f32.mrb[0].mxu0
      %v4619 = vadd.f32 0.0, %v4618
      %v4620 = vpop.f32.mrb[0].mxu0
      %v4621 = vpop.f32.mrb[0].mxu0
      %v4622 = vadd.f32 0.0, %v4621
      %v4623 = vpop.f32.mrb[0].mxu0
      %4624 = vmatprep.mubr.bf16.mxu0 0
      %4625 = vmatmul.mubr.bf16.gmra.mrb[0].mxu0 %v4520
      %v4626 = vpop.f32.mrb[0].mxu0
      %v4627 = vadd.f32 0.0, %v4626
      %v4628 = vpop.f32.mrb[0].mxu0
      %v4629 = vpop.f32.mrb[0].mxu0
      %v4630 = vadd.f32 0.0, %v4629
      %v4631 = vpop.f32.mrb[0].mxu0
      %4632 = vmatprep.mubr.bf16.mxu0 0
      %4633 = vmatmul.mubr.bf16.gmra.mrb[0].mxu0 %v4523
      %v4634 = vpop.f32.mrb[0].mxu0
      %v4635 = vadd.f32 0.0, %v4634
      %v4636 = vpop.f32.mrb[0].mxu0
      %v4637 = vpop.f32.mrb[0].mxu0
      %v4638 = vadd.f32 0.0, %v4637
      %v4639 = vpop.f32.mrb[0].mxu0
      %4640 = vmatprep.mubr.bf16.mxu0 0
      %4641 = vmatmul.mubr.bf16.gmra.mrb[0].mxu0 %v4526
      %v4642 = vpop.f32.mrb[0].mxu0
      %v4643 = vadd.f32 0.0, %v4642
      %v4644 = vpop.f32.mrb[0].mxu0
      %v4645 = vpop.f32.mrb[0].mxu0
      %v4646 = vadd.f32 0.0, %v4645
      %v4647 = vpop.f32.mrb[0].mxu0
      %4648 = vmatprep.mubr.bf16.mxu0 0
      %4649 = vmatmul.mubr.bf16.gmra.mrb[0].mxu0 %v4529
      %v4650 = vpop.f32.mrb[0].mxu0
      %v4651 = vadd.f32 0.0, %v4650
      %v4652 = vpop.f32.mrb[0].mxu0
      %v4653 = vpop.f32.mrb[0].mxu0
      %v4654 = vadd.f32 0.0, %v4653
      %v4655 = vpop.f32.mrb[0].mxu0
      %4656 = vmatprep.mubr.bf16.mxu0 0
      %4657 = vmatmul.mubr.bf16.gmra.mrb[0].mxu0 %v4532
      %v4658 = vpop.f32.mrb[0].mxu0
      %v4659 = vadd.f32 0.0, %v4658
      %v4660 = vpop.f32.mrb[0].mxu0
      %v4661 = vpop.f32.mrb[0].mxu0
      %v4662 = vadd.f32 0.0, %v4661
      %v4663 = vpop.f32.mrb[0].mxu0
      %4664 = vmatprep.mubr.bf16.mxu0 0
      %4665 = vmatmul.mubr.bf16.gmra.mrb[0].mxu0 %v4535
      %v4666 = vpop.f32.mrb[0].mxu0
      %v4667 = vadd.f32 0.0, %v4666
      %v4668 = vpop.f32.mrb[0].mxu0
      %v4669 = vpop.f32.mrb[0].mxu0
      %v4670 = vadd.f32 0.0, %v4669
      %v4671 = vpop.f32.mrb[0].mxu0
      %4672 = vmatprep.mubr.bf16.mxu0 0
      %4673 = vmatmul.mubr.bf16.gmra.mrb[0].mxu0 %v4538
      %v4674 = vpop.f32.mrb[0].mxu0
      %v4675 = vadd.f32 0.0, %v4674
      %v4676 = vpop.f32.mrb[0].mxu0
      %v4677 = vpop.f32.mrb[0].mxu0
      %v4678 = vadd.f32 0.0, %v4677
      %v4679 = vpop.f32.mrb[0].mxu0
      %4680 = vmatprep.mubr.bf16.mxu0 0
      %4681 = vmatmul.mubr.bf16.gmra.mrb[0].mxu0 %v4541
      %v4682 = vpop.f32.mrb[0].mxu0
      %v4683 = vadd.f32 0.0, %v4682
      %v4684 = vpop.f32.mrb[0].mxu0
      %v4685 = vpop.f32.mrb[0].mxu0
      %v4686 = vadd.f32 0.0, %v4685
      %v4687 = vpop.f32.mrb[0].mxu0
      %4688 = vmatprep.mubr.bf16.mxu0 0
      %4689 = vmatmul.mubr.bf16.gmra.mrb[0].mxu0 %v4544
      %v4690 = vpop.f32.mrb[0].mxu0
      %v4691 = vadd.f32 0.0, %v4690
      %v4692 = vpop.f32.mrb[0].mxu0
      %v4693 = vpop.f32.mrb[0].mxu0
      %v4694 = vadd.f32 0.0, %v4693
      %v4695 = vpop.f32.mrb[0].mxu0
      %4696 = vmatprep.mubr.bf16.mxu0 0
      %4697 = vmatmul.mubr.bf16.gmra.mrb[0].mxu0 %v4547
      %v4698 = vpop.f32.mrb[0].mxu0
      %v4699 = vadd.f32 0.0, %v4698
      %v4700 = vpop.f32.mrb[0].mxu0
      %v4701 = vpop.f32.mrb[0].mxu0
      %v4702 = vadd.f32 0.0, %v4701
      %v4703 = vpop.f32.mrb[0].mxu0
      %4704 = vmatprep.mubr.bf16.mxu0 0
      %4705 = vmatmul.mubr.bf16.gmra.mrb[0].mxu0 %v4550
      %v4706 = vpop.f32.mrb[0].mxu0
      %v4707 = vadd.f32 0.0, %v4706
      %v4708 = vpop.f32.mrb[0].mxu0
      %v4709 = vpop.f32.mrb[0].mxu0
      %v4710 = vadd.f32 0.0, %v4709
      %v4711 = vpop.f32.mrb[0].mxu0
      %4712 = vdwg.mxu0
      %v4713 = vsel %vm1089, %v4587, 0.0
      %4714 = vadd.xlane.f32.xlu0 %v4713
      %v4715 = vpop.xlane.xlu0 %4714
      %v4716 = vsel %vm1089, %v4590, 0.0
      %4717 = vadd.xlane.f32.xlu0 %v4716
      %v4718 = vpop.xlane.xlu0 %4717
      %v4719 = vsel %vm1089, %v4595, 0.0
      %4720 = vadd.xlane.f32.xlu0 %v4719
      %v4721 = vpop.xlane.xlu0 %4720
      %v4722 = vsel %vm1089, %v4598, 0.0
      %4723 = vadd.xlane.f32.xlu0 %v4722
      %v4724 = vpop.xlane.xlu0 %4723
      %v4725 = vsel %vm1089, %v4603, 0.0
      %4726 = vadd.xlane.f32.xlu0 %v4725
      %v4727 = vpop.xlane.xlu0 %4726
      %v4728 = vsel %vm1089, %v4606, 0.0
      %4729 = vadd.xlane.f32.xlu0 %v4728
      %v4730 = vpop.xlane.xlu0 %4729
      %v4731 = vsel %vm1089, %v4611, 0.0
      %4732 = vadd.xlane.f32.xlu0 %v4731
      %v4733 = vpop.xlane.xlu0 %4732
      %v4734 = vsel %vm1089, %v4614, 0.0
      %4735 = vadd.xlane.f32.xlu0 %v4734
      %v4736 = vpop.xlane.xlu0 %4735
      %v4737 = vsel %vm1089, %v4619, 0.0
      %4738 = vadd.xlane.f32.xlu0 %v4737
      %v4739 = vpop.xlane.xlu0 %4738
      %v4740 = vsel %vm1089, %v4622, 0.0
      %4741 = vadd.xlane.f32.xlu0 %v4740
      %v4742 = vpop.xlane.xlu0 %4741
      %v4743 = vsel %vm1089, %v4627, 0.0
      %4744 = vadd.xlane.f32.xlu0 %v4743
      %v4745 = vpop.xlane.xlu0 %4744
      %v4746 = vsel %vm1089, %v4630, 0.0
      %4747 = vadd.xlane.f32.xlu0 %v4746
      %v4748 = vpop.xlane.xlu0 %4747
      %v4749 = vsel %vm1089, %v4635, 0.0
      %4750 = vadd.xlane.f32.xlu0 %v4749
      %v4751 = vpop.xlane.xlu0 %4750
      %v4752 = vsel %vm1089, %v4638, 0.0
      %4753 = vadd.xlane.f32.xlu0 %v4752
      %v4754 = vpop.xlane.xlu0 %4753
      %v4755 = vsel %vm1089, %v4643, 0.0
      %4756 = vadd.xlane.f32.xlu0 %v4755
      %v4757 = vpop.xlane.xlu0 %4756
      %v4758 = vsel %vm1089, %v4646, 0.0
      %4759 = vadd.xlane.f32.xlu0 %v4758
      %v4760 = vpop.xlane.xlu0 %4759
      %v4761 = vsel %vm1089, %v4651, 0.0
      %4762 = vadd.xlane.f32.xlu0 %v4761
      %v4763 = vpop.xlane.xlu0 %4762
      %v4764 = vsel %vm1089, %v4654, 0.0
      %4765 = vadd.xlane.f32.xlu0 %v4764
      %v4766 = vpop.xlane.xlu0 %4765
      %v4767 = vsel %vm1089, %v4659, 0.0
      %4768 = vadd.xlane.f32.xlu0 %v4767
      %v4769 = vpop.xlane.xlu0 %4768
      %v4770 = vsel %vm1089, %v4662, 0.0
      %4771 = vadd.xlane.f32.xlu0 %v4770
      %v4772 = vpop.xlane.xlu0 %4771
      %v4773 = vsel %vm1089, %v4667, 0.0
      %4774 = vadd.xlane.f32.xlu0 %v4773
      %v4775 = vpop.xlane.xlu0 %4774
      %v4776 = vsel %vm1089, %v4670, 0.0
      %4777 = vadd.xlane.f32.xlu0 %v4776
      %v4778 = vpop.xlane.xlu0 %4777
      %v4779 = vsel %vm1089, %v4675, 0.0
      %4780 = vadd.xlane.f32.xlu0 %v4779
      %v4781 = vpop.xlane.xlu0 %4780
      %v4782 = vsel %vm1089, %v4678, 0.0
      %4783 = vadd.xlane.f32.xlu0 %v4782
      %v4784 = vpop.xlane.xlu0 %4783
      %v4785 = vsel %vm1089, %v4683, 0.0
      %4786 = vadd.xlane.f32.xlu0 %v4785
      %v4787 = vpop.xlane.xlu0 %4786
      %v4788 = vsel %vm1089, %v4686, 0.0
      %4789 = vadd.xlane.f32.xlu0 %v4788
      %v4790 = vpop.xlane.xlu0 %4789
      %v4791 = vsel %vm1089, %v4691, 0.0
      %4792 = vadd.xlane.f32.xlu0 %v4791
      %v4793 = vpop.xlane.xlu0 %4792
      %v4794 = vsel %vm1089, %v4694, 0.0
      %4795 = vadd.xlane.f32.xlu0 %v4794
      %v4796 = vpop.xlane.xlu0 %4795
      %v4797 = vsel %vm1089, %v4699, 0.0
      %4798 = vadd.xlane.f32.xlu0 %v4797
      %v4799 = vpop.xlane.xlu0 %4798
      %v4800 = vsel %vm1089, %v4702, 0.0
      %4801 = vadd.xlane.f32.xlu0 %v4800
      %v4802 = vpop.xlane.xlu0 %4801
      %v4803 = vsel %vm1089, %v4707, 0.0
      %4804 = vadd.xlane.f32.xlu0 %v4803
      %v4805 = vpop.xlane.xlu0 %4804
      %v4806 = vsel %vm1089, %v4710, 0.0
      %4807 = vadd.xlane.f32.xlu0 %v4806
      %v4808 = vpop.xlane.xlu0 %4807
      %v4809 = vrcp.pop 16.0
      %v4810 = vmul.f32 %v4715, %v4809
      %v4811 = vmul.f32 %v4718, %v4809
      %v4812 = vmul.f32 %v4721, %v4809
      %v4813 = vmul.f32 %v4724, %v4809
      %v4814 = vmul.f32 %v4727, %v4809
      %v4815 = vmul.f32 %v4730, %v4809
      %v4816 = vmul.f32 %v4733, %v4809
      %v4817 = vmul.f32 %v4736, %v4809
      %v4818 = vmul.f32 %v4739, %v4809
      %v4819 = vmul.f32 %v4742, %v4809
      %v4820 = vmul.f32 %v4745, %v4809
      %v4821 = vmul.f32 %v4748, %v4809
      %v4822 = vmul.f32 %v4751, %v4809
      %v4823 = vmul.f32 %v4754, %v4809
      %v4824 = vmul.f32 %v4757, %v4809
      %v4825 = vmul.f32 %v4760, %v4809
      %v4826 = vmul.f32 %v4763, %v4809
      %v4827 = vmul.f32 %v4766, %v4809
      %v4828 = vmul.f32 %v4769, %v4809
      %v4829 = vmul.f32 %v4772, %v4809
      %v4830 = vmul.f32 %v4775, %v4809
      %v4831 = vmul.f32 %v4778, %v4809
      %v4832 = vmul.f32 %v4781, %v4809
      %v4833 = vmul.f32 %v4784, %v4809
      %v4834 = vmul.f32 %v4787, %v4809
      %v4835 = vmul.f32 %v4790, %v4809
      %v4836 = vmul.f32 %v4793, %v4809
      %v4837 = vmul.f32 %v4796, %v4809
      %v4838 = vmul.f32 %v4799, %v4809
      %v4839 = vmul.f32 %v4802, %v4809
      %v4840 = vmul.f32 %v4805, %v4809
      %v4841 = vmul.f32 %v4808, %v4809
      %v4842 = vsub.f32 %v4587, %v4810
      %v4843 = vsub.f32 %v4590, %v4811
      %v4844 = vsub.f32 %v4595, %v4812
      %v4845 = vsub.f32 %v4598, %v4813
      %v4846 = vsub.f32 %v4603, %v4814
      %v4847 = vsub.f32 %v4606, %v4815
      %v4848 = vsub.f32 %v4611, %v4816
      %v4849 = vsub.f32 %v4614, %v4817
      %v4850 = vsub.f32 %v4619, %v4818
      %v4851 = vsub.f32 %v4622, %v4819
      %v4852 = vsub.f32 %v4627, %v4820
      %v4853 = vsub.f32 %v4630, %v4821
      %v4854 = vsub.f32 %v4635, %v4822
      %v4855 = vsub.f32 %v4638, %v4823
      %v4856 = vsub.f32 %v4643, %v4824
      %v4857 = vsub.f32 %v4646, %v4825
      %v4858 = vsub.f32 %v4651, %v4826
      %v4859 = vsub.f32 %v4654, %v4827
      %v4860 = vsub.f32 %v4659, %v4828
      %v4861 = vsub.f32 %v4662, %v4829
      %v4862 = vsub.f32 %v4667, %v4830
      %v4863 = vsub.f32 %v4670, %v4831
      %v4864 = vsub.f32 %v4675, %v4832
      %v4865 = vsub.f32 %v4678, %v4833
      %v4866 = vsub.f32 %v4683, %v4834
      %v4867 = vsub.f32 %v4686, %v4835
      %v4868 = vsub.f32 %v4691, %v4836
      %v4869 = vsub.f32 %v4694, %v4837
      %v4870 = vsub.f32 %v4699, %v4838
      %v4871 = vsub.f32 %v4702, %v4839
      %v4872 = vsub.f32 %v4707, %v4840
      %v4873 = vsub.f32 %v4710, %v4841
      %v4874 = vmul.f32 %v4842, %v4842
      %v4875 = vmul.f32 %v4843, %v4843
      %v4876 = vmul.f32 %v4844, %v4844
      %v4877 = vmul.f32 %v4845, %v4845
      %v4878 = vmul.f32 %v4846, %v4846
      %v4879 = vmul.f32 %v4847, %v4847
      %v4880 = vmul.f32 %v4848, %v4848
      %v4881 = vmul.f32 %v4849, %v4849
      %v4882 = vmul.f32 %v4850, %v4850
      %v4883 = vmul.f32 %v4851, %v4851
      %v4884 = vmul.f32 %v4852, %v4852
      %v4885 = vmul.f32 %v4853, %v4853
      %v4886 = vmul.f32 %v4854, %v4854
      %v4887 = vmul.f32 %v4855, %v4855
      %v4888 = vmul.f32 %v4856, %v4856
      %v4889 = vmul.f32 %v4857, %v4857
      %v4890 = vmul.f32 %v4858, %v4858
      %v4891 = vmul.f32 %v4859, %v4859
      %v4892 = vmul.f32 %v4860, %v4860
      %v4893 = vmul.f32 %v4861, %v4861
      %v4894 = vmul.f32 %v4862, %v4862
      %v4895 = vmul.f32 %v4863, %v4863
      %v4896 = vmul.f32 %v4864, %v4864
      %v4897 = vmul.f32 %v4865, %v4865
      %v4898 = vmul.f32 %v4866, %v4866
      %v4899 = vmul.f32 %v4867, %v4867
      %v4900 = vmul.f32 %v4868, %v4868
      %v4901 = vmul.f32 %v4869, %v4869
      %v4902 = vmul.f32 %v4870, %v4870
      %v4903 = vmul.f32 %v4871, %v4871
      %v4904 = vmul.f32 %v4872, %v4872
      %v4905 = vmul.f32 %v4873, %v4873
      %v4906 = vsel %vm1089, %v4874, 0.0
      %4907 = vadd.xlane.f32.xlu0 %v4906
      %v4908 = vpop.xlane.xlu0 %4907
      %v4909 = vsel %vm1089, %v4875, 0.0
      %4910 = vadd.xlane.f32.xlu0 %v4909
      %v4911 = vpop.xlane.xlu0 %4910
      %v4912 = vsel %vm1089, %v4876, 0.0
      %4913 = vadd.xlane.f32.xlu0 %v4912
      %v4914 = vpop.xlane.xlu0 %4913
      %v4915 = vsel %vm1089, %v4877, 0.0
      %4916 = vadd.xlane.f32.xlu0 %v4915
      %v4917 = vpop.xlane.xlu0 %4916
      %v4918 = vsel %vm1089, %v4878, 0.0
      %4919 = vadd.xlane.f32.xlu0 %v4918
      %v4920 = vpop.xlane.xlu0 %4919
      %v4921 = vsel %vm1089, %v4879, 0.0
      %4922 = vadd.xlane.f32.xlu0 %v4921
      %v4923 = vpop.xlane.xlu0 %4922
      %v4924 = vsel %vm1089, %v4880, 0.0
      %4925 = vadd.xlane.f32.xlu0 %v4924
      %v4926 = vpop.xlane.xlu0 %4925
      %v4927 = vsel %vm1089, %v4881, 0.0
      %4928 = vadd.xlane.f32.xlu0 %v4927
      %v4929 = vpop.xlane.xlu0 %4928
      %v4930 = vsel %vm1089, %v4882, 0.0
      %4931 = vadd.xlane.f32.xlu0 %v4930
      %v4932 = vpop.xlane.xlu0 %4931
      %v4933 = vsel %vm1089, %v4883, 0.0
      %4934 = vadd.xlane.f32.xlu0 %v4933
      %v4935 = vpop.xlane.xlu0 %4934
      %v4936 = vsel %vm1089, %v4884, 0.0
      %4937 = vadd.xlane.f32.xlu0 %v4936
      %v4938 = vpop.xlane.xlu0 %4937
      %v4939 = vsel %vm1089, %v4885, 0.0
      %4940 = vadd.xlane.f32.xlu0 %v4939
      %v4941 = vpop.xlane.xlu0 %4940
      %v4942 = vsel %vm1089, %v4886, 0.0
      %4943 = vadd.xlane.f32.xlu0 %v4942
      %v4944 = vpop.xlane.xlu0 %4943
      %v4945 = vsel %vm1089, %v4887, 0.0
      %4946 = vadd.xlane.f32.xlu0 %v4945
      %v4947 = vpop.xlane.xlu0 %4946
      %v4948 = vsel %vm1089, %v4888, 0.0
      %4949 = vadd.xlane.f32.xlu0 %v4948
      %v4950 = vpop.xlane.xlu0 %4949
      %v4951 = vsel %vm1089, %v4889, 0.0
      %4952 = vadd.xlane.f32.xlu0 %v4951
      %v4953 = vpop.xlane.xlu0 %4952
      %v4954 = vsel %vm1089, %v4890, 0.0
      %4955 = vadd.xlane.f32.xlu0 %v4954
      %v4956 = vpop.xlane.xlu0 %4955
      %v4957 = vsel %vm1089, %v4891, 0.0
      %4958 = vadd.xlane.f32.xlu0 %v4957
      %v4959 = vpop.xlane.xlu0 %4958
      %v4960 = vsel %vm1089, %v4892, 0.0
      %4961 = vadd.xlane.f32.xlu0 %v4960
      %v4962 = vpop.xlane.xlu0 %4961
      %v4963 = vsel %vm1089, %v4893, 0.0
      %4964 = vadd.xlane.f32.xlu0 %v4963
      %v4965 = vpop.xlane.xlu0 %4964
      %v4966 = vsel %vm1089, %v4894, 0.0
      %4967 = vadd.xlane.f32.xlu0 %v4966
      %v4968 = vpop.xlane.xlu0 %4967
      %v4969 = vsel %vm1089, %v4895, 0.0
      %4970 = vadd.xlane.f32.xlu0 %v4969
      %v4971 = vpop.xlane.xlu0 %4970
      %v4972 = vsel %vm1089, %v4896, 0.0
      %4973 = vadd.xlane.f32.xlu0 %v4972
      %v4974 = vpop.xlane.xlu0 %4973
      %v4975 = vsel %vm1089, %v4897, 0.0
      %4976 = vadd.xlane.f32.xlu0 %v4975
      %v4977 = vpop.xlane.xlu0 %4976
      %v4978 = vsel %vm1089, %v4898, 0.0
      %4979 = vadd.xlane.f32.xlu0 %v4978
      %v4980 = vpop.xlane.xlu0 %4979
      %v4981 = vsel %vm1089, %v4899, 0.0
      %4982 = vadd.xlane.f32.xlu0 %v4981
      %v4983 = vpop.xlane.xlu0 %4982
      %v4984 = vsel %vm1089, %v4900, 0.0
      %4985 = vadd.xlane.f32.xlu0 %v4984
      %v4986 = vpop.xlane.xlu0 %4985
      %v4987 = vsel %vm1089, %v4901, 0.0
      %4988 = vadd.xlane.f32.xlu0 %v4987
      %v4989 = vpop.xlane.xlu0 %4988
      %v4990 = vsel %vm1089, %v4902, 0.0
      %4991 = vadd.xlane.f32.xlu0 %v4990
      %v4992 = vpop.xlane.xlu0 %4991
      %v4993 = vsel %vm1089, %v4903, 0.0
      %4994 = vadd.xlane.f32.xlu0 %v4993
      %v4995 = vpop.xlane.xlu0 %4994
      %v4996 = vsel %vm1089, %v4904, 0.0
      %4997 = vadd.xlane.f32.xlu0 %v4996
      %v4998 = vpop.xlane.xlu0 %4997
      %v4999 = vsel %vm1089, %v4905, 0.0
      %5000 = vadd.xlane.f32.xlu0 %v4999
      %v5001 = vpop.xlane.xlu0 %5000
      %v5002 = vmul.f32 %v4908, %v4809
      %v5003 = vmul.f32 %v4911, %v4809
      %v5004 = vmul.f32 %v4914, %v4809
      %v5005 = vmul.f32 %v4917, %v4809
      %v5006 = vmul.f32 %v4920, %v4809
      %v5007 = vmul.f32 %v4923, %v4809
      %v5008 = vmul.f32 %v4926, %v4809
      %v5009 = vmul.f32 %v4929, %v4809
      %v5010 = vmul.f32 %v4932, %v4809
      %v5011 = vmul.f32 %v4935, %v4809
      %v5012 = vmul.f32 %v4938, %v4809
      %v5013 = vmul.f32 %v4941, %v4809
      %v5014 = vmul.f32 %v4944, %v4809
      %v5015 = vmul.f32 %v4947, %v4809
      %v5016 = vmul.f32 %v4950, %v4809
      %v5017 = vmul.f32 %v4953, %v4809
      %v5018 = vmul.f32 %v4956, %v4809
      %v5019 = vmul.f32 %v4959, %v4809
      %v5020 = vmul.f32 %v4962, %v4809
      %v5021 = vmul.f32 %v4965, %v4809
      %v5022 = vmul.f32 %v4968, %v4809
      %v5023 = vmul.f32 %v4971, %v4809
      %v5024 = vmul.f32 %v4974, %v4809
      %v5025 = vmul.f32 %v4977, %v4809
      %v5026 = vmul.f32 %v4980, %v4809
      %v5027 = vmul.f32 %v4983, %v4809
      %v5028 = vmul.f32 %v4986, %v4809
      %v5029 = vmul.f32 %v4989, %v4809
      %v5030 = vmul.f32 %v4992, %v4809
      %v5031 = vmul.f32 %v4995, %v4809
      %v5032 = vmul.f32 %v4998, %v4809
      %v5033 = vmul.f32 %v5001, %v4809
      %v5034 = vadd.f32 %v5002, 1e-05
      %v5035 = vadd.f32 %v5003, 1e-05
      %v5036 = vadd.f32 %v5004, 1e-05
      %v5037 = vadd.f32 %v5005, 1e-05
      %v5038 = vadd.f32 %v5006, 1e-05
      %v5039 = vadd.f32 %v5007, 1e-05
      %v5040 = vadd.f32 %v5008, 1e-05
      %v5041 = vadd.f32 %v5009, 1e-05
      %v5042 = vadd.f32 %v5010, 1e-05
      %v5043 = vadd.f32 %v5011, 1e-05
      %v5044 = vadd.f32 %v5012, 1e-05
      %v5045 = vadd.f32 %v5013, 1e-05
      %v5046 = vadd.f32 %v5014, 1e-05
      %v5047 = vadd.f32 %v5015, 1e-05
      %v5048 = vadd.f32 %v5016, 1e-05
      %v5049 = vadd.f32 %v5017, 1e-05
      %v5050 = vadd.f32 %v5018, 1e-05
      %v5051 = vadd.f32 %v5019, 1e-05
      %v5052 = vadd.f32 %v5020, 1e-05
      %v5053 = vadd.f32 %v5021, 1e-05
      %v5054 = vadd.f32 %v5022, 1e-05
      %v5055 = vadd.f32 %v5023, 1e-05
      %v5056 = vadd.f32 %v5024, 1e-05
      %v5057 = vadd.f32 %v5025, 1e-05
      %v5058 = vadd.f32 %v5026, 1e-05
      %v5059 = vadd.f32 %v5027, 1e-05
      %v5060 = vadd.f32 %v5028, 1e-05
      %v5061 = vadd.f32 %v5029, 1e-05
      %v5062 = vadd.f32 %v5030, 1e-05
      %v5063 = vadd.f32 %v5031, 1e-05
      %v5064 = vadd.f32 %v5032, 1e-05
      %v5065 = vadd.f32 %v5033, 1e-05
      %v5066 = vrsqrt.pop %v5034
      %v5067 = vrsqrt.pop %v5035
      %v5068 = vrsqrt.pop %v5036
      %v5069 = vrsqrt.pop %v5037
      %v5070 = vrsqrt.pop %v5038
      %v5071 = vrsqrt.pop %v5039
      %v5072 = vrsqrt.pop %v5040
      %v5073 = vrsqrt.pop %v5041
      %v5074 = vrsqrt.pop %v5042
      %v5075 = vrsqrt.pop %v5043
      %v5076 = vrsqrt.pop %v5044
      %v5077 = vrsqrt.pop %v5045
      %v5078 = vrsqrt.pop %v5046
      %v5079 = vrsqrt.pop %v5047
      %v5080 = vrsqrt.pop %v5048
      %v5081 = vrsqrt.pop %v5049
      %v5082 = vrsqrt.pop %v5050
      %v5083 = vrsqrt.pop %v5051
      %v5084 = vrsqrt.pop %v5052
      %v5085 = vrsqrt.pop %v5053
      %v5086 = vrsqrt.pop %v5054
      %v5087 = vrsqrt.pop %v5055
      %v5088 = vrsqrt.pop %v5056
      %v5089 = vrsqrt.pop %v5057
      %v5090 = vrsqrt.pop %v5058
      %v5091 = vrsqrt.pop %v5059
      %v5092 = vrsqrt.pop %v5060
      %v5093 = vrsqrt.pop %v5061
      %v5094 = vrsqrt.pop %v5062
      %v5095 = vrsqrt.pop %v5063
      %v5096 = vrsqrt.pop %v5064
      %v5097 = vrsqrt.pop %v5065
      %v5098 = vmul.f32 %v4842, %v5066
      %v5099 = vmul.f32 %v4843, %v5067
      %v5100 = vmul.f32 %v4844, %v5068
      %v5101 = vmul.f32 %v4845, %v5069
      %v5102 = vmul.f32 %v4846, %v5070
      %v5103 = vmul.f32 %v4847, %v5071
      %v5104 = vmul.f32 %v4848, %v5072
      %v5105 = vmul.f32 %v4849, %v5073
      %v5106 = vmul.f32 %v4850, %v5074
      %v5107 = vmul.f32 %v4851, %v5075
      %v5108 = vmul.f32 %v4852, %v5076
      %v5109 = vmul.f32 %v4853, %v5077
      %v5110 = vmul.f32 %v4854, %v5078
      %v5111 = vmul.f32 %v4855, %v5079
      %v5112 = vmul.f32 %v4856, %v5080
      %v5113 = vmul.f32 %v4857, %v5081
      %v5114 = vmul.f32 %v4858, %v5082
      %v5115 = vmul.f32 %v4859, %v5083
      %v5116 = vmul.f32 %v4860, %v5084
      %v5117 = vmul.f32 %v4861, %v5085
      %v5118 = vmul.f32 %v4862, %v5086
      %v5119 = vmul.f32 %v4863, %v5087
      %v5120 = vmul.f32 %v4864, %v5088
      %v5121 = vmul.f32 %v4865, %v5089
      %v5122 = vmul.f32 %v4866, %v5090
      %v5123 = vmul.f32 %v4867, %v5091
      %v5124 = vmul.f32 %v4868, %v5092
      %v5125 = vmul.f32 %v4869, %v5093
      %v5126 = vmul.f32 %v4870, %v5094
      %v5127 = vmul.f32 %v4871, %v5095
      %v5128 = vmul.f32 %v4872, %v5096
      %v5129 = vmul.f32 %v4873, %v5097
      %v5130 = vld [vmem:[#allocation7] sm:$0x1]
      %v5132 = vlaneseq
      %v5133 = vshrl.u32 %v5132, 7
      %v5134 = vsub.s32 0, %v5133
      %v5135 = vrot.slane %v5130, %v5134
      %5136 = vrot.lane.b32.xlu0 %v5135, 15
      %v5137 = vpop.permute.xlu0 %5136
      %v5139 = vmul.f32 %v5098, %v5137
      %v5140 = vmul.f32 %v5099, %v5137
      %v5141 = vmul.f32 %v5100, %v5137
      %v5142 = vmul.f32 %v5101, %v5137
      %v5143 = vmul.f32 %v5102, %v5137
      %v5144 = vmul.f32 %v5103, %v5137
      %v5145 = vmul.f32 %v5104, %v5137
      %v5146 = vmul.f32 %v5105, %v5137
      %v5147 = vmul.f32 %v5106, %v5137
      %v5148 = vmul.f32 %v5107, %v5137
      %v5149 = vmul.f32 %v5108, %v5137
      %v5150 = vmul.f32 %v5109, %v5137
      %v5151 = vmul.f32 %v5110, %v5137
      %v5152 = vmul.f32 %v5111, %v5137
      %v5153 = vmul.f32 %v5112, %v5137
      %v5154 = vmul.f32 %v5113, %v5137
      %v5155 = vmul.f32 %v5114, %v5137
      %v5156 = vmul.f32 %v5115, %v5137
      %v5157 = vmul.f32 %v5116, %v5137
      %v5158 = vmul.f32 %v5117, %v5137
      %v5159 = vmul.f32 %v5118, %v5137
      %v5160 = vmul.f32 %v5119, %v5137
      %v5161 = vmul.f32 %v5120, %v5137
      %v5162 = vmul.f32 %v5121, %v5137
      %v5163 = vmul.f32 %v5122, %v5137
      %v5164 = vmul.f32 %v5123, %v5137
      %v5165 = vmul.f32 %v5124, %v5137
      %v5166 = vmul.f32 %v5125, %v5137
      %v5167 = vmul.f32 %v5126, %v5137
      %v5168 = vmul.f32 %v5127, %v5137
      %v5169 = vmul.f32 %v5128, %v5137
      %v5170 = vmul.f32 %v5129, %v5137
      %v5171 = vld [vmem:[#allocation8] sm:$0x1]
      %v5173 = vlaneseq
      %v5174 = vshrl.u32 %v5173, 7
      %v5175 = vsub.s32 0, %v5174
      %v5176 = vrot.slane %v5171, %v5175
      %5177 = vrot.lane.b32.xlu0 %v5176, 15
      %v5178 = vpop.permute.xlu0 %5177
      %v5180 = vadd.f32 %v5139, %v5178
      %v5181 = vadd.f32 %v5140, %v5178
      %v5182 = vadd.f32 %v5141, %v5178
      %v5183 = vadd.f32 %v5142, %v5178
      %v5184 = vadd.f32 %v5143, %v5178
      %v5185 = vadd.f32 %v5144, %v5178
      %v5186 = vadd.f32 %v5145, %v5178
      %v5187 = vadd.f32 %v5146, %v5178
      %v5188 = vadd.f32 %v5147, %v5178
      %v5189 = vadd.f32 %v5148, %v5178
      %v5190 = vadd.f32 %v5149, %v5178
      %v5191 = vadd.f32 %v5150, %v5178
      %v5192 = vadd.f32 %v5151, %v5178
      %v5193 = vadd.f32 %v5152, %v5178
      %v5194 = vadd.f32 %v5153, %v5178
      %v5195 = vadd.f32 %v5154, %v5178
      %v5196 = vadd.f32 %v5155, %v5178
      %v5197 = vadd.f32 %v5156, %v5178
      %v5198 = vadd.f32 %v5157, %v5178
      %v5199 = vadd.f32 %v5158, %v5178
      %v5200 = vadd.f32 %v5159, %v5178
      %v5201 = vadd.f32 %v5160, %v5178
      %v5202 = vadd.f32 %v5161, %v5178
      %v5203 = vadd.f32 %v5162, %v5178
      %v5204 = vadd.f32 %v5163, %v5178
      %v5205 = vadd.f32 %v5164, %v5178
      %v5206 = vadd.f32 %v5165, %v5178
      %v5207 = vadd.f32 %v5166, %v5178
      %v5208 = vadd.f32 %v5167, %v5178
      %v5209 = vadd.f32 %v5168, %v5178
      %v5210 = vadd.f32 %v5169, %v5178
      %v5211 = vadd.f32 %v5170, %v5178
      %v5212 = vld [vmem:[%s16] sm:$0xff]
      %v5213 = vld [vmem:[%s16 + $0x8] sm:$0xff]
      %v5214 = vld [vmem:[%s16 + $0x10] sm:$0xff]
      %v5215 = vld [vmem:[%s16 + $0x18] sm:$0xff]
      %v5216 = vld [vmem:[%s16 + $0x20] sm:$0xff]
      %v5217 = vld [vmem:[%s16 + $0x28] sm:$0xff]
      %v5218 = vld [vmem:[%s16 + $0x30] sm:$0xff]
      %v5219 = vld [vmem:[%s16 + $0x38] sm:$0xff]
      %v5220 = vld [vmem:[%s16 + $0x40] sm:$0xff]
      %v5221 = vld [vmem:[%s16 + $0x48] sm:$0xff]
      %v5222 = vld [vmem:[%s16 + $0x50] sm:$0xff]
      %v5223 = vld [vmem:[%s16 + $0x58] sm:$0xff]
      %v5224 = vld [vmem:[%s16 + $0x60] sm:$0xff]
      %v5225 = vld [vmem:[%s16 + $0x68] sm:$0xff]
      %v5226 = vld [vmem:[%s16 + $0x70] sm:$0xff]
      %v5227 = vld [vmem:[%s16 + $0x78] sm:$0xff]
      %v5228 = vld [vmem:[%s16 + $0x80] sm:$0xff]
      %v5229 = vld [vmem:[%s16 + $0x88] sm:$0xff]
      %v5230 = vld [vmem:[%s16 + $0x90] sm:$0xff]
      %v5231 = vld [vmem:[%s16 + $0x98] sm:$0xff]
      %v5232 = vld [vmem:[%s16 + $0xa0] sm:$0xff]
      %v5233 = vld [vmem:[%s16 + $0xa8] sm:$0xff]
      %v5234 = vld [vmem:[%s16 + $0xb0] sm:$0xff]
      %v5235 = vld [vmem:[%s16 + $0xb8] sm:$0xff]
      %v5236 = vld [vmem:[%s16 + $0xc0] sm:$0xff]
      %v5237 = vld [vmem:[%s16 + $0xc8] sm:$0xff]
      %v5238 = vld [vmem:[%s16 + $0xd0] sm:$0xff]
      %v5239 = vld [vmem:[%s16 + $0xd8] sm:$0xff]
      %v5240 = vld [vmem:[%s16 + $0xe0] sm:$0xff]
      %v5241 = vld [vmem:[%s16 + $0xe8] sm:$0xff]
      %v5242 = vld [vmem:[%s16 + $0xf0] sm:$0xff]
      %v5243 = vld [vmem:[%s16 + $0xf8] sm:$0xff]
      %5245 = vset.pattern.permute.xlu0 15
      %5246 = vperm.xlu0 %5245, %v5180
      %v5247 = vpop.permute.xlu0 %5246
      %5250 = vset.pattern.permute.xlu0 15
      %5251 = vperm.xlu0 %5250, %v5181
      %v5252 = vpop.permute.xlu0 %5251
      %5255 = vset.pattern.permute.xlu0 15
      %5256 = vperm.xlu0 %5255, %v5182
      %v5257 = vpop.permute.xlu0 %5256
      %5260 = vset.pattern.permute.xlu0 15
      %5261 = vperm.xlu0 %5260, %v5183
      %v5262 = vpop.permute.xlu0 %5261
      %5265 = vset.pattern.permute.xlu0 15
      %5266 = vperm.xlu0 %5265, %v5184
      %v5267 = vpop.permute.xlu0 %5266
      %5270 = vset.pattern.permute.xlu0 15
      %5271 = vperm.xlu0 %5270, %v5185
      %v5272 = vpop.permute.xlu0 %5271
      %5275 = vset.pattern.permute.xlu0 15
      %5276 = vperm.xlu0 %5275, %v5186
      %v5277 = vpop.permute.xlu0 %5276
      %5280 = vset.pattern.permute.xlu0 15
      %5281 = vperm.xlu0 %5280, %v5187
      %v5282 = vpop.permute.xlu0 %5281
      %5285 = vset.pattern.permute.xlu0 15
      %5286 = vperm.xlu0 %5285, %v5188
      %v5287 = vpop.permute.xlu0 %5286
      %5290 = vset.pattern.permute.xlu0 15
      %5291 = vperm.xlu0 %5290, %v5189
      %v5292 = vpop.permute.xlu0 %5291
      %5295 = vset.pattern.permute.xlu0 15
      %5296 = vperm.xlu0 %5295, %v5190
      %v5297 = vpop.permute.xlu0 %5296
      %5300 = vset.pattern.permute.xlu0 15
      %5301 = vperm.xlu0 %5300, %v5191
      %v5302 = vpop.permute.xlu0 %5301
      %5305 = vset.pattern.permute.xlu0 15
      %5306 = vperm.xlu0 %5305, %v5192
      %v5307 = vpop.permute.xlu0 %5306
      %5310 = vset.pattern.permute.xlu0 15
      %5311 = vperm.xlu0 %5310, %v5193
      %v5312 = vpop.permute.xlu0 %5311
      %5315 = vset.pattern.permute.xlu0 15
      %5316 = vperm.xlu0 %5315, %v5194
      %v5317 = vpop.permute.xlu0 %5316
      %5320 = vset.pattern.permute.xlu0 15
      %5321 = vperm.xlu0 %5320, %v5195
      %v5322 = vpop.permute.xlu0 %5321
      %5325 = vset.pattern.permute.xlu0 15
      %5326 = vperm.xlu0 %5325, %v5196
      %v5327 = vpop.permute.xlu0 %5326
      %5330 = vset.pattern.permute.xlu0 15
      %5331 = vperm.xlu0 %5330, %v5197
      %v5332 = vpop.permute.xlu0 %5331
      %5335 = vset.pattern.permute.xlu0 15
      %5336 = vperm.xlu0 %5335, %v5198
      %v5337 = vpop.permute.xlu0 %5336
      %5340 = vset.pattern.permute.xlu0 15
      %5341 = vperm.xlu0 %5340, %v5199
      %v5342 = vpop.permute.xlu0 %5341
      %5345 = vset.pattern.permute.xlu0 15
      %5346 = vperm.xlu0 %5345, %v5200
      %v5347 = vpop.permute.xlu0 %5346
      %5350 = vset.pattern.permute.xlu0 15
      %5351 = vperm.xlu0 %5350, %v5201
      %v5352 = vpop.permute.xlu0 %5351
      %5355 = vset.pattern.permute.xlu0 15
      %5356 = vperm.xlu0 %5355, %v5202
      %v5357 = vpop.permute.xlu0 %5356
      %5360 = vset.pattern.permute.xlu0 15
      %5361 = vperm.xlu0 %5360, %v5203
      %v5362 = vpop.permute.xlu0 %5361
      %5365 = vset.pattern.permute.xlu0 15
      %5366 = vperm.xlu0 %5365, %v5204
      %v5367 = vpop.permute.xlu0 %5366
      %5370 = vset.pattern.permute.xlu0 15
      %5371 = vperm.xlu0 %5370, %v5205
      %v5372 = vpop.permute.xlu0 %5371
      %5375 = vset.pattern.permute.xlu0 15
      %5376 = vperm.xlu0 %5375, %v5206
      %v5377 = vpop.permute.xlu0 %5376
      %5380 = vset.pattern.permute.xlu0 15
      %5381 = vperm.xlu0 %5380, %v5207
      %v5382 = vpop.permute.xlu0 %5381
      %5385 = vset.pattern.permute.xlu0 15
      %5386 = vperm.xlu0 %5385, %v5208
      %v5387 = vpop.permute.xlu0 %5386
      %5390 = vset.pattern.permute.xlu0 15
      %5391 = vperm.xlu0 %5390, %v5209
      %v5392 = vpop.permute.xlu0 %5391
      %5395 = vset.pattern.permute.xlu0 15
      %5396 = vperm.xlu0 %5395, %v5210
      %v5397 = vpop.permute.xlu0 %5396
      %5400 = vset.pattern.permute.xlu0 15
      %5401 = vperm.xlu0 %5400, %v5211
      %v5402 = vpop.permute.xlu0 %5401
      %v5404 = vmul.f32 %v5247, %v5212
      %v5405 = vmul.f32 %v5252, %v5213
      %v5406 = vmul.f32 %v5257, %v5214
      %v5407 = vmul.f32 %v5262, %v5215
      %v5408 = vmul.f32 %v5267, %v5216
      %v5409 = vmul.f32 %v5272, %v5217
      %v5410 = vmul.f32 %v5277, %v5218
      %v5411 = vmul.f32 %v5282, %v5219
      %v5412 = vmul.f32 %v5287, %v5220
      %v5413 = vmul.f32 %v5292, %v5221
      %v5414 = vmul.f32 %v5297, %v5222
      %v5415 = vmul.f32 %v5302, %v5223
      %v5416 = vmul.f32 %v5307, %v5224
      %v5417 = vmul.f32 %v5312, %v5225
      %v5418 = vmul.f32 %v5317, %v5226
      %v5419 = vmul.f32 %v5322, %v5227
      %v5420 = vmul.f32 %v5327, %v5228
      %v5421 = vmul.f32 %v5332, %v5229
      %v5422 = vmul.f32 %v5337, %v5230
      %v5423 = vmul.f32 %v5342, %v5231
      %v5424 = vmul.f32 %v5347, %v5232
      %v5425 = vmul.f32 %v5352, %v5233
      %v5426 = vmul.f32 %v5357, %v5234
      %v5427 = vmul.f32 %v5362, %v5235
      %v5428 = vmul.f32 %v5367, %v5236
      %v5429 = vmul.f32 %v5372, %v5237
      %v5430 = vmul.f32 %v5377, %v5238
      %v5431 = vmul.f32 %v5382, %v5239
      %v5432 = vmul.f32 %v5387, %v5240
      %v5433 = vmul.f32 %v5392, %v5241
      %v5434 = vmul.f32 %v5397, %v5242
      %v5435 = vmul.f32 %v5402, %v5243
      %v5436 = vld [vmem:[%s17] sm:$0xff]
      %v5437 = vld [vmem:[%s17 + $0x8] sm:$0xff]
      %v5438 = vld [vmem:[%s17 + $0x10] sm:$0xff]
      %v5439 = vld [vmem:[%s17 + $0x18] sm:$0xff]
      %v5440 = vld [vmem:[%s18] sm:$0x1]
      %v5442 = vlaneseq
      %v5443 = vshrl.u32 %v5442, 7
      %v5444 = vsub.s32 0, %v5443
      %v5445 = vrot.slane %v5440, %v5444
      %5447 = vmatprep.subr.mxu0 0.0
      %5448 = vmatpush1.msra.mxu0 %v5404
      %5449 = vmatprep.subr.mxu0 0.0
      %5450 = vmatpush1.msra.mxu0 %v5405
      %5451 = vmatprep.subr.mxu0 0.0
      %5452 = vmatpush1.msra.mxu0 %v5406
      %5453 = vmatprep.subr.mxu0 0.0
      %5454 = vmatpush1.msra.mxu0 %v5407
      %5455 = vmatprep.subr.mxu0 0.0
      %5456 = vmatpush1.msra.mxu0 %v5408
      %5457 = vmatprep.subr.mxu0 0.0
      %5458 = vmatpush1.msra.mxu0 %v5409
      %5459 = vmatprep.subr.mxu0 0.0
      %5460 = vmatpush1.msra.mxu0 %v5410
      %5461 = vmatprep.subr.mxu0 0.0
      %5462 = vmatpush1.msra.mxu0 %v5411
      %5463 = vmatprep.subr.mxu0 0.0
      %5464 = vmatpush1.msra.mxu0 %v5412
      %5465 = vmatprep.subr.mxu0 0.0
      %5466 = vmatpush1.msra.mxu0 %v5413
      %5467 = vmatprep.subr.mxu0 0.0
      %5468 = vmatpush1.msra.mxu0 %v5414
      %5469 = vmatprep.subr.mxu0 0.0
      %5470 = vmatpush1.msra.mxu0 %v5415
      %5471 = vmatprep.subr.mxu0 0.0
      %5472 = vmatpush1.msra.mxu0 %v5416
      %5473 = vmatprep.subr.mxu0 0.0
      %5474 = vmatpush1.msra.mxu0 %v5417
      %5475 = vmatprep.subr.mxu0 0.0
      %5476 = vmatpush1.msra.mxu0 %v5418
      %5477 = vmatprep.subr.mxu0 0.0
      %5478 = vmatpush1.msra.mxu0 %v5419
      %5479 = vmatprep.subr.mxu0 0.0
      %5480 = vmatpush1.msra.mxu0 %v5420
      %5481 = vmatprep.subr.mxu0 0.0
      %5482 = vmatpush1.msra.mxu0 %v5421
      %5483 = vmatprep.subr.mxu0 0.0
      %5484 = vmatpush1.msra.mxu0 %v5422
      %5485 = vmatprep.subr.mxu0 0.0
      %5486 = vmatpush1.msra.mxu0 %v5423
      %5487 = vmatprep.subr.mxu0 0.0
      %5488 = vmatpush1.msra.mxu0 %v5424
      %5489 = vmatprep.subr.mxu0 0.0
      %5490 = vmatpush1.msra.mxu0 %v5425
      %5491 = vmatprep.subr.mxu0 0.0
      %5492 = vmatpush1.msra.mxu0 %v5426
      %5493 = vmatprep.subr.mxu0 0.0
      %5494 = vmatpush1.msra.mxu0 %v5427
      %5495 = vmatprep.subr.mxu0 0.0
      %5496 = vmatpush1.msra.mxu0 %v5428
      %5497 = vmatprep.subr.mxu0 0.0
      %5498 = vmatpush1.msra.mxu0 %v5429
      %5499 = vmatprep.subr.mxu0 0.0
      %5500 = vmatpush1.msra.mxu0 %v5430
      %5501 = vmatprep.subr.mxu0 0.0
      %5502 = vmatpush1.msra.mxu0 %v5431
      %5503 = vmatprep.subr.mxu0 0.0
      %5504 = vmatpush1.msra.mxu0 %v5432
      %5505 = vmatprep.subr.mxu0 0.0
      %5506 = vmatpush1.msra.mxu0 %v5433
      %5507 = vmatprep.subr.mxu0 0.0
      %5508 = vmatpush1.msra.mxu0 %v5434
      %5509 = vmatprep.subr.mxu0 0.0
      %5510 = vmatpush1.msra.mxu0 %v5435
      %5511 = vmatprep.mubr.f32.mxu0 %v5437
      %5512 = vmatmul.mubr.f32.gmra.mrb[0].mxu0 %v5436
      %v5513 = vpop.f32.mrb[0].mxu0
      %v5514 = vadd.f32 %v5445, %v5513
      %v5515 = vpop.f32.mrb[0].mxu0
      %5516 = vmatprep.mubr.f32.mxu0 %v5439
      %5517 = vmatmul.mubr.f32.gmra.mrb[0].mxu0 %v5438
      %v5518 = vpop.f32.mrb[0].mxu0
      %v5519 = vadd.f32 %v5445, %v5518
      %v5520 = vpop.f32.mrb[0].mxu0
      %5521 = vdwg.mxu0
      %vm5522 = vcmask 39936
      %5523 = vst.msk [vmem:[%s608] sm:$0xff] %vm5522, %v5514
      %5524 = vst.msk [vmem:[%s608 + $0x8] sm:$0xff] %vm5522, %v5519
      %s5525 = smul.u32 2, %s34
      %p5526 = scmp.lt.s32.totalorder %s5525, 3
      %s5527 = scalar_select %p5526, %s5525, 3
      %s5528 = smul.addr %s5527, 8
      %s5529 = scalar_lea.vmem %s19, %s5528
      // Predicated region
      $region97: #{tpu_custom_call.1} parent=95 // pred_check
        %p5530 = pneg %p456
      $region98: #{tpu_custom_call.1} parent=95 // pred_check_branch
        %5532 = sbr.rel (%p5530) target = $region100
      $region99: #{tpu_custom_call.1} parent=95 // pred_region
        %s5533 = smul.u32 2, %s34
      $region100: #{tpu_custom_call.1} parent=95 // pred_fallthru
        _
    $region96: #{tpu_custom_call.1} parent=5 // pred_fallthru
      _
    %p5534 = scmp.le.s32.totalorder 2, %s29
    // Predicated region
    $region101: #{tpu_custom_call.1} parent=5 // pred_check
      %p5535 = pneg %p5534
    $region102: #{tpu_custom_call.1} parent=5 // pred_check_branch
      %5537 = sbr.rel (%p5535) target = $region104
    $region103: #{tpu_custom_call.1} parent=5 // pred_region
      %s5538 = ssub.s32 %s29, 2
      // Predicated region
      $region105: #{tpu_custom_call.1} parent=103 // pred_check
        %p5539 = pneg %p462
      $region106: #{tpu_custom_call.1} parent=103 // pred_check_branch
        %5541 = sbr.rel (%p5539) target = $region108
      $region107: #{tpu_custom_call.1} parent=103 // pred_region
        %s5542 = smul.u32 2, %s35
        %p5543 = scmp.lt.s32.totalorder %s5542, 3
        %s5544 = scalar_select %p5543, %s5542, 3
        %s5545 = smul.addr %s5544, 8
        %s5546 = scalar_lea.vmem %s19, %s5545
      $region108: #{tpu_custom_call.1} parent=103 // pred_fallthru
        _
    $region104: #{tpu_custom_call.1} parent=5 // pred_fallthru
      _
  $region6: #{tpu_custom_call.1} parent=0 // loop_footer
    %s33 = sadd.s32 1, %s29
  $region7: #{tpu_custom_call.1} parent=0 // loop_footer_branch
    %28 = sbr.rel target = $region3
  $region8: #{tpu_custom_call.1} parent=0 // loop_exit
    _

</llo_original>
